<compile_context>
chip_gen: v7x
topology: tpu7x:2x2x1
jax: 0.10.0
libtpu: 0.0.40
codegen_flags: <defaults>
</compile_context>

<pallas_src>
import jax
import jax.numpy as jnp
from jax.experimental import pallas as pl
from jax.experimental.pallas import tpu as pltpu

LEAKY_SLOPE = 0.01  # nn.LeakyReLU default negative_slope


def _bilinear_matrix(n_in, n_out):
    """(n_out, n_in) 1-D bilinear interpolation matrix, align_corners=True."""
    if n_out == 1:
        src = jnp.zeros((1,), jnp.float32)
    else:
        src = jnp.arange(n_out, dtype=jnp.float32) * ((n_in - 1) / (n_out - 1))
    i0 = jnp.clip(jnp.floor(src), 0, n_in - 1).astype(jnp.int32)
    i1 = jnp.minimum(i0 + 1, n_in - 1)
    f = src - i0.astype(jnp.float32)
    rows = jnp.arange(n_out)
    m = jnp.zeros((n_out, n_in), jnp.float32)
    m = m.at[rows, i0].add(1.0 - f)
    m = m.at[rows, i1].add(f)
    return m


def _make_fused_kernel(Cin, Cout, Ho, Wo, Hp, Wp, K,
                       oy0, ox0, sy0, sx0, rows, cols):
    """Kernel for one batch sample (one grid step)."""

    def kernel(x_ref, a_ref, b_ref, w_ref, bias_ref, out_ref, up_ref):
        # ---- F.pad folded in: zero the whole padded output block once; the
        # conv epilogue overwrites the valid interior.
        out_ref[...] = jnp.zeros_like(out_ref)

        # ---- Stage 1: bilinear x2 (align_corners=True) as two MXU matmuls.
        # x_ref[0]            : (Cin*H, W)
        # col = x @ B_pad     : (Cin*H, Wp)     (W halo columns already zero)
        # up  = A_block @ col : (Cin*Hp, Wp)    (block-diag A -> per-ci planes,
        #                                        H halo rows already zero)
        col = jnp.dot(x_ref[0], b_ref[...], preferred_element_type=jnp.float32)
        up_ref[...] = jnp.dot(a_ref[...], col,
                              preferred_element_type=jnp.float32)

        # ---- Stage 2: 3x3 conv (pad folded into up_ref) + bias + LeakyReLU.
        # Inverted loop nest: (ci, kh, kw) outer, Cout inner.  Only one
        # shifted window + Cout accumulators are live at any time.
        accs = [jnp.zeros((Ho, Wo), jnp.float32) for _ in range(Cout)]
        for ci in range(Cin):
            base = ci * Hp
            for kh in range(K):
                for kw in range(K):
                    win = up_ref[base + kh:base + kh + Ho, kw:kw + Wo]  # (Ho,Wo)
                    for co in range(Cout):
                        wv = w_ref[((co * Cin + ci) * K + kh) * K + kw]
                        accs[co] = accs[co] + win * wv

        # Single epilogue per output channel: bias + LeakyReLU + padded store.
        for co in range(Cout):
            y = accs[co] + bias_ref[co]
            y = jnp.where(y >= 0.0, y, LEAKY_SLOPE * y)
            out_ref[0, co, oy0:oy0 + rows, ox0:ox0 + cols] = (
                y[sy0:sy0 + rows, sx0:sx0 + cols])

    return kernel


def upsample_forward(x, w, b, shape1, shape2):
    """Forward of Upsample(in_ch, out_ch, bilinear=True, dropout=True), eval mode.

    x: (N, Cin, H, W) f32 NCHW.  w: (Cout, Cin, 3, 3).  b: (Cout,).
    shape1/shape2: target spatial dims of the trailing F.pad (crop if smaller).
    """
    N, Cin, H, W = x.shape
    Cout, _, K, _ = w.shape
    pad = (K - 1) // 2
    Ho, Wo = 2 * H, 2 * W
    Hp, Wp = Ho + 2 * pad, Wo + 2 * pad

    # Interpolation matrices with the conv's zero halo folded in.
    a_h = _bilinear_matrix(H, Ho)                                  # (Ho, H)
    a_pad = jnp.zeros((Hp, H), jnp.float32).at[pad:pad + Ho].set(a_h)
    a_block = jnp.kron(jnp.eye(Cin, dtype=jnp.float32), a_pad)     # (Cin*Hp, Cin*H)
    b_w = _bilinear_matrix(W, Wo)                                  # (Wo, W)
    b_pad = jnp.zeros((W, Wp), jnp.float32).at[:, pad:pad + Wo].set(b_w.T)

    # Static geometry of F.pad([dx0, ., dy0, .]) folded into the kernel
    # (handles negative diffs == crops, exactly like F.pad).
    dy0 = (shape1 - Ho) // 2
    dx0 = (shape2 - Wo) // 2
    oy0, oy1 = max(dy0, 0), min(dy0 + Ho, shape1)
    ox0, ox1 = max(dx0, 0), min(dx0 + Wo, shape2)
    sy0, sx0 = oy0 - dy0, ox0 - dx0
    rows, cols = oy1 - oy0, ox1 - ox0

    kernel = _make_fused_kernel(Cin, Cout, Ho, Wo, Hp, Wp, K,
                                oy0, ox0, sy0, sx0, rows, cols)

    x2 = x.reshape(N, Cin * H, W)      # contiguous reshape, done by XLA
    smem = pl.BlockSpec(memory_space=pltpu.MemorySpace.SMEM)

    out = pl.pallas_call(
        kernel,
        out_shape=jax.ShapeDtypeStruct((N, Cout, shape1, shape2), jnp.float32),
        grid=(N,),
        in_specs=[
            pl.BlockSpec((1, Cin * H, W), lambda n: (n, 0, 0)),          # x
            pl.BlockSpec((Cin * Hp, Cin * H), lambda n: (0, 0)),         # A_block
            pl.BlockSpec((W, Wp), lambda n: (0, 0)),                     # B_pad
            smem,                                                        # w flat
            smem,                                                        # bias
        ],
        out_specs=pl.BlockSpec((1, Cout, shape1, shape2),
                               lambda n: (n, 0, 0, 0)),
        scratch_shapes=[pltpu.VMEM((Cin * Hp, Wp), jnp.float32)],
        compiler_params=pltpu.CompilerParams(
            dimension_semantics=("parallel",)),
    )(x2, a_block, b_pad, w.reshape(-1), b)

    # TODO(synk): Dropout(p=0.1) eval mode -> identity.
    return out


# ---------------------------------------------------------------------------
# Pure-JAX reference (same semantics) for verification.
# ---------------------------------------------------------------------------
def _ref_forward(x, w, b, shape1, shape2):
    N, C, H, W = x.shape
    Ho, Wo = 2 * H, 2 * W

    def coords(n_in, n_out):
        src = jnp.arange(n_out, dtype=jnp.float32) * ((n_in - 1) / (n_out - 1))
        i0 = jnp.clip(jnp.floor(src), 0, n_in - 1).astype(jnp.int32)
        i1 = jnp.minimum(i0 + 1, n_in - 1)
        f = src - i0.astype(jnp.float32)
        return i0, i1, f

    h0, h1, fh = coords(H, Ho)
    w0, w1, fw = coords(W, Wo)
    xh = (x[:, :, h0, :] * (1.0 - fh)[None, None, :, None]
          + x[:, :, h1, :] * fh[None, None, :, None])
    up = (xh[:, :, :, w0] * (1.0 - fw)[None, None, None, :]
          + xh[:, :, :, w1] * fw[None, None, None, :])

    y = jax.lax.conv_general_dilated(
        up, w, window_strides=(1, 1), padding=((1, 1), (1, 1)),
        dimension_numbers=("NCHW", "OIHW", "NCHW"))
    y = y + b[None, :, None, None]
    y = jnp.where(y >= 0.0, y, LEAKY_SLOPE * y)

    diff_y, diff_x = shape1 - y.shape[2], shape2 - y.shape[3]
    y = jax.lax.pad(y, jnp.array(0.0, y.dtype),
                    ((0, 0, 0), (0, 0, 0),
                     (diff_y // 2, diff_y - diff_y // 2, 0),
                     (diff_x // 2, diff_x - diff_x // 2, 0)))
    return y  # dropout eval mode == identity


if __name__ == "__main__":
    N, Cin, Cout, H, W, K = 2, 4, 3, 16, 16, 3
    shape1, shape2 = 36, 35          # skip-connection target dims (>= 2H, 2W)

    key = jax.random.PRNGKey(0)
    k1, k2, k3 = jax.random.split(key, 3)
    x = jax.random.normal(k1, (N, Cin, H, W), jnp.float32)
    w = 0.2 * jax.random.normal(k2, (Cout, Cin, K, K), jnp.float32)
    b = 0.1 * jax.random.normal(k3, (Cout,), jnp.float32)

    out = jax.block_until_ready(upsample_forward(x, w, b, shape1, shape2))
    ref = jax.block_until_ready(_ref_forward(x, w, b, shape1, shape2))

    assert out.shape == (N, Cout, shape1, shape2), out.shape
    if not jnp.allclose(out, ref, atol=2e-3, rtol=2e-3):
        max_err = float(jnp.max(jnp.abs(out - ref)))
        raise AssertionError(f"mismatch vs reference, max abs err = {max_err}")

    print("KERNEL_OK")
</pallas_src>

<mosaic_0001>
module attributes {stable_mosaic.version = 11 : i64} {
  func.func @kernel(%arg0: i32, %arg1: memref<1x64x16xf32, #tpu.memory_space<vmem>>, %arg2: memref<136x64xf32, #tpu.memory_space<vmem>>, %arg3: memref<16x34xf32, #tpu.memory_space<vmem>>, %arg4: memref<108xf32, #tpu.memory_space<smem>>, %arg5: memref<3xf32, #tpu.memory_space<smem>>, %arg6: memref<1x3x36x35xf32, #tpu.memory_space<vmem>>, %arg7: memref<136x34xf32, #tpu.memory_space<vmem>>) attributes {dimension_semantics = [#tpu.dimension_semantics<parallel>], iteration_bounds = array<i64: 2>, scalar_prefetch = 0 : i64, scratch_operands = 1 : i64, tpu.core_type = #tpu.core_type<tc>, window_params = [{transform_indices = @transform_0, window_bounds = array<i64: 1, 64, 16>}, {pipeline_mode = #tpu.pipeline_mode<synchronous>, transform_indices = @transform_1, window_bounds = array<i64: 136, 64>}, {pipeline_mode = #tpu.pipeline_mode<synchronous>, transform_indices = @transform_2, window_bounds = array<i64: 16, 34>}, {transform_indices = @transform_3, window_bounds = array<i64: 108>}, {transform_indices = @transform_4, window_bounds = array<i64: 3>}, {transform_indices = @transform_5, window_bounds = array<i64: 1, 3, 36, 35>}]} {
    %cst = arith.constant 0.000000e+00 : f32
    %0 = vector.broadcast %cst : f32 to vector<1x3x36x35xf32>
    %c0 = arith.constant 0 : index
    %c0_0 = arith.constant 0 : index
    %c0_1 = arith.constant 0 : index
    %c0_2 = arith.constant 0 : index
    %1 = vector.load %arg6[%c0, %c0_0, %c0_1, %c0_2] : memref<1x3x36x35xf32, #tpu.memory_space<vmem>>, vector<1x3x36x35xf32>
    tpu.vector_store %arg6[%c0, %c0_0, %c0_1, %c0_2], %0 {strides = array<i32>} : memref<1x3x36x35xf32, #tpu.memory_space<vmem>>, vector<1x3x36x35xf32>,
    %c0_3 = arith.constant 0 : index
    %c0_4 = arith.constant 0 : index
    %c0_5 = arith.constant 0 : index
    %2 = vector.load %arg1[%c0_3, %c0_4, %c0_5] : memref<1x64x16xf32, #tpu.memory_space<vmem>>, vector<1x64x16xf32>
    %3 = vector.shape_cast %2 : vector<1x64x16xf32> to vector<64x16xf32>
    %c0_6 = arith.constant 0 : index
    %c0_7 = arith.constant 0 : index
    %4 = vector.load %arg3[%c0_6, %c0_7] : memref<16x34xf32, #tpu.memory_space<vmem>>, vector<16x34xf32>
    %cst_8 = arith.constant dense<0.000000e+00> : vector<64x34xf32>
    %5 = tpu.matmul %3, %4, %cst_8 {dimension_numbers = #tpu.dot_dimension_numbers<[1], [0], [0], [1], [0, 0, 1, 1], [], []>} : vector<64x16xf32>, vector<16x34xf32>, vector<64x34xf32> -> vector<64x34xf32>
    %c0_9 = arith.constant 0 : index
    %c0_10 = arith.constant 0 : index
    %6 = vector.load %arg2[%c0_9, %c0_10] : memref<136x64xf32, #tpu.memory_space<vmem>>, vector<136x64xf32>
    %cst_11 = arith.constant dense<0.000000e+00> : vector<136x34xf32>
    %7 = tpu.matmul %6, %5, %cst_11 {dimension_numbers = #tpu.dot_dimension_numbers<[1], [0], [0], [1], [0, 0, 1, 1], [], []>} : vector<136x64xf32>, vector<64x34xf32>, vector<136x34xf32> -> vector<136x34xf32>
    %c0_12 = arith.constant 0 : index
    %c0_13 = arith.constant 0 : index
    %8 = vector.load %arg7[%c0_12, %c0_13] : memref<136x34xf32, #tpu.memory_space<vmem>>, vector<136x34xf32>
    tpu.vector_store %arg7[%c0_12, %c0_13], %7 {strides = array<i32>} : memref<136x34xf32, #tpu.memory_space<vmem>>, vector<136x34xf32>,
    %cst_14 = arith.constant 0.000000e+00 : f32
    %9 = vector.broadcast %cst_14 : f32 to vector<32x32xf32>
    %cst_15 = arith.constant 0.000000e+00 : f32
    %10 = vector.broadcast %cst_15 : f32 to vector<32x32xf32>
    %cst_16 = arith.constant 0.000000e+00 : f32
    %11 = vector.broadcast %cst_16 : f32 to vector<32x32xf32>
    %c0_17 = arith.constant 0 : index
    %c0_18 = arith.constant 0 : index
    %12 = vector.load %arg7[%c0_17, %c0_18] : memref<136x34xf32, #tpu.memory_space<vmem>>, vector<32x32xf32>
    %c0_19 = arith.constant 0 : index
    %13 = memref.load %arg4[%c0_19] : memref<108xf32, #tpu.memory_space<smem>>
    %14 = vector.broadcast %13 : f32 to vector<32x32xf32>
    %15 = arith.mulf %12, %14 : vector<32x32xf32>
    %16 = arith.addf %9, %15 : vector<32x32xf32>
    %c36 = arith.constant 36 : index
    %17 = memref.load %arg4[%c36] : memref<108xf32, #tpu.memory_space<smem>>
    %18 = vector.broadcast %17 : f32 to vector<32x32xf32>
    %19 = arith.mulf %12, %18 : vector<32x32xf32>
    %20 = arith.addf %10, %19 : vector<32x32xf32>
    %c72 = arith.constant 72 : index
    %21 = memref.load %arg4[%c72] : memref<108xf32, #tpu.memory_space<smem>>
    %22 = vector.broadcast %21 : f32 to vector<32x32xf32>
    %23 = arith.mulf %12, %22 : vector<32x32xf32>
    %24 = arith.addf %11, %23 : vector<32x32xf32>
    %c0_20 = arith.constant 0 : index
    %c1 = arith.constant 1 : index
    %25 = vector.load %arg7[%c0_20, %c1] : memref<136x34xf32, #tpu.memory_space<vmem>>, vector<32x32xf32>
    %c1_21 = arith.constant 1 : index
    %26 = memref.load %arg4[%c1_21] : memref<108xf32, #tpu.memory_space<smem>>
    %27 = vector.broadcast %26 : f32 to vector<32x32xf32>
    %28 = arith.mulf %25, %27 : vector<32x32xf32>
    %29 = arith.addf %16, %28 : vector<32x32xf32>
    %c37 = arith.constant 37 : index
    %30 = memref.load %arg4[%c37] : memref<108xf32, #tpu.memory_space<smem>>
    %31 = vector.broadcast %30 : f32 to vector<32x32xf32>
    %32 = arith.mulf %25, %31 : vector<32x32xf32>
    %33 = arith.addf %20, %32 : vector<32x32xf32>
    %c73 = arith.constant 73 : index
    %34 = memref.load %arg4[%c73] : memref<108xf32, #tpu.memory_space<smem>>
    %35 = vector.broadcast %34 : f32 to vector<32x32xf32>
    %36 = arith.mulf %25, %35 : vector<32x32xf32>
    %37 = arith.addf %24, %36 : vector<32x32xf32>
    %c0_22 = arith.constant 0 : index
    %c2 = arith.constant 2 : index
    %38 = vector.load %arg7[%c0_22, %c2] : memref<136x34xf32, #tpu.memory_space<vmem>>, vector<32x32xf32>
    %c2_23 = arith.constant 2 : index
    %39 = memref.load %arg4[%c2_23] : memref<108xf32, #tpu.memory_space<smem>>
    %40 = vector.broadcast %39 : f32 to vector<32x32xf32>
    %41 = arith.mulf %38, %40 : vector<32x32xf32>
    %42 = arith.addf %29, %41 : vector<32x32xf32>
    %c38 = arith.constant 38 : index
    %43 = memref.load %arg4[%c38] : memref<108xf32, #tpu.memory_space<smem>>
    %44 = vector.broadcast %43 : f32 to vector<32x32xf32>
    %45 = arith.mulf %38, %44 : vector<32x32xf32>
    %46 = arith.addf %33, %45 : vector<32x32xf32>
    %c74 = arith.constant 74 : index
    %47 = memref.load %arg4[%c74] : memref<108xf32, #tpu.memory_space<smem>>
    %48 = vector.broadcast %47 : f32 to vector<32x32xf32>
    %49 = arith.mulf %38, %48 : vector<32x32xf32>
    %50 = arith.addf %37, %49 : vector<32x32xf32>
    %c1_24 = arith.constant 1 : index
    %c0_25 = arith.constant 0 : index
    %51 = vector.load %arg7[%c1_24, %c0_25] : memref<136x34xf32, #tpu.memory_space<vmem>>, vector<32x32xf32>
    %c3 = arith.constant 3 : index
    %52 = memref.load %arg4[%c3] : memref<108xf32, #tpu.memory_space<smem>>
    %53 = vector.broadcast %52 : f32 to vector<32x32xf32>
    %54 = arith.mulf %51, %53 : vector<32x32xf32>
    %55 = arith.addf %42, %54 : vector<32x32xf32>
    %c39 = arith.constant 39 : index
    %56 = memref.load %arg4[%c39] : memref<108xf32, #tpu.memory_space<smem>>
    %57 = vector.broadcast %56 : f32 to vector<32x32xf32>
    %58 = arith.mulf %51, %57 : vector<32x32xf32>
    %59 = arith.addf %46, %58 : vector<32x32xf32>
    %c75 = arith.constant 75 : index
    %60 = memref.load %arg4[%c75] : memref<108xf32, #tpu.memory_space<smem>>
    %61 = vector.broadcast %60 : f32 to vector<32x32xf32>
    %62 = arith.mulf %51, %61 : vector<32x32xf32>
    %63 = arith.addf %50, %62 : vector<32x32xf32>
    %c1_26 = arith.constant 1 : index
    %c1_27 = arith.constant 1 : index
    %64 = vector.load %arg7[%c1_26, %c1_27] : memref<136x34xf32, #tpu.memory_space<vmem>>, vector<32x32xf32>
    %c4 = arith.constant 4 : index
    %65 = memref.load %arg4[%c4] : memref<108xf32, #tpu.memory_space<smem>>
    %66 = vector.broadcast %65 : f32 to vector<32x32xf32>
    %67 = arith.mulf %64, %66 : vector<32x32xf32>
    %68 = arith.addf %55, %67 : vector<32x32xf32>
    %c40 = arith.constant 40 : index
    %69 = memref.load %arg4[%c40] : memref<108xf32, #tpu.memory_space<smem>>
    %70 = vector.broadcast %69 : f32 to vector<32x32xf32>
    %71 = arith.mulf %64, %70 : vector<32x32xf32>
    %72 = arith.addf %59, %71 : vector<32x32xf32>
    %c76 = arith.constant 76 : index
    %73 = memref.load %arg4[%c76] : memref<108xf32, #tpu.memory_space<smem>>
    %74 = vector.broadcast %73 : f32 to vector<32x32xf32>
    %75 = arith.mulf %64, %74 : vector<32x32xf32>
    %76 = arith.addf %63, %75 : vector<32x32xf32>
    %c1_28 = arith.constant 1 : index
    %c2_29 = arith.constant 2 : index
    %77 = vector.load %arg7[%c1_28, %c2_29] : memref<136x34xf32, #tpu.memory_space<vmem>>, vector<32x32xf32>
    %c5 = arith.constant 5 : index
    %78 = memref.load %arg4[%c5] : memref<108xf32, #tpu.memory_space<smem>>
    %79 = vector.broadcast %78 : f32 to vector<32x32xf32>
    %80 = arith.mulf %77, %79 : vector<32x32xf32>
    %81 = arith.addf %68, %80 : vector<32x32xf32>
    %c41 = arith.constant 41 : index
    %82 = memref.load %arg4[%c41] : memref<108xf32, #tpu.memory_space<smem>>
    %83 = vector.broadcast %82 : f32 to vector<32x32xf32>
    %84 = arith.mulf %77, %83 : vector<32x32xf32>
    %85 = arith.addf %72, %84 : vector<32x32xf32>
    %c77 = arith.constant 77 : index
    %86 = memref.load %arg4[%c77] : memref<108xf32, #tpu.memory_space<smem>>
    %87 = vector.broadcast %86 : f32 to vector<32x32xf32>
    %88 = arith.mulf %77, %87 : vector<32x32xf32>
    %89 = arith.addf %76, %88 : vector<32x32xf32>
    %c2_30 = arith.constant 2 : index
    %c0_31 = arith.constant 0 : index
    %90 = vector.load %arg7[%c2_30, %c0_31] : memref<136x34xf32, #tpu.memory_space<vmem>>, vector<32x32xf32>
    %c6 = arith.constant 6 : index
    %91 = memref.load %arg4[%c6] : memref<108xf32, #tpu.memory_space<smem>>
    %92 = vector.broadcast %91 : f32 to vector<32x32xf32>
    %93 = arith.mulf %90, %92 : vector<32x32xf32>
    %94 = arith.addf %81, %93 : vector<32x32xf32>
    %c42 = arith.constant 42 : index
    %95 = memref.load %arg4[%c42] : memref<108xf32, #tpu.memory_space<smem>>
    %96 = vector.broadcast %95 : f32 to vector<32x32xf32>
    %97 = arith.mulf %90, %96 : vector<32x32xf32>
    %98 = arith.addf %85, %97 : vector<32x32xf32>
    %c78 = arith.constant 78 : index
    %99 = memref.load %arg4[%c78] : memref<108xf32, #tpu.memory_space<smem>>
    %100 = vector.broadcast %99 : f32 to vector<32x32xf32>
    %101 = arith.mulf %90, %100 : vector<32x32xf32>
    %102 = arith.addf %89, %101 : vector<32x32xf32>
    %c2_32 = arith.constant 2 : index
    %c1_33 = arith.constant 1 : index
    %103 = vector.load %arg7[%c2_32, %c1_33] : memref<136x34xf32, #tpu.memory_space<vmem>>, vector<32x32xf32>
    %c7 = arith.constant 7 : index
    %104 = memref.load %arg4[%c7] : memref<108xf32, #tpu.memory_space<smem>>
    %105 = vector.broadcast %104 : f32 to vector<32x32xf32>
    %106 = arith.mulf %103, %105 : vector<32x32xf32>
    %107 = arith.addf %94, %106 : vector<32x32xf32>
    %c43 = arith.constant 43 : index
    %108 = memref.load %arg4[%c43] : memref<108xf32, #tpu.memory_space<smem>>
    %109 = vector.broadcast %108 : f32 to vector<32x32xf32>
    %110 = arith.mulf %103, %109 : vector<32x32xf32>
    %111 = arith.addf %98, %110 : vector<32x32xf32>
    %c79 = arith.constant 79 : index
    %112 = memref.load %arg4[%c79] : memref<108xf32, #tpu.memory_space<smem>>
    %113 = vector.broadcast %112 : f32 to vector<32x32xf32>
    %114 = arith.mulf %103, %113 : vector<32x32xf32>
    %115 = arith.addf %102, %114 : vector<32x32xf32>
    %c2_34 = arith.constant 2 : index
    %c2_35 = arith.constant 2 : index
    %116 = vector.load %arg7[%c2_34, %c2_35] : memref<136x34xf32, #tpu.memory_space<vmem>>, vector<32x32xf32>
    %c8 = arith.constant 8 : index
    %117 = memref.load %arg4[%c8] : memref<108xf32, #tpu.memory_space<smem>>
    %118 = vector.broadcast %117 : f32 to vector<32x32xf32>
    %119 = arith.mulf %116, %118 : vector<32x32xf32>
    %120 = arith.addf %107, %119 : vector<32x32xf32>
    %c44 = arith.constant 44 : index
    %121 = memref.load %arg4[%c44] : memref<108xf32, #tpu.memory_space<smem>>
    %122 = vector.broadcast %121 : f32 to vector<32x32xf32>
    %123 = arith.mulf %116, %122 : vector<32x32xf32>
    %124 = arith.addf %111, %123 : vector<32x32xf32>
    %c80 = arith.constant 80 : index
    %125 = memref.load %arg4[%c80] : memref<108xf32, #tpu.memory_space<smem>>
    %126 = vector.broadcast %125 : f32 to vector<32x32xf32>
    %127 = arith.mulf %116, %126 : vector<32x32xf32>
    %128 = arith.addf %115, %127 : vector<32x32xf32>
    %c34 = arith.constant 34 : index
    %c0_36 = arith.constant 0 : index
    %129 = vector.load %arg7[%c34, %c0_36] : memref<136x34xf32, #tpu.memory_space<vmem>>, vector<32x32xf32>
    %c9 = arith.constant 9 : index
    %130 = memref.load %arg4[%c9] : memref<108xf32, #tpu.memory_space<smem>>
    %131 = vector.broadcast %130 : f32 to vector<32x32xf32>
    %132 = arith.mulf %129, %131 : vector<32x32xf32>
    %133 = arith.addf %120, %132 : vector<32x32xf32>
    %c45 = arith.constant 45 : index
    %134 = memref.load %arg4[%c45] : memref<108xf32, #tpu.memory_space<smem>>
    %135 = vector.broadcast %134 : f32 to vector<32x32xf32>
    %136 = arith.mulf %129, %135 : vector<32x32xf32>
    %137 = arith.addf %124, %136 : vector<32x32xf32>
    %c81 = arith.constant 81 : index
    %138 = memref.load %arg4[%c81] : memref<108xf32, #tpu.memory_space<smem>>
    %139 = vector.broadcast %138 : f32 to vector<32x32xf32>
    %140 = arith.mulf %129, %139 : vector<32x32xf32>
    %141 = arith.addf %128, %140 : vector<32x32xf32>
    %c34_37 = arith.constant 34 : index
    %c1_38 = arith.constant 1 : index
    %142 = vector.load %arg7[%c34_37, %c1_38] : memref<136x34xf32, #tpu.memory_space<vmem>>, vector<32x32xf32>
    %c10 = arith.constant 10 : index
    %143 = memref.load %arg4[%c10] : memref<108xf32, #tpu.memory_space<smem>>
    %144 = vector.broadcast %143 : f32 to vector<32x32xf32>
    %145 = arith.mulf %142, %144 : vector<32x32xf32>
    %146 = arith.addf %133, %145 : vector<32x32xf32>
    %c46 = arith.constant 46 : index
    %147 = memref.load %arg4[%c46] : memref<108xf32, #tpu.memory_space<smem>>
    %148 = vector.broadcast %147 : f32 to vector<32x32xf32>
    %149 = arith.mulf %142, %148 : vector<32x32xf32>
    %150 = arith.addf %137, %149 : vector<32x32xf32>
    %c82 = arith.constant 82 : index
    %151 = memref.load %arg4[%c82] : memref<108xf32, #tpu.memory_space<smem>>
    %152 = vector.broadcast %151 : f32 to vector<32x32xf32>
    %153 = arith.mulf %142, %152 : vector<32x32xf32>
    %154 = arith.addf %141, %153 : vector<32x32xf32>
    %c34_39 = arith.constant 34 : index
    %c2_40 = arith.constant 2 : index
    %155 = vector.load %arg7[%c34_39, %c2_40] : memref<136x34xf32, #tpu.memory_space<vmem>>, vector<32x32xf32>
    %c11 = arith.constant 11 : index
    %156 = memref.load %arg4[%c11] : memref<108xf32, #tpu.memory_space<smem>>
    %157 = vector.broadcast %156 : f32 to vector<32x32xf32>
    %158 = arith.mulf %155, %157 : vector<32x32xf32>
    %159 = arith.addf %146, %158 : vector<32x32xf32>
    %c47 = arith.constant 47 : index
    %160 = memref.load %arg4[%c47] : memref<108xf32, #tpu.memory_space<smem>>
    %161 = vector.broadcast %160 : f32 to vector<32x32xf32>
    %162 = arith.mulf %155, %161 : vector<32x32xf32>
    %163 = arith.addf %150, %162 : vector<32x32xf32>
    %c83 = arith.constant 83 : index
    %164 = memref.load %arg4[%c83] : memref<108xf32, #tpu.memory_space<smem>>
    %165 = vector.broadcast %164 : f32 to vector<32x32xf32>
    %166 = arith.mulf %155, %165 : vector<32x32xf32>
    %167 = arith.addf %154, %166 : vector<32x32xf32>
    %c35 = arith.constant 35 : index
    %c0_41 = arith.constant 0 : index
    %168 = vector.load %arg7[%c35, %c0_41] : memref<136x34xf32, #tpu.memory_space<vmem>>, vector<32x32xf32>
    %c12 = arith.constant 12 : index
    %169 = memref.load %arg4[%c12] : memref<108xf32, #tpu.memory_space<smem>>
    %170 = vector.broadcast %169 : f32 to vector<32x32xf32>
    %171 = arith.mulf %168, %170 : vector<32x32xf32>
    %172 = arith.addf %159, %171 : vector<32x32xf32>
    %c48 = arith.constant 48 : index
    %173 = memref.load %arg4[%c48] : memref<108xf32, #tpu.memory_space<smem>>
    %174 = vector.broadcast %173 : f32 to vector<32x32xf32>
    %175 = arith.mulf %168, %174 : vector<32x32xf32>
    %176 = arith.addf %163, %175 : vector<32x32xf32>
    %c84 = arith.constant 84 : index
    %177 = memref.load %arg4[%c84] : memref<108xf32, #tpu.memory_space<smem>>
    %178 = vector.broadcast %177 : f32 to vector<32x32xf32>
    %179 = arith.mulf %168, %178 : vector<32x32xf32>
    %180 = arith.addf %167, %179 : vector<32x32xf32>
    %c35_42 = arith.constant 35 : index
    %c1_43 = arith.constant 1 : index
    %181 = vector.load %arg7[%c35_42, %c1_43] : memref<136x34xf32, #tpu.memory_space<vmem>>, vector<32x32xf32>
    %c13 = arith.constant 13 : index
    %182 = memref.load %arg4[%c13] : memref<108xf32, #tpu.memory_space<smem>>
    %183 = vector.broadcast %182 : f32 to vector<32x32xf32>
    %184 = arith.mulf %181, %183 : vector<32x32xf32>
    %185 = arith.addf %172, %184 : vector<32x32xf32>
    %c49 = arith.constant 49 : index
    %186 = memref.load %arg4[%c49] : memref<108xf32, #tpu.memory_space<smem>>
    %187 = vector.broadcast %186 : f32 to vector<32x32xf32>
    %188 = arith.mulf %181, %187 : vector<32x32xf32>
    %189 = arith.addf %176, %188 : vector<32x32xf32>
    %c85 = arith.constant 85 : index
    %190 = memref.load %arg4[%c85] : memref<108xf32, #tpu.memory_space<smem>>
    %191 = vector.broadcast %190 : f32 to vector<32x32xf32>
    %192 = arith.mulf %181, %191 : vector<32x32xf32>
    %193 = arith.addf %180, %192 : vector<32x32xf32>
    %c35_44 = arith.constant 35 : index
    %c2_45 = arith.constant 2 : index
    %194 = vector.load %arg7[%c35_44, %c2_45] : memref<136x34xf32, #tpu.memory_space<vmem>>, vector<32x32xf32>
    %c14 = arith.constant 14 : index
    %195 = memref.load %arg4[%c14] : memref<108xf32, #tpu.memory_space<smem>>
    %196 = vector.broadcast %195 : f32 to vector<32x32xf32>
    %197 = arith.mulf %194, %196 : vector<32x32xf32>
    %198 = arith.addf %185, %197 : vector<32x32xf32>
    %c50 = arith.constant 50 : index
    %199 = memref.load %arg4[%c50] : memref<108xf32, #tpu.memory_space<smem>>
    %200 = vector.broadcast %199 : f32 to vector<32x32xf32>
    %201 = arith.mulf %194, %200 : vector<32x32xf32>
    %202 = arith.addf %189, %201 : vector<32x32xf32>
    %c86 = arith.constant 86 : index
    %203 = memref.load %arg4[%c86] : memref<108xf32, #tpu.memory_space<smem>>
    %204 = vector.broadcast %203 : f32 to vector<32x32xf32>
    %205 = arith.mulf %194, %204 : vector<32x32xf32>
    %206 = arith.addf %193, %205 : vector<32x32xf32>
    %c36_46 = arith.constant 36 : index
    %c0_47 = arith.constant 0 : index
    %207 = vector.load %arg7[%c36_46, %c0_47] : memref<136x34xf32, #tpu.memory_space<vmem>>, vector<32x32xf32>
    %c15 = arith.constant 15 : index
    %208 = memref.load %arg4[%c15] : memref<108xf32, #tpu.memory_space<smem>>
    %209 = vector.broadcast %208 : f32 to vector<32x32xf32>
    %210 = arith.mulf %207, %209 : vector<32x32xf32>
    %211 = arith.addf %198, %210 : vector<32x32xf32>
    %c51 = arith.constant 51 : index
    %212 = memref.load %arg4[%c51] : memref<108xf32, #tpu.memory_space<smem>>
    %213 = vector.broadcast %212 : f32 to vector<32x32xf32>
    %214 = arith.mulf %207, %213 : vector<32x32xf32>
    %215 = arith.addf %202, %214 : vector<32x32xf32>
    %c87 = arith.constant 87 : index
    %216 = memref.load %arg4[%c87] : memref<108xf32, #tpu.memory_space<smem>>
    %217 = vector.broadcast %216 : f32 to vector<32x32xf32>
    %218 = arith.mulf %207, %217 : vector<32x32xf32>
    %219 = arith.addf %206, %218 : vector<32x32xf32>
    %c36_48 = arith.constant 36 : index
    %c1_49 = arith.constant 1 : index
    %220 = vector.load %arg7[%c36_48, %c1_49] : memref<136x34xf32, #tpu.memory_space<vmem>>, vector<32x32xf32>
    %c16 = arith.constant 16 : index
    %221 = memref.load %arg4[%c16] : memref<108xf32, #tpu.memory_space<smem>>
    %222 = vector.broadcast %221 : f32 to vector<32x32xf32>
    %223 = arith.mulf %220, %222 : vector<32x32xf32>
    %224 = arith.addf %211, %223 : vector<32x32xf32>
    %c52 = arith.constant 52 : index
    %225 = memref.load %arg4[%c52] : memref<108xf32, #tpu.memory_space<smem>>
    %226 = vector.broadcast %225 : f32 to vector<32x32xf32>
    %227 = arith.mulf %220, %226 : vector<32x32xf32>
    %228 = arith.addf %215, %227 : vector<32x32xf32>
    %c88 = arith.constant 88 : index
    %229 = memref.load %arg4[%c88] : memref<108xf32, #tpu.memory_space<smem>>
    %230 = vector.broadcast %229 : f32 to vector<32x32xf32>
    %231 = arith.mulf %220, %230 : vector<32x32xf32>
    %232 = arith.addf %219, %231 : vector<32x32xf32>
    %c36_50 = arith.constant 36 : index
    %c2_51 = arith.constant 2 : index
    %233 = vector.load %arg7[%c36_50, %c2_51] : memref<136x34xf32, #tpu.memory_space<vmem>>, vector<32x32xf32>
    %c17 = arith.constant 17 : index
    %234 = memref.load %arg4[%c17] : memref<108xf32, #tpu.memory_space<smem>>
    %235 = vector.broadcast %234 : f32 to vector<32x32xf32>
    %236 = arith.mulf %233, %235 : vector<32x32xf32>
    %237 = arith.addf %224, %236 : vector<32x32xf32>
    %c53 = arith.constant 53 : index
    %238 = memref.load %arg4[%c53] : memref<108xf32, #tpu.memory_space<smem>>
    %239 = vector.broadcast %238 : f32 to vector<32x32xf32>
    %240 = arith.mulf %233, %239 : vector<32x32xf32>
    %241 = arith.addf %228, %240 : vector<32x32xf32>
    %c89 = arith.constant 89 : index
    %242 = memref.load %arg4[%c89] : memref<108xf32, #tpu.memory_space<smem>>
    %243 = vector.broadcast %242 : f32 to vector<32x32xf32>
    %244 = arith.mulf %233, %243 : vector<32x32xf32>
    %245 = arith.addf %232, %244 : vector<32x32xf32>
    %c68 = arith.constant 68 : index
    %c0_52 = arith.constant 0 : index
    %246 = vector.load %arg7[%c68, %c0_52] : memref<136x34xf32, #tpu.memory_space<vmem>>, vector<32x32xf32>
    %c18 = arith.constant 18 : index
    %247 = memref.load %arg4[%c18] : memref<108xf32, #tpu.memory_space<smem>>
    %248 = vector.broadcast %247 : f32 to vector<32x32xf32>
    %249 = arith.mulf %246, %248 : vector<32x32xf32>
    %250 = arith.addf %237, %249 : vector<32x32xf32>
    %c54 = arith.constant 54 : index
    %251 = memref.load %arg4[%c54] : memref<108xf32, #tpu.memory_space<smem>>
    %252 = vector.broadcast %251 : f32 to vector<32x32xf32>
    %253 = arith.mulf %246, %252 : vector<32x32xf32>
    %254 = arith.addf %241, %253 : vector<32x32xf32>
    %c90 = arith.constant 90 : index
    %255 = memref.load %arg4[%c90] : memref<108xf32, #tpu.memory_space<smem>>
    %256 = vector.broadcast %255 : f32 to vector<32x32xf32>
    %257 = arith.mulf %246, %256 : vector<32x32xf32>
    %258 = arith.addf %245, %257 : vector<32x32xf32>
    %c68_53 = arith.constant 68 : index
    %c1_54 = arith.constant 1 : index
    %259 = vector.load %arg7[%c68_53, %c1_54] : memref<136x34xf32, #tpu.memory_space<vmem>>, vector<32x32xf32>
    %c19 = arith.constant 19 : index
    %260 = memref.load %arg4[%c19] : memref<108xf32, #tpu.memory_space<smem>>
    %261 = vector.broadcast %260 : f32 to vector<32x32xf32>
    %262 = arith.mulf %259, %261 : vector<32x32xf32>
    %263 = arith.addf %250, %262 : vector<32x32xf32>
    %c55 = arith.constant 55 : index
    %264 = memref.load %arg4[%c55] : memref<108xf32, #tpu.memory_space<smem>>
    %265 = vector.broadcast %264 : f32 to vector<32x32xf32>
    %266 = arith.mulf %259, %265 : vector<32x32xf32>
    %267 = arith.addf %254, %266 : vector<32x32xf32>
    %c91 = arith.constant 91 : index
    %268 = memref.load %arg4[%c91] : memref<108xf32, #tpu.memory_space<smem>>
    %269 = vector.broadcast %268 : f32 to vector<32x32xf32>
    %270 = arith.mulf %259, %269 : vector<32x32xf32>
    %271 = arith.addf %258, %270 : vector<32x32xf32>
    %c68_55 = arith.constant 68 : index
    %c2_56 = arith.constant 2 : index
    %272 = vector.load %arg7[%c68_55, %c2_56] : memref<136x34xf32, #tpu.memory_space<vmem>>, vector<32x32xf32>
    %c20 = arith.constant 20 : index
    %273 = memref.load %arg4[%c20] : memref<108xf32, #tpu.memory_space<smem>>
    %274 = vector.broadcast %273 : f32 to vector<32x32xf32>
    %275 = arith.mulf %272, %274 : vector<32x32xf32>
    %276 = arith.addf %263, %275 : vector<32x32xf32>
    %c56 = arith.constant 56 : index
    %277 = memref.load %arg4[%c56] : memref<108xf32, #tpu.memory_space<smem>>
    %278 = vector.broadcast %277 : f32 to vector<32x32xf32>
    %279 = arith.mulf %272, %278 : vector<32x32xf32>
    %280 = arith.addf %267, %279 : vector<32x32xf32>
    %c92 = arith.constant 92 : index
    %281 = memref.load %arg4[%c92] : memref<108xf32, #tpu.memory_space<smem>>
    %282 = vector.broadcast %281 : f32 to vector<32x32xf32>
    %283 = arith.mulf %272, %282 : vector<32x32xf32>
    %284 = arith.addf %271, %283 : vector<32x32xf32>
    %c69 = arith.constant 69 : index
    %c0_57 = arith.constant 0 : index
    %285 = vector.load %arg7[%c69, %c0_57] : memref<136x34xf32, #tpu.memory_space<vmem>>, vector<32x32xf32>
    %c21 = arith.constant 21 : index
    %286 = memref.load %arg4[%c21] : memref<108xf32, #tpu.memory_space<smem>>
    %287 = vector.broadcast %286 : f32 to vector<32x32xf32>
    %288 = arith.mulf %285, %287 : vector<32x32xf32>
    %289 = arith.addf %276, %288 : vector<32x32xf32>
    %c57 = arith.constant 57 : index
    %290 = memref.load %arg4[%c57] : memref<108xf32, #tpu.memory_space<smem>>
    %291 = vector.broadcast %290 : f32 to vector<32x32xf32>
    %292 = arith.mulf %285, %291 : vector<32x32xf32>
    %293 = arith.addf %280, %292 : vector<32x32xf32>
    %c93 = arith.constant 93 : index
    %294 = memref.load %arg4[%c93] : memref<108xf32, #tpu.memory_space<smem>>
    %295 = vector.broadcast %294 : f32 to vector<32x32xf32>
    %296 = arith.mulf %285, %295 : vector<32x32xf32>
    %297 = arith.addf %284, %296 : vector<32x32xf32>
    %c69_58 = arith.constant 69 : index
    %c1_59 = arith.constant 1 : index
    %298 = vector.load %arg7[%c69_58, %c1_59] : memref<136x34xf32, #tpu.memory_space<vmem>>, vector<32x32xf32>
    %c22 = arith.constant 22 : index
    %299 = memref.load %arg4[%c22] : memref<108xf32, #tpu.memory_space<smem>>
    %300 = vector.broadcast %299 : f32 to vector<32x32xf32>
    %301 = arith.mulf %298, %300 : vector<32x32xf32>
    %302 = arith.addf %289, %301 : vector<32x32xf32>
    %c58 = arith.constant 58 : index
    %303 = memref.load %arg4[%c58] : memref<108xf32, #tpu.memory_space<smem>>
    %304 = vector.broadcast %303 : f32 to vector<32x32xf32>
    %305 = arith.mulf %298, %304 : vector<32x32xf32>
    %306 = arith.addf %293, %305 : vector<32x32xf32>
    %c94 = arith.constant 94 : index
    %307 = memref.load %arg4[%c94] : memref<108xf32, #tpu.memory_space<smem>>
    %308 = vector.broadcast %307 : f32 to vector<32x32xf32>
    %309 = arith.mulf %298, %308 : vector<32x32xf32>
    %310 = arith.addf %297, %309 : vector<32x32xf32>
    %c69_60 = arith.constant 69 : index
    %c2_61 = arith.constant 2 : index
    %311 = vector.load %arg7[%c69_60, %c2_61] : memref<136x34xf32, #tpu.memory_space<vmem>>, vector<32x32xf32>
    %c23 = arith.constant 23 : index
    %312 = memref.load %arg4[%c23] : memref<108xf32, #tpu.memory_space<smem>>
    %313 = vector.broadcast %312 : f32 to vector<32x32xf32>
    %314 = arith.mulf %311, %313 : vector<32x32xf32>
    %315 = arith.addf %302, %314 : vector<32x32xf32>
    %c59 = arith.constant 59 : index
    %316 = memref.load %arg4[%c59] : memref<108xf32, #tpu.memory_space<smem>>
    %317 = vector.broadcast %316 : f32 to vector<32x32xf32>
    %318 = arith.mulf %311, %317 : vector<32x32xf32>
    %319 = arith.addf %306, %318 : vector<32x32xf32>
    %c95 = arith.constant 95 : index
    %320 = memref.load %arg4[%c95] : memref<108xf32, #tpu.memory_space<smem>>
    %321 = vector.broadcast %320 : f32 to vector<32x32xf32>
    %322 = arith.mulf %311, %321 : vector<32x32xf32>
    %323 = arith.addf %310, %322 : vector<32x32xf32>
    %c70 = arith.constant 70 : index
    %c0_62 = arith.constant 0 : index
    %324 = vector.load %arg7[%c70, %c0_62] : memref<136x34xf32, #tpu.memory_space<vmem>>, vector<32x32xf32>
    %c24 = arith.constant 24 : index
    %325 = memref.load %arg4[%c24] : memref<108xf32, #tpu.memory_space<smem>>
    %326 = vector.broadcast %325 : f32 to vector<32x32xf32>
    %327 = arith.mulf %324, %326 : vector<32x32xf32>
    %328 = arith.addf %315, %327 : vector<32x32xf32>
    %c60 = arith.constant 60 : index
    %329 = memref.load %arg4[%c60] : memref<108xf32, #tpu.memory_space<smem>>
    %330 = vector.broadcast %329 : f32 to vector<32x32xf32>
    %331 = arith.mulf %324, %330 : vector<32x32xf32>
    %332 = arith.addf %319, %331 : vector<32x32xf32>
    %c96 = arith.constant 96 : index
    %333 = memref.load %arg4[%c96] : memref<108xf32, #tpu.memory_space<smem>>
    %334 = vector.broadcast %333 : f32 to vector<32x32xf32>
    %335 = arith.mulf %324, %334 : vector<32x32xf32>
    %336 = arith.addf %323, %335 : vector<32x32xf32>
    %c70_63 = arith.constant 70 : index
    %c1_64 = arith.constant 1 : index
    %337 = vector.load %arg7[%c70_63, %c1_64] : memref<136x34xf32, #tpu.memory_space<vmem>>, vector<32x32xf32>
    %c25 = arith.constant 25 : index
    %338 = memref.load %arg4[%c25] : memref<108xf32, #tpu.memory_space<smem>>
    %339 = vector.broadcast %338 : f32 to vector<32x32xf32>
    %340 = arith.mulf %337, %339 : vector<32x32xf32>
    %341 = arith.addf %328, %340 : vector<32x32xf32>
    %c61 = arith.constant 61 : index
    %342 = memref.load %arg4[%c61] : memref<108xf32, #tpu.memory_space<smem>>
    %343 = vector.broadcast %342 : f32 to vector<32x32xf32>
    %344 = arith.mulf %337, %343 : vector<32x32xf32>
    %345 = arith.addf %332, %344 : vector<32x32xf32>
    %c97 = arith.constant 97 : index
    %346 = memref.load %arg4[%c97] : memref<108xf32, #tpu.memory_space<smem>>
    %347 = vector.broadcast %346 : f32 to vector<32x32xf32>
    %348 = arith.mulf %337, %347 : vector<32x32xf32>
    %349 = arith.addf %336, %348 : vector<32x32xf32>
    %c70_65 = arith.constant 70 : index
    %c2_66 = arith.constant 2 : index
    %350 = vector.load %arg7[%c70_65, %c2_66] : memref<136x34xf32, #tpu.memory_space<vmem>>, vector<32x32xf32>
    %c26 = arith.constant 26 : index
    %351 = memref.load %arg4[%c26] : memref<108xf32, #tpu.memory_space<smem>>
    %352 = vector.broadcast %351 : f32 to vector<32x32xf32>
    %353 = arith.mulf %350, %352 : vector<32x32xf32>
    %354 = arith.addf %341, %353 : vector<32x32xf32>
    %c62 = arith.constant 62 : index
    %355 = memref.load %arg4[%c62] : memref<108xf32, #tpu.memory_space<smem>>
    %356 = vector.broadcast %355 : f32 to vector<32x32xf32>
    %357 = arith.mulf %350, %356 : vector<32x32xf32>
    %358 = arith.addf %345, %357 : vector<32x32xf32>
    %c98 = arith.constant 98 : index
    %359 = memref.load %arg4[%c98] : memref<108xf32, #tpu.memory_space<smem>>
    %360 = vector.broadcast %359 : f32 to vector<32x32xf32>
    %361 = arith.mulf %350, %360 : vector<32x32xf32>
    %362 = arith.addf %349, %361 : vector<32x32xf32>
    %c102 = arith.constant 102 : index
    %c0_67 = arith.constant 0 : index
    %363 = vector.load %arg7[%c102, %c0_67] : memref<136x34xf32, #tpu.memory_space<vmem>>, vector<32x32xf32>
    %c27 = arith.constant 27 : index
    %364 = memref.load %arg4[%c27] : memref<108xf32, #tpu.memory_space<smem>>
    %365 = vector.broadcast %364 : f32 to vector<32x32xf32>
    %366 = arith.mulf %363, %365 : vector<32x32xf32>
    %367 = arith.addf %354, %366 : vector<32x32xf32>
    %c63 = arith.constant 63 : index
    %368 = memref.load %arg4[%c63] : memref<108xf32, #tpu.memory_space<smem>>
    %369 = vector.broadcast %368 : f32 to vector<32x32xf32>
    %370 = arith.mulf %363, %369 : vector<32x32xf32>
    %371 = arith.addf %358, %370 : vector<32x32xf32>
    %c99 = arith.constant 99 : index
    %372 = memref.load %arg4[%c99] : memref<108xf32, #tpu.memory_space<smem>>
    %373 = vector.broadcast %372 : f32 to vector<32x32xf32>
    %374 = arith.mulf %363, %373 : vector<32x32xf32>
    %375 = arith.addf %362, %374 : vector<32x32xf32>
    %c102_68 = arith.constant 102 : index
    %c1_69 = arith.constant 1 : index
    %376 = vector.load %arg7[%c102_68, %c1_69] : memref<136x34xf32, #tpu.memory_space<vmem>>, vector<32x32xf32>
    %c28 = arith.constant 28 : index
    %377 = memref.load %arg4[%c28] : memref<108xf32, #tpu.memory_space<smem>>
    %378 = vector.broadcast %377 : f32 to vector<32x32xf32>
    %379 = arith.mulf %376, %378 : vector<32x32xf32>
    %380 = arith.addf %367, %379 : vector<32x32xf32>
    %c64 = arith.constant 64 : index
    %381 = memref.load %arg4[%c64] : memref<108xf32, #tpu.memory_space<smem>>
    %382 = vector.broadcast %381 : f32 to vector<32x32xf32>
    %383 = arith.mulf %376, %382 : vector<32x32xf32>
    %384 = arith.addf %371, %383 : vector<32x32xf32>
    %c100 = arith.constant 100 : index
    %385 = memref.load %arg4[%c100] : memref<108xf32, #tpu.memory_space<smem>>
    %386 = vector.broadcast %385 : f32 to vector<32x32xf32>
    %387 = arith.mulf %376, %386 : vector<32x32xf32>
    %388 = arith.addf %375, %387 : vector<32x32xf32>
    %c102_70 = arith.constant 102 : index
    %c2_71 = arith.constant 2 : index
    %389 = vector.load %arg7[%c102_70, %c2_71] : memref<136x34xf32, #tpu.memory_space<vmem>>, vector<32x32xf32>
    %c29 = arith.constant 29 : index
    %390 = memref.load %arg4[%c29] : memref<108xf32, #tpu.memory_space<smem>>
    %391 = vector.broadcast %390 : f32 to vector<32x32xf32>
    %392 = arith.mulf %389, %391 : vector<32x32xf32>
    %393 = arith.addf %380, %392 : vector<32x32xf32>
    %c65 = arith.constant 65 : index
    %394 = memref.load %arg4[%c65] : memref<108xf32, #tpu.memory_space<smem>>
    %395 = vector.broadcast %394 : f32 to vector<32x32xf32>
    %396 = arith.mulf %389, %395 : vector<32x32xf32>
    %397 = arith.addf %384, %396 : vector<32x32xf32>
    %c101 = arith.constant 101 : index
    %398 = memref.load %arg4[%c101] : memref<108xf32, #tpu.memory_space<smem>>
    %399 = vector.broadcast %398 : f32 to vector<32x32xf32>
    %400 = arith.mulf %389, %399 : vector<32x32xf32>
    %401 = arith.addf %388, %400 : vector<32x32xf32>
    %c103 = arith.constant 103 : index
    %c0_72 = arith.constant 0 : index
    %402 = vector.load %arg7[%c103, %c0_72] : memref<136x34xf32, #tpu.memory_space<vmem>>, vector<32x32xf32>
    %c30 = arith.constant 30 : index
    %403 = memref.load %arg4[%c30] : memref<108xf32, #tpu.memory_space<smem>>
    %404 = vector.broadcast %403 : f32 to vector<32x32xf32>
    %405 = arith.mulf %402, %404 : vector<32x32xf32>
    %406 = arith.addf %393, %405 : vector<32x32xf32>
    %c66 = arith.constant 66 : index
    %407 = memref.load %arg4[%c66] : memref<108xf32, #tpu.memory_space<smem>>
    %408 = vector.broadcast %407 : f32 to vector<32x32xf32>
    %409 = arith.mulf %402, %408 : vector<32x32xf32>
    %410 = arith.addf %397, %409 : vector<32x32xf32>
    %c102_73 = arith.constant 102 : index
    %411 = memref.load %arg4[%c102_73] : memref<108xf32, #tpu.memory_space<smem>>
    %412 = vector.broadcast %411 : f32 to vector<32x32xf32>
    %413 = arith.mulf %402, %412 : vector<32x32xf32>
    %414 = arith.addf %401, %413 : vector<32x32xf32>
    %c103_74 = arith.constant 103 : index
    %c1_75 = arith.constant 1 : index
    %415 = vector.load %arg7[%c103_74, %c1_75] : memref<136x34xf32, #tpu.memory_space<vmem>>, vector<32x32xf32>
    %c31 = arith.constant 31 : index
    %416 = memref.load %arg4[%c31] : memref<108xf32, #tpu.memory_space<smem>>
    %417 = vector.broadcast %416 : f32 to vector<32x32xf32>
    %418 = arith.mulf %415, %417 : vector<32x32xf32>
    %419 = arith.addf %406, %418 : vector<32x32xf32>
    %c67 = arith.constant 67 : index
    %420 = memref.load %arg4[%c67] : memref<108xf32, #tpu.memory_space<smem>>
    %421 = vector.broadcast %420 : f32 to vector<32x32xf32>
    %422 = arith.mulf %415, %421 : vector<32x32xf32>
    %423 = arith.addf %410, %422 : vector<32x32xf32>
    %c103_76 = arith.constant 103 : index
    %424 = memref.load %arg4[%c103_76] : memref<108xf32, #tpu.memory_space<smem>>
    %425 = vector.broadcast %424 : f32 to vector<32x32xf32>
    %426 = arith.mulf %415, %425 : vector<32x32xf32>
    %427 = arith.addf %414, %426 : vector<32x32xf32>
    %c103_77 = arith.constant 103 : index
    %c2_78 = arith.constant 2 : index
    %428 = vector.load %arg7[%c103_77, %c2_78] : memref<136x34xf32, #tpu.memory_space<vmem>>, vector<32x32xf32>
    %c32 = arith.constant 32 : index
    %429 = memref.load %arg4[%c32] : memref<108xf32, #tpu.memory_space<smem>>
    %430 = vector.broadcast %429 : f32 to vector<32x32xf32>
    %431 = arith.mulf %428, %430 : vector<32x32xf32>
    %432 = arith.addf %419, %431 : vector<32x32xf32>
    %c68_79 = arith.constant 68 : index
    %433 = memref.load %arg4[%c68_79] : memref<108xf32, #tpu.memory_space<smem>>
    %434 = vector.broadcast %433 : f32 to vector<32x32xf32>
    %435 = arith.mulf %428, %434 : vector<32x32xf32>
    %436 = arith.addf %423, %435 : vector<32x32xf32>
    %c104 = arith.constant 104 : index
    %437 = memref.load %arg4[%c104] : memref<108xf32, #tpu.memory_space<smem>>
    %438 = vector.broadcast %437 : f32 to vector<32x32xf32>
    %439 = arith.mulf %428, %438 : vector<32x32xf32>
    %440 = arith.addf %427, %439 : vector<32x32xf32>
    %c104_80 = arith.constant 104 : index
    %c0_81 = arith.constant 0 : index
    %441 = vector.load %arg7[%c104_80, %c0_81] : memref<136x34xf32, #tpu.memory_space<vmem>>, vector<32x32xf32>
    %c33 = arith.constant 33 : index
    %442 = memref.load %arg4[%c33] : memref<108xf32, #tpu.memory_space<smem>>
    %443 = vector.broadcast %442 : f32 to vector<32x32xf32>
    %444 = arith.mulf %441, %443 : vector<32x32xf32>
    %445 = arith.addf %432, %444 : vector<32x32xf32>
    %c69_82 = arith.constant 69 : index
    %446 = memref.load %arg4[%c69_82] : memref<108xf32, #tpu.memory_space<smem>>
    %447 = vector.broadcast %446 : f32 to vector<32x32xf32>
    %448 = arith.mulf %441, %447 : vector<32x32xf32>
    %449 = arith.addf %436, %448 : vector<32x32xf32>
    %c105 = arith.constant 105 : index
    %450 = memref.load %arg4[%c105] : memref<108xf32, #tpu.memory_space<smem>>
    %451 = vector.broadcast %450 : f32 to vector<32x32xf32>
    %452 = arith.mulf %441, %451 : vector<32x32xf32>
    %453 = arith.addf %440, %452 : vector<32x32xf32>
    %c104_83 = arith.constant 104 : index
    %c1_84 = arith.constant 1 : index
    %454 = vector.load %arg7[%c104_83, %c1_84] : memref<136x34xf32, #tpu.memory_space<vmem>>, vector<32x32xf32>
    %c34_85 = arith.constant 34 : index
    %455 = memref.load %arg4[%c34_85] : memref<108xf32, #tpu.memory_space<smem>>
    %456 = vector.broadcast %455 : f32 to vector<32x32xf32>
    %457 = arith.mulf %454, %456 : vector<32x32xf32>
    %458 = arith.addf %445, %457 : vector<32x32xf32>
    %c70_86 = arith.constant 70 : index
    %459 = memref.load %arg4[%c70_86] : memref<108xf32, #tpu.memory_space<smem>>
    %460 = vector.broadcast %459 : f32 to vector<32x32xf32>
    %461 = arith.mulf %454, %460 : vector<32x32xf32>
    %462 = arith.addf %449, %461 : vector<32x32xf32>
    %c106 = arith.constant 106 : index
    %463 = memref.load %arg4[%c106] : memref<108xf32, #tpu.memory_space<smem>>
    %464 = vector.broadcast %463 : f32 to vector<32x32xf32>
    %465 = arith.mulf %454, %464 : vector<32x32xf32>
    %466 = arith.addf %453, %465 : vector<32x32xf32>
    %c104_87 = arith.constant 104 : index
    %c2_88 = arith.constant 2 : index
    %467 = vector.load %arg7[%c104_87, %c2_88] : memref<136x34xf32, #tpu.memory_space<vmem>>, vector<32x32xf32>
    %c35_89 = arith.constant 35 : index
    %468 = memref.load %arg4[%c35_89] : memref<108xf32, #tpu.memory_space<smem>>
    %469 = vector.broadcast %468 : f32 to vector<32x32xf32>
    %470 = arith.mulf %467, %469 : vector<32x32xf32>
    %471 = arith.addf %458, %470 : vector<32x32xf32>
    %c71 = arith.constant 71 : index
    %472 = memref.load %arg4[%c71] : memref<108xf32, #tpu.memory_space<smem>>
    %473 = vector.broadcast %472 : f32 to vector<32x32xf32>
    %474 = arith.mulf %467, %473 : vector<32x32xf32>
    %475 = arith.addf %462, %474 : vector<32x32xf32>
    %c107 = arith.constant 107 : index
    %476 = memref.load %arg4[%c107] : memref<108xf32, #tpu.memory_space<smem>>
    %477 = vector.broadcast %476 : f32 to vector<32x32xf32>
    %478 = arith.mulf %467, %477 : vector<32x32xf32>
    %479 = arith.addf %466, %478 : vector<32x32xf32>
    %c0_90 = arith.constant 0 : index
    %480 = memref.load %arg5[%c0_90] : memref<3xf32, #tpu.memory_space<smem>>
    %481 = vector.broadcast %480 : f32 to vector<32x32xf32>
    %482 = arith.addf %471, %481 : vector<32x32xf32>
    %cst_91 = arith.constant 0.000000e+00 : f32
    %483 = vector.broadcast %cst_91 : f32 to vector<32x32xf32>
    %484 = arith.cmpf oge, %482, %483 : vector<32x32xf32>
    %cst_92 = arith.constant 0.00999999977 : f32
    %485 = vector.broadcast %cst_92 : f32 to vector<32x32xf32>
    %486 = arith.mulf %485, %482 : vector<32x32xf32>
    %487 = arith.select %484, %482, %486 : vector<32x32xi1>, vector<32x32xf32>
    %c0_93 = arith.constant 0 : index
    %c0_94 = arith.constant 0 : index
    %c2_95 = arith.constant 2 : index
    %c1_96 = arith.constant 1 : index
    %488 = vector.load %arg6[%c0_93, %c0_94, %c2_95, %c1_96] : memref<1x3x36x35xf32, #tpu.memory_space<vmem>>, vector<1x1x32x32xf32>
    %489 = vector.shape_cast %488 : vector<1x1x32x32xf32> to vector<32x32xf32>
    %490 = vector.shape_cast %487 : vector<32x32xf32> to vector<1x1x32x32xf32>
    tpu.vector_store %arg6[%c0_93, %c0_94, %c2_95, %c1_96], %490 {strides = array<i32>} : memref<1x3x36x35xf32, #tpu.memory_space<vmem>>, vector<1x1x32x32xf32>,
    %c1_97 = arith.constant 1 : index
    %491 = memref.load %arg5[%c1_97] : memref<3xf32, #tpu.memory_space<smem>>
    %492 = vector.broadcast %491 : f32 to vector<32x32xf32>
    %493 = arith.addf %475, %492 : vector<32x32xf32>
    %cst_98 = arith.constant 0.000000e+00 : f32
    %494 = vector.broadcast %cst_98 : f32 to vector<32x32xf32>
    %495 = arith.cmpf oge, %493, %494 : vector<32x32xf32>
    %cst_99 = arith.constant 0.00999999977 : f32
    %496 = vector.broadcast %cst_99 : f32 to vector<32x32xf32>
    %497 = arith.mulf %496, %493 : vector<32x32xf32>
    %498 = arith.select %495, %493, %497 : vector<32x32xi1>, vector<32x32xf32>
    %c0_100 = arith.constant 0 : index
    %c1_101 = arith.constant 1 : index
    %c2_102 = arith.constant 2 : index
    %c1_103 = arith.constant 1 : index
    %499 = vector.load %arg6[%c0_100, %c1_101, %c2_102, %c1_103] : memref<1x3x36x35xf32, #tpu.memory_space<vmem>>, vector<1x1x32x32xf32>
    %500 = vector.shape_cast %499 : vector<1x1x32x32xf32> to vector<32x32xf32>
    %501 = vector.shape_cast %498 : vector<32x32xf32> to vector<1x1x32x32xf32>
    tpu.vector_store %arg6[%c0_100, %c1_101, %c2_102, %c1_103], %501 {strides = array<i32>} : memref<1x3x36x35xf32, #tpu.memory_space<vmem>>, vector<1x1x32x32xf32>,
    %c2_104 = arith.constant 2 : index
    %502 = memref.load %arg5[%c2_104] : memref<3xf32, #tpu.memory_space<smem>>
    %503 = vector.broadcast %502 : f32 to vector<32x32xf32>
    %504 = arith.addf %479, %503 : vector<32x32xf32>
    %cst_105 = arith.constant 0.000000e+00 : f32
    %505 = vector.broadcast %cst_105 : f32 to vector<32x32xf32>
    %506 = arith.cmpf oge, %504, %505 : vector<32x32xf32>
    %cst_106 = arith.constant 0.00999999977 : f32
    %507 = vector.broadcast %cst_106 : f32 to vector<32x32xf32>
    %508 = arith.mulf %507, %504 : vector<32x32xf32>
    %509 = arith.select %506, %504, %508 : vector<32x32xi1>, vector<32x32xf32>
    %c0_107 = arith.constant 0 : index
    %c2_108 = arith.constant 2 : index
    %c2_109 = arith.constant 2 : index
    %c1_110 = arith.constant 1 : index
    %510 = vector.load %arg6[%c0_107, %c2_108, %c2_109, %c1_110] : memref<1x3x36x35xf32, #tpu.memory_space<vmem>>, vector<1x1x32x32xf32>
    %511 = vector.shape_cast %510 : vector<1x1x32x32xf32> to vector<32x32xf32>
    %512 = vector.shape_cast %509 : vector<32x32xf32> to vector<1x1x32x32xf32>
    tpu.vector_store %arg6[%c0_107, %c2_108, %c2_109, %c1_110], %512 {strides = array<i32>} : memref<1x3x36x35xf32, #tpu.memory_space<vmem>>, vector<1x1x32x32xf32>,
    return
  }
  func.func @transform_0(%arg0: i32) -> (i32, i32, i32) {
    %c0_i32 = arith.constant 0 : i32
    %c0_i32_0 = arith.constant 0 : i32
    %c0_i32_1 = arith.constant 0 : i32
    return %arg0, %c0_i32, %c0_i32_0 : i32, i32, i32
  }
  func.func @transform_1(%arg0: i32) -> (i32, i32) {
    %c0_i32 = arith.constant 0 : i32
    %c0_i32_0 = arith.constant 0 : i32
    %c0_i32_1 = arith.constant 0 : i32
    return %c0_i32, %c0_i32_0 : i32, i32
  }
  func.func @transform_2(%arg0: i32) -> (i32, i32) {
    %c0_i32 = arith.constant 0 : i32
    %c0_i32_0 = arith.constant 0 : i32
    %c0_i32_1 = arith.constant 0 : i32
    return %c0_i32, %c0_i32_0 : i32, i32
  }
  func.func @transform_3(%arg0: i32) -> i32 {
    %c0_i32 = arith.constant 0 : i32
    %c0_i32_0 = arith.constant 0 : i32
    return %c0_i32 : i32
  }
  func.func @transform_4(%arg0: i32) -> i32 {
    %c0_i32 = arith.constant 0 : i32
    %c0_i32_0 = arith.constant 0 : i32
    return %c0_i32 : i32
  }
  func.func @transform_5(%arg0: i32) -> (i32, i32, i32, i32) {
    %c0_i32 = arith.constant 0 : i32
    %c0_i32_0 = arith.constant 0 : i32
    %c0_i32_1 = arith.constant 0 : i32
    %c0_i32_2 = arith.constant 0 : i32
    return %arg0, %c0_i32, %c0_i32_0, %c0_i32_1 : i32, i32, i32, i32
  }
}

</mosaic_0001>

<llo_original>
// kernel: tpu_custom_call.1
$region0: #{tpu_custom_call.1}
  #allocation0 [shape = 'u32[]', space=smem, size = 0x4, offset = 0x4, fixed_abs, tag = 'smem constant byte address 0x4 - core index']
  #allocation1 [shape = 'u32[144,128]{1,0:T(1,128)}', space=vmem, size = 0x12000, scoped, tag = 'internal scratch']
  #allocation2 [shape = 'f32[136,34]{1,0:T(8,128)}', space=vmem, size = 0x11000, scoped, tag = 'scratch operand']
  %s0 = inlined_call_operand.vmem [shape: f32[2,64,16], index: 0, kind: input, shape index: {}]
  %s1 = inlined_call_operand.vmem [shape: f32[136,64], index: 1, kind: input, shape index: {}]
  %s2 = inlined_call_operand.vmem [shape: f32[16,34], index: 2, kind: input, shape index: {}]
  %s3 = inlined_call_operand.vmem [shape: f32[108], index: 3, kind: input, shape index: {}]
  %s4 = inlined_call_operand.vmem [shape: f32[3], index: 4, kind: input, shape index: {}]
  %s5 = inlined_call_operand.vmem [shape: f32[2,3,36,35], index: 5, kind: output, shape index: {}]
  %s6 = sld [smem:[#allocation0]]
  $region61: #{tpu_custom_call.1} parent=0
    _
  %s8 = ssub.s32 1, %s6
  %s9 = scalar_select 0, %s8, %s6
  $region1: #{tpu_custom_call.1} parent=0
    #allocation3 [shape = 'u8[512]{0}', space=smem, size = 0x200, scoped, tag = 'input window, operand 3, single buffered']
    #allocation4 [shape = 's32[2]{0}', space=sflag, size = 0x8, scoped, tag = 'scoped memory for tpu_custom_call.1']
    #allocation5 [shape = 'u8[512]{0}', space=smem, size = 0x200, scoped, tag = 'input window, operand 4, single buffered']
    #allocation6 [shape = 's32[1]{0}', space=sflag, size = 0x4, scoped, tag = 'scoped memory for tpu_custom_call.1']
    %10 = vsyncpa [#allocation4], 0
    %11 = vsyncpa [#allocation6], 0
    loop: start=0, step=1, limit=4
    $region2: #{tpu_custom_call.1} parent=1 // loop_pre_header
      _
    $region3: #{tpu_custom_call.1} parent=1 // loop_header
      %s13 = sphi 0, %s17
      %p14 = scmp.ge.s32.totalorder %s13, 4
      %s23 = sphi 0, %s25
      %s26 = sphi 0, %s23
      %s27 = sphi 0, %s26
      %s43 = sphi 0, %s27
      %s47 = sphi 0, %s47
      %s49 = sphi 0, %s47
      %s50 = sphi 0, %s49
      %s64 = sphi 0, %s50
      %s68 = sphi 0, %s68
      %s70 = sphi 0, %s68
      %s71 = sphi 0, %s70
      %s85 = sphi 0, %s71
      %s89 = sphi 0, %s89
      %s91 = sphi 0, %s89
      %s92 = sphi 0, %s91
      %s106 = sphi 0, %s92
      %s110 = sphi 0, %s110
      %s112 = sphi 0, %s110
      %s113 = sphi 0, %s112
      %s127 = sphi 0, %s113
      %s133 = sphi 0, %s135
      %s136 = sphi 0, %s133
      %s137 = sphi 0, %s136
      %s153 = sphi 0, %s137
    $region4: #{tpu_custom_call.1} parent=1 // loop_header_branch
      %16 = sbr.rel (%p14) target = $region8
    $region5: #{tpu_custom_call.1} parent=1 // loop_body
      %s18 = ssub.s32 %s13, 1
      %s19 = ssub.s32 %s13, 2
      %s20 = sadd.s32 %s13, 1
      %s21 = ssub.s32 %s13, %s20
      %p22 = scmp.eq.s32.totalorder %s21, 0
      %s24 = sadd.s32 %s23, 1
      %s25 = scalar_select %p22, %s23, %s24
      %p28 = pneg %p22
      %p29 = scmp.eq.s32.totalorder %s13, 1
      %p30 = por %p28, %p29
      %p31 = scmp.ne.s32.totalorder %s23, %s26
      %p32 = scmp.eq.s32.totalorder %s13, 0
      %p33 = por %p31, %p32
      %p34 = scmp.ne.s32.totalorder %s23, %s26
      %p35 = scmp.eq.s32.totalorder %s18, 1
      %p36 = por %p34, %p35
      %p37 = scmp.ne.s32.totalorder %s26, %s27
      %p38 = scmp.eq.s32.totalorder %s18, 0
      %p39 = por %p37, %p38
      %p40 = scmp.ne.s32.totalorder %s26, %s27
      %p41 = scmp.eq.s32.totalorder %s19, 1
      %p42 = por %p40, %p41
      %p44 = scmp.ne.s32.totalorder %s27, %s43
      %p45 = scmp.eq.s32.totalorder %s19, 0
      %p46 = por %p44, %p45
      %s48 = sadd.s32 %s47, 1
      %p51 = scmp.eq.s32.totalorder %s13, 1
      %p52 = scmp.ne.s32.totalorder %s47, %s49
      %p53 = scmp.eq.s32.totalorder %s13, 0
      %p54 = por %p52, %p53
      %p55 = scmp.ne.s32.totalorder %s47, %s49
      %p56 = scmp.eq.s32.totalorder %s18, 1
      %p57 = por %p55, %p56
      %p58 = scmp.ne.s32.totalorder %s49, %s50
      %p59 = scmp.eq.s32.totalorder %s18, 0
      %p60 = por %p58, %p59
      %p61 = scmp.ne.s32.totalorder %s49, %s50
      %p62 = scmp.eq.s32.totalorder %s19, 1
      %p63 = por %p61, %p62
      %p65 = scmp.ne.s32.totalorder %s50, %s64
      %p66 = scmp.eq.s32.totalorder %s19, 0
      %p67 = por %p65, %p66
      %s69 = sadd.s32 %s68, 1
      %p72 = scmp.eq.s32.totalorder %s13, 1
      %p73 = scmp.ne.s32.totalorder %s68, %s70
      %p74 = scmp.eq.s32.totalorder %s13, 0
      %p75 = por %p73, %p74
      %p76 = scmp.ne.s32.totalorder %s68, %s70
      %p77 = scmp.eq.s32.totalorder %s18, 1
      %p78 = por %p76, %p77
      %p79 = scmp.ne.s32.totalorder %s70, %s71
      %p80 = scmp.eq.s32.totalorder %s18, 0
      %p81 = por %p79, %p80
      %p82 = scmp.ne.s32.totalorder %s70, %s71
      %p83 = scmp.eq.s32.totalorder %s19, 1
      %p84 = por %p82, %p83
      %p86 = scmp.ne.s32.totalorder %s71, %s85
      %p87 = scmp.eq.s32.totalorder %s19, 0
      %p88 = por %p86, %p87
      %s90 = sadd.s32 %s89, 1
      %p93 = scmp.eq.s32.totalorder %s13, 1
      %p94 = scmp.ne.s32.totalorder %s89, %s91
      %p95 = scmp.eq.s32.totalorder %s13, 0
      %p96 = por %p94, %p95
      %p97 = scmp.ne.s32.totalorder %s89, %s91
      %p98 = scmp.eq.s32.totalorder %s18, 1
      %p99 = por %p97, %p98
      %p100 = scmp.ne.s32.totalorder %s91, %s92
      %p101 = scmp.eq.s32.totalorder %s18, 0
      %p102 = por %p100, %p101
      %p103 = scmp.ne.s32.totalorder %s91, %s92
      %p104 = scmp.eq.s32.totalorder %s19, 1
      %p105 = por %p103, %p104
      %p107 = scmp.ne.s32.totalorder %s92, %s106
      %p108 = scmp.eq.s32.totalorder %s19, 0
      %p109 = por %p107, %p108
      %s111 = sadd.s32 %s110, 1
      %p114 = scmp.eq.s32.totalorder %s13, 1
      %p115 = scmp.ne.s32.totalorder %s110, %s112
      %p116 = scmp.eq.s32.totalorder %s13, 0
      %p117 = por %p115, %p116
      %p118 = scmp.ne.s32.totalorder %s110, %s112
      %p119 = scmp.eq.s32.totalorder %s18, 1
      %p120 = por %p118, %p119
      %p121 = scmp.ne.s32.totalorder %s112, %s113
      %p122 = scmp.eq.s32.totalorder %s18, 0
      %p123 = por %p121, %p122
      %p124 = scmp.ne.s32.totalorder %s112, %s113
      %p125 = scmp.eq.s32.totalorder %s19, 1
      %p126 = por %p124, %p125
      %p128 = scmp.ne.s32.totalorder %s113, %s127
      %p129 = scmp.eq.s32.totalorder %s19, 0
      %p130 = por %p128, %p129
      %s131 = ssub.s32 %s13, %s20
      %p132 = scmp.eq.s32.totalorder %s131, 0
      %s134 = sadd.s32 %s133, 1
      %s135 = scalar_select %p132, %s133, %s134
      %p138 = pneg %p132
      %p139 = scmp.eq.s32.totalorder %s13, 1
      %p140 = por %p138, %p139
      %p141 = scmp.ne.s32.totalorder %s133, %s136
      %p142 = scmp.eq.s32.totalorder %s13, 0
      %p143 = por %p141, %p142
      %p144 = scmp.ne.s32.totalorder %s133, %s136
      %p145 = scmp.eq.s32.totalorder %s18, 1
      %p146 = por %p144, %p145
      %p147 = scmp.ne.s32.totalorder %s136, %s137
      %p148 = scmp.eq.s32.totalorder %s18, 0
      %p149 = por %p147, %p148
      %p150 = scmp.ne.s32.totalorder %s136, %s137
      %p151 = scmp.eq.s32.totalorder %s19, 1
      %p152 = por %p150, %p151
      %p154 = scmp.ne.s32.totalorder %s137, %s153
      %p155 = scmp.eq.s32.totalorder %s19, 0
      %p156 = por %p154, %p155
      %p157 = scmp.le.s32.totalorder 1, %s13
      %p158 = scmp.lt.s32.totalorder %s13, 3
      %p159 = pnand %p157, %p158
      %p160 = pneg %p159
      // Predicated region
      $region9: #{tpu_custom_call.1} parent=5 // pred_check
        _
      $region10: #{tpu_custom_call.1} parent=5 // pred_check_branch
        %162 = sbr.rel (%p159) target = $region12
      $region11: #{tpu_custom_call.1} parent=5 // pred_region
        %s163 = ssub.s32 %s13, 1
        // Predicated region
        $region13: #{tpu_custom_call.1} parent=11 // pred_check
          %p164 = pneg %p60
        $region14: #{tpu_custom_call.1} parent=11 // pred_check_branch
          %166 = sbr.rel (%p164) target = $region16
        $region15: #{tpu_custom_call.1} parent=11 // pred_region
          _
        $region16: #{tpu_custom_call.1} parent=11 // pred_fallthru
          _
        // Predicated region
        $region17: #{tpu_custom_call.1} parent=11 // pred_check
          %p167 = pneg %p81
        $region18: #{tpu_custom_call.1} parent=11 // pred_check_branch
          %169 = sbr.rel (%p167) target = $region20
        $region19: #{tpu_custom_call.1} parent=11 // pred_region
          _
        $region20: #{tpu_custom_call.1} parent=11 // pred_fallthru
          _
        // Predicated region
        $region21: #{tpu_custom_call.1} parent=11 // pred_check
          %p170 = pneg %p102
        $region22: #{tpu_custom_call.1} parent=11 // pred_check_branch
          %172 = sbr.rel (%p170) target = $region24
        $region23: #{tpu_custom_call.1} parent=11 // pred_region
          %s174 = ssub.s32 16, 16
          %175 = vsyncadd [#allocation4], %s174
          %s177 = sshll.u32 %s3, 4
          %s178 = int_to_ptr.vmem [resolvable:$true] %s177
          %180 = dma.vmem_to_smem %s178, 16, [#allocation3], [#allocation4]
        $region24: #{tpu_custom_call.1} parent=11 // pred_fallthru
          _
        // Predicated region
        $region25: #{tpu_custom_call.1} parent=11 // pred_check
          %p181 = pneg %p123
        $region26: #{tpu_custom_call.1} parent=11 // pred_check_branch
          %183 = sbr.rel (%p181) target = $region28
        $region27: #{tpu_custom_call.1} parent=11 // pred_region
          %s185 = ssub.s32 16, 16
          %186 = vsyncadd [#allocation6], %s185
          %s188 = sshll.u32 %s4, 4
          %s189 = int_to_ptr.vmem [resolvable:$true] %s188
          %191 = dma.vmem_to_smem %s189, 16, [#allocation5], [#allocation6]
        $region28: #{tpu_custom_call.1} parent=11 // pred_fallthru
          _
      $region12: #{tpu_custom_call.1} parent=5 // pred_fallthru
        _
      %p192 = scmp.lt.s32.totalorder %s13, 2
      // Predicated region
      $region29: #{tpu_custom_call.1} parent=5 // pred_check
        %p193 = pneg %p192
      $region30: #{tpu_custom_call.1} parent=5 // pred_check_branch
        %195 = sbr.rel (%p193) target = $region32
      $region31: #{tpu_custom_call.1} parent=5 // pred_region
        // Predicated region
        $region33: #{tpu_custom_call.1} parent=31 // pred_check
          %p196 = pneg %p33
        $region34: #{tpu_custom_call.1} parent=31 // pred_check_branch
          %198 = sbr.rel (%p196) target = $region36
        $region35: #{tpu_custom_call.1} parent=31 // pred_region
          %p199 = scmp.lt.s32.totalorder %s13, 1
          %s200 = scalar_select %p199, %s13, 1
          %s201 = smul.addr %s200, 8
          %s202 = smul.addr %s201, 8
          %s203 = scalar_lea.vmem %s0, %s202
        $region36: #{tpu_custom_call.1} parent=31 // pred_fallthru
          _
      $region32: #{tpu_custom_call.1} parent=5 // pred_fallthru
        _
      %p204 = scmp.le.s32.totalorder 1, %s13
      %p205 = scmp.lt.s32.totalorder %s13, 3
      %p206 = pnand %p204, %p205
      %p207 = pneg %p206
      // Predicated region
      $region37: #{tpu_custom_call.1} parent=5 // pred_check
        _
      $region38: #{tpu_custom_call.1} parent=5 // pred_check_branch
        %209 = sbr.rel (%p206) target = $region40
      $region39: #{tpu_custom_call.1} parent=5 // pred_region
        %s210 = ssub.s32 %s13, 1
        // Predicated region
        $region41: #{tpu_custom_call.1} parent=39 // pred_check
          %p211 = pneg %p102
        $region42: #{tpu_custom_call.1} parent=39 // pred_check_branch
          %213 = sbr.rel (%p211) target = $region44
        $region43: #{tpu_custom_call.1} parent=39 // pred_region
          %214 = dma.done [#allocation4], 16
        $region44: #{tpu_custom_call.1} parent=39 // pred_fallthru
          _
        // Predicated region
        $region45: #{tpu_custom_call.1} parent=39 // pred_check
          %p215 = pneg %p123
        $region46: #{tpu_custom_call.1} parent=39 // pred_check_branch
          %217 = sbr.rel (%p215) target = $region48
        $region47: #{tpu_custom_call.1} parent=39 // pred_region
          %218 = dma.done [#allocation6], 16
        $region48: #{tpu_custom_call.1} parent=39 // pred_fallthru
          _
        %219 = sfence
        %p220 = scmp.lt.s32.totalorder %s18, 1
        %s221 = scalar_select %p220, %s18, 1
        %s222 = smul.addr %s221, 8
        %s223 = smul.addr %s222, 8
        %s224 = scalar_lea.vmem %s0, %s223
        %p225 = pneg %p39
        %p226 = pneg %p36
        %p227 = pneg %p60
        %p228 = pneg %p57
        %p229 = pneg %p81
        %p230 = pneg %p78
        %p231 = pneg %p102
        %p232 = pneg %p99
        %p233 = pneg %p123
        %p234 = pneg %p120
        %p235 = pneg %p149
        %p236 = pneg %p146
        %p237 = scmp.lt.s32.totalorder %s18, 1
        %s238 = scalar_select %p237, %s18, 1
        %s239 = smul.addr %s238, 15
        %s240 = smul.addr %s239, 8
        %s241 = scalar_lea.vmem %s5, %s240
        %p242 = scmp.lt.s32.totalorder %s18, 1
        %s243 = scalar_select %p242, %s18, 1
        %s244 = smul.addr %s243, 8
        %s245 = smul.addr %s244, 8
        %s246 = scalar_lea.vmem %s0, %s245
        %p247 = scmp.lt.s32.totalorder %s18, 1
        %s248 = scalar_select %p247, %s18, 1
        %s249 = smul.addr %s248, 15
        %s250 = smul.addr %s249, 8
        %s251 = scalar_lea.vmem %s5, %s250
        %vm252 = vcmask 285696
        %253 = vst.msk [vmem:[%s251] sm:$0xff] %vm252, 0.0
        %254 = vst.msk [vmem:[%s251 + $0x8] sm:$0xff] %vm252, 0.0
        %255 = vst.msk [vmem:[%s251 + $0x10] sm:$0xff] %vm252, 0.0
        %256 = vst.msk [vmem:[%s251 + $0x18] sm:$0xff] %vm252, 0.0
        %vm257 = vcmask 281600
        %258 = vst.msk [vmem:[%s251 + $0x20] sm:$0xf] %vm257, 0.0
        %259 = vst.msk [vmem:[%s251 + $0x28] sm:$0xff] %vm252, 0.0
        %260 = vst.msk [vmem:[%s251 + $0x30] sm:$0xff] %vm252, 0.0
        %261 = vst.msk [vmem:[%s251 + $0x38] sm:$0xff] %vm252, 0.0
        %262 = vst.msk [vmem:[%s251 + $0x40] sm:$0xff] %vm252, 0.0
        %263 = vst.msk [vmem:[%s251 + $0x48] sm:$0xf] %vm257, 0.0
        %264 = vst.msk [vmem:[%s251 + $0x50] sm:$0xff] %vm252, 0.0
        %265 = vst.msk [vmem:[%s251 + $0x58] sm:$0xff] %vm252, 0.0
        %266 = vst.msk [vmem:[%s251 + $0x60] sm:$0xff] %vm252, 0.0
        %267 = vst.msk [vmem:[%s251 + $0x68] sm:$0xff] %vm252, 0.0
        %268 = vst.msk [vmem:[%s251 + $0x70] sm:$0xf] %vm257, 0.0
        %v269 = vld [vmem:[%s246] sm:$0xff]
        %v270 = vld [vmem:[%s246 + $0x8] sm:$0xff]
        %v271 = vld [vmem:[%s246 + $0x10] sm:$0xff]
        %v272 = vld [vmem:[%s246 + $0x18] sm:$0xff]
        %v273 = vld [vmem:[%s246 + $0x20] sm:$0xff]
        %v274 = vld [vmem:[%s246 + $0x28] sm:$0xff]
        %v275 = vld [vmem:[%s246 + $0x30] sm:$0xff]
        %v276 = vld [vmem:[%s246 + $0x38] sm:$0xff]
        %v277 = vld [vmem:[%s2] sm:$0xff]
        %v278 = vld [vmem:[%s2 + $0x8] sm:$0xff]
        %vm279 = vcmask 130048
        %v281 = vsel %vm279, %v269, 0
        %v284 = vsel %vm279, %v270, 0
        %v287 = vsel %vm279, %v271, 0
        %v290 = vsel %vm279, %v272, 0
        %v293 = vsel %vm279, %v273, 0
        %v296 = vsel %vm279, %v274, 0
        %v299 = vsel %vm279, %v275, 0
        %v302 = vsel %vm279, %v276, 0
        %304 = vmatprep.subr.mxu0 0.0
        %305 = vmatpush1.msra.mxu0 %v277
        %306 = vmatprep.subr.mxu0 0.0
        %307 = vmatpush1.msra.mxu0 %v278
        %308 = vmatprep.subr.mxu0 0.0
        %309 = vmatpush1.msra.mxu0 0.0
        %310 = vmatprep.subr.mxu0 0.0
        %311 = vmatpush1.msra.mxu0 0.0
        %312 = vmatprep.subr.mxu0 0.0
        %313 = vmatpush1.msra.mxu0 0.0
        %314 = vmatprep.subr.mxu0 0.0
        %315 = vmatpush1.msra.mxu0 0.0
        %316 = vmatprep.subr.mxu0 0.0
        %317 = vmatpush1.msra.mxu0 0.0
        %318 = vmatprep.subr.mxu0 0.0
        %319 = vmatpush1.msra.mxu0 0.0
        %320 = vmatprep.subr.mxu0 0.0
        %321 = vmatpush1.msra.mxu0 0.0
        %322 = vmatprep.subr.mxu0 0.0
        %323 = vmatpush1.msra.mxu0 0.0
        %324 = vmatprep.subr.mxu0 0.0
        %325 = vmatpush1.msra.mxu0 0.0
        %326 = vmatprep.subr.mxu0 0.0
        %327 = vmatpush1.msra.mxu0 0.0
        %328 = vmatprep.subr.mxu0 0.0
        %329 = vmatpush1.msra.mxu0 0.0
        %330 = vmatprep.subr.mxu0 0.0
        %331 = vmatpush1.msra.mxu0 0.0
        %332 = vmatprep.subr.mxu0 0.0
        %333 = vmatpush1.msra.mxu0 0.0
        %334 = vmatprep.subr.mxu0 0.0
        %335 = vmatpush1.msra.mxu0 0.0
        %336 = vmatprep.subr.mxu0 0.0
        %337 = vmatpush1.msra.mxu0 0.0
        %338 = vmatprep.subr.mxu0 0.0
        %339 = vmatpush1.msra.mxu0 0.0
        %340 = vmatprep.subr.mxu0 0.0
        %341 = vmatpush1.msra.mxu0 0.0
        %342 = vmatprep.subr.mxu0 0.0
        %343 = vmatpush1.msra.mxu0 0.0
        %344 = vmatprep.subr.mxu0 0.0
        %345 = vmatpush1.msra.mxu0 0.0
        %346 = vmatprep.subr.mxu0 0.0
        %347 = vmatpush1.msra.mxu0 0.0
        %348 = vmatprep.subr.mxu0 0.0
        %349 = vmatpush1.msra.mxu0 0.0
        %350 = vmatprep.subr.mxu0 0.0
        %351 = vmatpush1.msra.mxu0 0.0
        %352 = vmatprep.subr.mxu0 0.0
        %353 = vmatpush1.msra.mxu0 0.0
        %354 = vmatprep.subr.mxu0 0.0
        %355 = vmatpush1.msra.mxu0 0.0
        %356 = vmatprep.subr.mxu0 0.0
        %357 = vmatpush1.msra.mxu0 0.0
        %358 = vmatprep.subr.mxu0 0.0
        %359 = vmatpush1.msra.mxu0 0.0
        %360 = vmatprep.subr.mxu0 0.0
        %361 = vmatpush1.msra.mxu0 0.0
        %362 = vmatprep.subr.mxu0 0.0
        %363 = vmatpush1.msra.mxu0 0.0
        %364 = vmatprep.subr.mxu0 0.0
        %365 = vmatpush1.msra.mxu0 0.0
        %366 = vmatprep.subr.mxu0 0.0
        %367 = vmatpush1.msra.mxu0 0.0
        %368 = vmatprep.mubr.f32.mxu0 0.0
        %369 = vmatmul.mubr.f32.gmra.mrb[0].mxu0 %v281
        %v370 = vpop.f32.mrb[0].mxu0
        %v371 = vadd.f32 0.0, %v370
        %v372 = vpop.f32.mrb[0].mxu0
        %373 = vmatprep.mubr.f32.mxu0 0.0
        %374 = vmatmul.mubr.f32.gmra.mrb[0].mxu0 %v284
        %v375 = vpop.f32.mrb[0].mxu0
        %v376 = vadd.f32 0.0, %v375
        %v377 = vpop.f32.mrb[0].mxu0
        %378 = vmatprep.mubr.f32.mxu0 0.0
        %379 = vmatmul.mubr.f32.gmra.mrb[0].mxu0 %v287
        %v380 = vpop.f32.mrb[0].mxu0
        %v381 = vadd.f32 0.0, %v380
        %v382 = vpop.f32.mrb[0].mxu0
        %383 = vmatprep.mubr.f32.mxu0 0.0
        %384 = vmatmul.mubr.f32.gmra.mrb[0].mxu0 %v290
        %v385 = vpop.f32.mrb[0].mxu0
        %v386 = vadd.f32 0.0, %v385
        %v387 = vpop.f32.mrb[0].mxu0
        %388 = vmatprep.mubr.f32.mxu0 0.0
        %389 = vmatmul.mubr.f32.gmra.mrb[0].mxu0 %v293
        %v390 = vpop.f32.mrb[0].mxu0
        %v391 = vadd.f32 0.0, %v390
        %v392 = vpop.f32.mrb[0].mxu0
        %393 = vmatprep.mubr.f32.mxu0 0.0
        %394 = vmatmul.mubr.f32.gmra.mrb[0].mxu0 %v296
        %v395 = vpop.f32.mrb[0].mxu0
        %v396 = vadd.f32 0.0, %v395
        %v397 = vpop.f32.mrb[0].mxu0
        %398 = vmatprep.mubr.f32.mxu0 0.0
        %399 = vmatmul.mubr.f32.gmra.mrb[0].mxu0 %v299
        %v400 = vpop.f32.mrb[0].mxu0
        %v401 = vadd.f32 0.0, %v400
        %v402 = vpop.f32.mrb[0].mxu0
        %403 = vmatprep.mubr.f32.mxu0 0.0
        %404 = vmatmul.mubr.f32.gmra.mrb[0].mxu0 %v302
        %v405 = vpop.f32.mrb[0].mxu0
        %v406 = vadd.f32 0.0, %v405
        %v407 = vpop.f32.mrb[0].mxu0
        %408 = vdwg.mxu0
        %v409 = vld [vmem:[%s1] sm:$0xff]
        %v410 = vld [vmem:[%s1 + $0x8] sm:$0xff]
        %v411 = vld [vmem:[%s1 + $0x10] sm:$0xff]
        %v412 = vld [vmem:[%s1 + $0x18] sm:$0xff]
        %v413 = vld [vmem:[%s1 + $0x20] sm:$0xff]
        %v414 = vld [vmem:[%s1 + $0x28] sm:$0xff]
        %v415 = vld [vmem:[%s1 + $0x30] sm:$0xff]
        %v416 = vld [vmem:[%s1 + $0x38] sm:$0xff]
        %v417 = vld [vmem:[%s1 + $0x40] sm:$0xff]
        %v418 = vld [vmem:[%s1 + $0x48] sm:$0xff]
        %v419 = vld [vmem:[%s1 + $0x50] sm:$0xff]
        %v420 = vld [vmem:[%s1 + $0x58] sm:$0xff]
        %v421 = vld [vmem:[%s1 + $0x60] sm:$0xff]
        %v422 = vld [vmem:[%s1 + $0x68] sm:$0xff]
        %v423 = vld [vmem:[%s1 + $0x70] sm:$0xff]
        %v424 = vld [vmem:[%s1 + $0x78] sm:$0xff]
        %v425 = vld [vmem:[%s1 + $0x80] sm:$0xff]
        %vm426 = vcmask 523264
        %v428 = vsel %vm426, %v409, 0
        %v431 = vsel %vm426, %v410, 0
        %v434 = vsel %vm426, %v411, 0
        %v437 = vsel %vm426, %v412, 0
        %v440 = vsel %vm426, %v413, 0
        %v443 = vsel %vm426, %v414, 0
        %v446 = vsel %vm426, %v415, 0
        %v449 = vsel %vm426, %v416, 0
        %v452 = vsel %vm426, %v417, 0
        %v455 = vsel %vm426, %v418, 0
        %v458 = vsel %vm426, %v419, 0
        %v461 = vsel %vm426, %v420, 0
        %v464 = vsel %vm426, %v421, 0
        %v467 = vsel %vm426, %v422, 0
        %v470 = vsel %vm426, %v423, 0
        %v473 = vsel %vm426, %v424, 0
        %v476 = vsel %vm426, %v425, 0
        %478 = vmatprep.subr.mxu0 0.0
        %479 = vmatpush1.msra.mxu0 %v371
        %480 = vmatprep.subr.mxu0 0.0
        %481 = vmatpush1.msra.mxu0 %v376
        %482 = vmatprep.subr.mxu0 0.0
        %483 = vmatpush1.msra.mxu0 %v381
        %484 = vmatprep.subr.mxu0 0.0
        %485 = vmatpush1.msra.mxu0 %v386
        %486 = vmatprep.subr.mxu0 0.0
        %487 = vmatpush1.msra.mxu0 %v391
        %488 = vmatprep.subr.mxu0 0.0
        %489 = vmatpush1.msra.mxu0 %v396
        %490 = vmatprep.subr.mxu0 0.0
        %491 = vmatpush1.msra.mxu0 %v401
        %492 = vmatprep.subr.mxu0 0.0
        %493 = vmatpush1.msra.mxu0 %v406
        %494 = vmatprep.subr.mxu0 0.0
        %495 = vmatpush1.msra.mxu0 0.0
        %496 = vmatprep.subr.mxu0 0.0
        %497 = vmatpush1.msra.mxu0 0.0
        %498 = vmatprep.subr.mxu0 0.0
        %499 = vmatpush1.msra.mxu0 0.0
        %500 = vmatprep.subr.mxu0 0.0
        %501 = vmatpush1.msra.mxu0 0.0
        %502 = vmatprep.subr.mxu0 0.0
        %503 = vmatpush1.msra.mxu0 0.0
        %504 = vmatprep.subr.mxu0 0.0
        %505 = vmatpush1.msra.mxu0 0.0
        %506 = vmatprep.subr.mxu0 0.0
        %507 = vmatpush1.msra.mxu0 0.0
        %508 = vmatprep.subr.mxu0 0.0
        %509 = vmatpush1.msra.mxu0 0.0
        %510 = vmatprep.subr.mxu0 0.0
        %511 = vmatpush1.msra.mxu0 0.0
        %512 = vmatprep.subr.mxu0 0.0
        %513 = vmatpush1.msra.mxu0 0.0
        %514 = vmatprep.subr.mxu0 0.0
        %515 = vmatpush1.msra.mxu0 0.0
        %516 = vmatprep.subr.mxu0 0.0
        %517 = vmatpush1.msra.mxu0 0.0
        %518 = vmatprep.subr.mxu0 0.0
        %519 = vmatpush1.msra.mxu0 0.0
        %520 = vmatprep.subr.mxu0 0.0
        %521 = vmatpush1.msra.mxu0 0.0
        %522 = vmatprep.subr.mxu0 0.0
        %523 = vmatpush1.msra.mxu0 0.0
        %524 = vmatprep.subr.mxu0 0.0
        %525 = vmatpush1.msra.mxu0 0.0
        %526 = vmatprep.subr.mxu0 0.0
        %527 = vmatpush1.msra.mxu0 0.0
        %528 = vmatprep.subr.mxu0 0.0
        %529 = vmatpush1.msra.mxu0 0.0
        %530 = vmatprep.subr.mxu0 0.0
        %531 = vmatpush1.msra.mxu0 0.0
        %532 = vmatprep.subr.mxu0 0.0
        %533 = vmatpush1.msra.mxu0 0.0
        %534 = vmatprep.subr.mxu0 0.0
        %535 = vmatpush1.msra.mxu0 0.0
        %536 = vmatprep.subr.mxu0 0.0
        %537 = vmatpush1.msra.mxu0 0.0
        %538 = vmatprep.subr.mxu0 0.0
        %539 = vmatpush1.msra.mxu0 0.0
        %540 = vmatprep.subr.mxu0 0.0
        %541 = vmatpush1.msra.mxu0 0.0
        %542 = vmatprep.mubr.f32.mxu0 0.0
        %543 = vmatmul.mubr.f32.gmra.mrb[0].mxu0 %v428
        %v544 = vpop.f32.mrb[0].mxu0
        %v545 = vadd.f32 0.0, %v544
        %v546 = vpop.f32.mrb[0].mxu0
        %547 = vmatprep.mubr.f32.mxu0 0.0
        %548 = vmatmul.mubr.f32.gmra.mrb[0].mxu0 %v431
        %v549 = vpop.f32.mrb[0].mxu0
        %v550 = vadd.f32 0.0, %v549
        %v551 = vpop.f32.mrb[0].mxu0
        %552 = vmatprep.mubr.f32.mxu0 0.0
        %553 = vmatmul.mubr.f32.gmra.mrb[0].mxu0 %v434
        %v554 = vpop.f32.mrb[0].mxu0
        %v555 = vadd.f32 0.0, %v554
        %v556 = vpop.f32.mrb[0].mxu0
        %557 = vmatprep.mubr.f32.mxu0 0.0
        %558 = vmatmul.mubr.f32.gmra.mrb[0].mxu0 %v437
        %v559 = vpop.f32.mrb[0].mxu0
        %v560 = vadd.f32 0.0, %v559
        %v561 = vpop.f32.mrb[0].mxu0
        %562 = vmatprep.mubr.f32.mxu0 0.0
        %563 = vmatmul.mubr.f32.gmra.mrb[0].mxu0 %v440
        %v564 = vpop.f32.mrb[0].mxu0
        %v565 = vadd.f32 0.0, %v564
        %v566 = vpop.f32.mrb[0].mxu0
        %567 = vmatprep.mubr.f32.mxu0 0.0
        %568 = vmatmul.mubr.f32.gmra.mrb[0].mxu0 %v443
        %v569 = vpop.f32.mrb[0].mxu0
        %v570 = vadd.f32 0.0, %v569
        %v571 = vpop.f32.mrb[0].mxu0
        %572 = vmatprep.mubr.f32.mxu0 0.0
        %573 = vmatmul.mubr.f32.gmra.mrb[0].mxu0 %v446
        %v574 = vpop.f32.mrb[0].mxu0
        %v575 = vadd.f32 0.0, %v574
        %v576 = vpop.f32.mrb[0].mxu0
        %577 = vmatprep.mubr.f32.mxu0 0.0
        %578 = vmatmul.mubr.f32.gmra.mrb[0].mxu0 %v449
        %v579 = vpop.f32.mrb[0].mxu0
        %v580 = vadd.f32 0.0, %v579
        %v581 = vpop.f32.mrb[0].mxu0
        %582 = vmatprep.mubr.f32.mxu0 0.0
        %583 = vmatmul.mubr.f32.gmra.mrb[0].mxu0 %v452
        %v584 = vpop.f32.mrb[0].mxu0
        %v585 = vadd.f32 0.0, %v584
        %v586 = vpop.f32.mrb[0].mxu0
        %587 = vmatprep.mubr.f32.mxu0 0.0
        %588 = vmatmul.mubr.f32.gmra.mrb[0].mxu0 %v455
        %v589 = vpop.f32.mrb[0].mxu0
        %v590 = vadd.f32 0.0, %v589
        %v591 = vpop.f32.mrb[0].mxu0
        %592 = vmatprep.mubr.f32.mxu0 0.0
        %593 = vmatmul.mubr.f32.gmra.mrb[0].mxu0 %v458
        %v594 = vpop.f32.mrb[0].mxu0
        %v595 = vadd.f32 0.0, %v594
        %v596 = vpop.f32.mrb[0].mxu0
        %597 = vmatprep.mubr.f32.mxu0 0.0
        %598 = vmatmul.mubr.f32.gmra.mrb[0].mxu0 %v461
        %v599 = vpop.f32.mrb[0].mxu0
        %v600 = vadd.f32 0.0, %v599
        %v601 = vpop.f32.mrb[0].mxu0
        %602 = vmatprep.mubr.f32.mxu0 0.0
        %603 = vmatmul.mubr.f32.gmra.mrb[0].mxu0 %v464
        %v604 = vpop.f32.mrb[0].mxu0
        %v605 = vadd.f32 0.0, %v604
        %v606 = vpop.f32.mrb[0].mxu0
        %607 = vmatprep.mubr.f32.mxu0 0.0
        %608 = vmatmul.mubr.f32.gmra.mrb[0].mxu0 %v467
        %v609 = vpop.f32.mrb[0].mxu0
        %v610 = vadd.f32 0.0, %v609
        %v611 = vpop.f32.mrb[0].mxu0
        %612 = vmatprep.mubr.f32.mxu0 0.0
        %613 = vmatmul.mubr.f32.gmra.mrb[0].mxu0 %v470
        %v614 = vpop.f32.mrb[0].mxu0
        %v615 = vadd.f32 0.0, %v614
        %v616 = vpop.f32.mrb[0].mxu0
        %617 = vmatprep.mubr.f32.mxu0 0.0
        %618 = vmatmul.mubr.f32.gmra.mrb[0].mxu0 %v473
        %v619 = vpop.f32.mrb[0].mxu0
        %v620 = vadd.f32 0.0, %v619
        %v621 = vpop.f32.mrb[0].mxu0
        %622 = vmatprep.mubr.f32.mxu0 0.0
        %623 = vmatmul.mubr.f32.gmra.mrb[0].mxu0 %v476
        %v624 = vpop.f32.mrb[0].mxu0
        %v625 = vadd.f32 0.0, %v624
        %v626 = vpop.f32.mrb[0].mxu0
        %627 = vdwg.mxu0
        %vm628 = vcmask 277504
        %629 = vst.msk [vmem:[#allocation2] sm:$0xff] %vm628, %v545
        %630 = vst.msk [vmem:[#allocation2 + $0x8] sm:$0xff] %vm628, %v550
        %631 = vst.msk [vmem:[#allocation2 + $0x10] sm:$0xff] %vm628, %v555
        %632 = vst.msk [vmem:[#allocation2 + $0x18] sm:$0xff] %vm628, %v560
        %633 = vst.msk [vmem:[#allocation2 + $0x20] sm:$0xff] %vm628, %v565
        %634 = vst.msk [vmem:[#allocation2 + $0x28] sm:$0xff] %vm628, %v570
        %635 = vst.msk [vmem:[#allocation2 + $0x30] sm:$0xff] %vm628, %v575
        %636 = vst.msk [vmem:[#allocation2 + $0x38] sm:$0xff] %vm628, %v580
        %637 = vst.msk [vmem:[#allocation2 + $0x40] sm:$0xff] %vm628, %v585
        %638 = vst.msk [vmem:[#allocation2 + $0x48] sm:$0xff] %vm628, %v590
        %639 = vst.msk [vmem:[#allocation2 + $0x50] sm:$0xff] %vm628, %v595
        %640 = vst.msk [vmem:[#allocation2 + $0x58] sm:$0xff] %vm628, %v600
        %641 = vst.msk [vmem:[#allocation2 + $0x60] sm:$0xff] %vm628, %v605
        %642 = vst.msk [vmem:[#allocation2 + $0x68] sm:$0xff] %vm628, %v610
        %643 = vst.msk [vmem:[#allocation2 + $0x70] sm:$0xff] %vm628, %v615
        %644 = vst.msk [vmem:[#allocation2 + $0x78] sm:$0xff] %vm628, %v620
        %645 = vst.msk [vmem:[#allocation2 + $0x80] sm:$0xff] %vm628, %v625
        %v646 = vld [vmem:[#allocation2] sm:$0xff]
        %v647 = vld [vmem:[#allocation2 + $0x8] sm:$0xff]
        %v648 = vld [vmem:[#allocation2 + $0x10] sm:$0xff]
        %v649 = vld [vmem:[#allocation2 + $0x18] sm:$0xff]
        %s650 = sld [smem:[#allocation3]]
        %v651 = vstv %s650
        %v652 = vmul.f32 %v646, %v651
        %v653 = vmul.f32 %v647, %v651
        %v654 = vmul.f32 %v648, %v651
        %v655 = vmul.f32 %v649, %v651
        %v656 = vadd.f32 %v652, 0.0
        %v657 = vadd.f32 %v653, 0.0
        %v658 = vadd.f32 %v654, 0.0
        %v659 = vadd.f32 %v655, 0.0
        %s660 = sld [smem:[#allocation3 + $0x24]]
        %v661 = vstv %s660
        %v662 = vmul.f32 %v646, %v661
        %v663 = vmul.f32 %v647, %v661
        %v664 = vmul.f32 %v648, %v661
        %v665 = vmul.f32 %v649, %v661
        %v666 = vadd.f32 %v662, 0.0
        %v667 = vadd.f32 %v663, 0.0
        %v668 = vadd.f32 %v664, 0.0
        %v669 = vadd.f32 %v665, 0.0
        %s670 = sld [smem:[#allocation3 + $0x48]]
        %v671 = vstv %s670
        %v672 = vmul.f32 %v646, %v671
        %v673 = vmul.f32 %v647, %v671
        %v674 = vmul.f32 %v648, %v671
        %v675 = vmul.f32 %v649, %v671
        %v676 = vadd.f32 %v672, 0.0
        %v677 = vadd.f32 %v673, 0.0
        %v678 = vadd.f32 %v674, 0.0
        %v679 = vadd.f32 %v675, 0.0
        %s680 = sld [smem:[#allocation3 + $0x1]]
        %v681 = vstv %s680
        %v682 = vmul.f32 %v646, %v681
        %v683 = vmul.f32 %v647, %v681
        %v684 = vmul.f32 %v648, %v681
        %v685 = vmul.f32 %v649, %v681
        %690 = vrot.lane.b32.xlu0 %v682, 127
        %v691 = vpop.permute.xlu0 %690
        %692 = vrot.lane.b32.xlu0 %v683, 127
        %v693 = vpop.permute.xlu0 %692
        %694 = vrot.lane.b32.xlu0 %v684, 127
        %v695 = vpop.permute.xlu0 %694
        %696 = vrot.lane.b32.xlu0 %v685, 127
        %v697 = vpop.permute.xlu0 %696
        %v702 = vadd.f32 %v656, %v691
        %v703 = vadd.f32 %v657, %v693
        %v704 = vadd.f32 %v658, %v695
        %v705 = vadd.f32 %v659, %v697
        %s706 = sld [smem:[#allocation3 + $0x25]]
        %v707 = vstv %s706
        %v708 = vmul.f32 %v646, %v707
        %v709 = vmul.f32 %v647, %v707
        %v710 = vmul.f32 %v648, %v707
        %v711 = vmul.f32 %v649, %v707
        %716 = vrot.lane.b32.xlu0 %v708, 127
        %v717 = vpop.permute.xlu0 %716
        %718 = vrot.lane.b32.xlu0 %v709, 127
        %v719 = vpop.permute.xlu0 %718
        %720 = vrot.lane.b32.xlu0 %v710, 127
        %v721 = vpop.permute.xlu0 %720
        %722 = vrot.lane.b32.xlu0 %v711, 127
        %v723 = vpop.permute.xlu0 %722
        %v728 = vadd.f32 %v666, %v717
        %v729 = vadd.f32 %v667, %v719
        %v730 = vadd.f32 %v668, %v721
        %v731 = vadd.f32 %v669, %v723
        %s732 = sld [smem:[#allocation3 + $0x49]]
        %v733 = vstv %s732
        %v734 = vmul.f32 %v646, %v733
        %v735 = vmul.f32 %v647, %v733
        %v736 = vmul.f32 %v648, %v733
        %v737 = vmul.f32 %v649, %v733
        %742 = vrot.lane.b32.xlu0 %v734, 127
        %v743 = vpop.permute.xlu0 %742
        %744 = vrot.lane.b32.xlu0 %v735, 127
        %v745 = vpop.permute.xlu0 %744
        %746 = vrot.lane.b32.xlu0 %v736, 127
        %v747 = vpop.permute.xlu0 %746
        %748 = vrot.lane.b32.xlu0 %v737, 127
        %v749 = vpop.permute.xlu0 %748
        %v754 = vadd.f32 %v676, %v743
        %v755 = vadd.f32 %v677, %v745
        %v756 = vadd.f32 %v678, %v747
        %v757 = vadd.f32 %v679, %v749
        %s758 = sld [smem:[#allocation3 + $0x2]]
        %v759 = vstv %s758
        %v760 = vmul.f32 %v646, %v759
        %v761 = vmul.f32 %v647, %v759
        %v762 = vmul.f32 %v648, %v759
        %v763 = vmul.f32 %v649, %v759
        %768 = vrot.lane.b32.xlu0 %v760, 126
        %v769 = vpop.permute.xlu0 %768
        %770 = vrot.lane.b32.xlu0 %v761, 126
        %v771 = vpop.permute.xlu0 %770
        %772 = vrot.lane.b32.xlu0 %v762, 126
        %v773 = vpop.permute.xlu0 %772
        %774 = vrot.lane.b32.xlu0 %v763, 126
        %v775 = vpop.permute.xlu0 %774
        %v780 = vadd.f32 %v702, %v769
        %v781 = vadd.f32 %v703, %v771
        %v782 = vadd.f32 %v704, %v773
        %v783 = vadd.f32 %v705, %v775
        %s784 = sld [smem:[#allocation3 + $0x26]]
        %v785 = vstv %s784
        %v786 = vmul.f32 %v646, %v785
        %v787 = vmul.f32 %v647, %v785
        %v788 = vmul.f32 %v648, %v785
        %v789 = vmul.f32 %v649, %v785
        %794 = vrot.lane.b32.xlu0 %v786, 126
        %v795 = vpop.permute.xlu0 %794
        %796 = vrot.lane.b32.xlu0 %v787, 126
        %v797 = vpop.permute.xlu0 %796
        %798 = vrot.lane.b32.xlu0 %v788, 126
        %v799 = vpop.permute.xlu0 %798
        %800 = vrot.lane.b32.xlu0 %v789, 126
        %v801 = vpop.permute.xlu0 %800
        %v806 = vadd.f32 %v728, %v795
        %v807 = vadd.f32 %v729, %v797
        %v808 = vadd.f32 %v730, %v799
        %v809 = vadd.f32 %v731, %v801
        %s810 = sld [smem:[#allocation3 + $0x4a]]
        %v811 = vstv %s810
        %v812 = vmul.f32 %v646, %v811
        %v813 = vmul.f32 %v647, %v811
        %v814 = vmul.f32 %v648, %v811
        %v815 = vmul.f32 %v649, %v811
        %820 = vrot.lane.b32.xlu0 %v812, 126
        %v821 = vpop.permute.xlu0 %820
        %822 = vrot.lane.b32.xlu0 %v813, 126
        %v823 = vpop.permute.xlu0 %822
        %824 = vrot.lane.b32.xlu0 %v814, 126
        %v825 = vpop.permute.xlu0 %824
        %826 = vrot.lane.b32.xlu0 %v815, 126
        %v827 = vpop.permute.xlu0 %826
        %v832 = vadd.f32 %v754, %v821
        %v833 = vadd.f32 %v755, %v823
        %v834 = vadd.f32 %v756, %v825
        %v835 = vadd.f32 %v757, %v827
        %v836 = vld [vmem:[#allocation2 + $0x1] sm:$0xff]
        %v837 = vld [vmem:[#allocation2 + $0x9] sm:$0xff]
        %v838 = vld [vmem:[#allocation2 + $0x11] sm:$0xff]
        %v839 = vld [vmem:[#allocation2 + $0x19] sm:$0xff]
        %s840 = sld [smem:[#allocation3 + $0x3]]
        %v841 = vstv %s840
        %v842 = vmul.f32 %v836, %v841
        %v843 = vmul.f32 %v837, %v841
        %v844 = vmul.f32 %v838, %v841
        %v845 = vmul.f32 %v839, %v841
        %v846 = vadd.f32 %v780, %v842
        %v847 = vadd.f32 %v781, %v843
        %v848 = vadd.f32 %v782, %v844
        %v849 = vadd.f32 %v783, %v845
        %s850 = sld [smem:[#allocation3 + $0x27]]
        %v851 = vstv %s850
        %v852 = vmul.f32 %v836, %v851
        %v853 = vmul.f32 %v837, %v851
        %v854 = vmul.f32 %v838, %v851
        %v855 = vmul.f32 %v839, %v851
        %v856 = vadd.f32 %v806, %v852
        %v857 = vadd.f32 %v807, %v853
        %v858 = vadd.f32 %v808, %v854
        %v859 = vadd.f32 %v809, %v855
        %s860 = sld [smem:[#allocation3 + $0x4b]]
        %v861 = vstv %s860
        %v862 = vmul.f32 %v836, %v861
        %v863 = vmul.f32 %v837, %v861
        %v864 = vmul.f32 %v838, %v861
        %v865 = vmul.f32 %v839, %v861
        %v866 = vadd.f32 %v832, %v862
        %v867 = vadd.f32 %v833, %v863
        %v868 = vadd.f32 %v834, %v864
        %v869 = vadd.f32 %v835, %v865
        %s870 = sld [smem:[#allocation3 + $0x4]]
        %v871 = vstv %s870
        %v872 = vmul.f32 %v836, %v871
        %v873 = vmul.f32 %v837, %v871
        %v874 = vmul.f32 %v838, %v871
        %v875 = vmul.f32 %v839, %v871
        %880 = vrot.lane.b32.xlu0 %v872, 127
        %v881 = vpop.permute.xlu0 %880
        %882 = vrot.lane.b32.xlu0 %v873, 127
        %v883 = vpop.permute.xlu0 %882
        %884 = vrot.lane.b32.xlu0 %v874, 127
        %v885 = vpop.permute.xlu0 %884
        %886 = vrot.lane.b32.xlu0 %v875, 127
        %v887 = vpop.permute.xlu0 %886
        %v892 = vadd.f32 %v846, %v881
        %v893 = vadd.f32 %v847, %v883
        %v894 = vadd.f32 %v848, %v885
        %v895 = vadd.f32 %v849, %v887
        %s896 = sld [smem:[#allocation3 + $0x28]]
        %v897 = vstv %s896
        %v898 = vmul.f32 %v836, %v897
        %v899 = vmul.f32 %v837, %v897
        %v900 = vmul.f32 %v838, %v897
        %v901 = vmul.f32 %v839, %v897
        %906 = vrot.lane.b32.xlu0 %v898, 127
        %v907 = vpop.permute.xlu0 %906
        %908 = vrot.lane.b32.xlu0 %v899, 127
        %v909 = vpop.permute.xlu0 %908
        %910 = vrot.lane.b32.xlu0 %v900, 127
        %v911 = vpop.permute.xlu0 %910
        %912 = vrot.lane.b32.xlu0 %v901, 127
        %v913 = vpop.permute.xlu0 %912
        %v918 = vadd.f32 %v856, %v907
        %v919 = vadd.f32 %v857, %v909
        %v920 = vadd.f32 %v858, %v911
        %v921 = vadd.f32 %v859, %v913
        %s922 = sld [smem:[#allocation3 + $0x4c]]
        %v923 = vstv %s922
        %v924 = vmul.f32 %v836, %v923
        %v925 = vmul.f32 %v837, %v923
        %v926 = vmul.f32 %v838, %v923
        %v927 = vmul.f32 %v839, %v923
        %932 = vrot.lane.b32.xlu0 %v924, 127
        %v933 = vpop.permute.xlu0 %932
        %934 = vrot.lane.b32.xlu0 %v925, 127
        %v935 = vpop.permute.xlu0 %934
        %936 = vrot.lane.b32.xlu0 %v926, 127
        %v937 = vpop.permute.xlu0 %936
        %938 = vrot.lane.b32.xlu0 %v927, 127
        %v939 = vpop.permute.xlu0 %938
        %v944 = vadd.f32 %v866, %v933
        %v945 = vadd.f32 %v867, %v935
        %v946 = vadd.f32 %v868, %v937
        %v947 = vadd.f32 %v869, %v939
        %s948 = sld [smem:[#allocation3 + $0x5]]
        %v949 = vstv %s948
        %v950 = vmul.f32 %v836, %v949
        %v951 = vmul.f32 %v837, %v949
        %v952 = vmul.f32 %v838, %v949
        %v953 = vmul.f32 %v839, %v949
        %958 = vrot.lane.b32.xlu0 %v950, 126
        %v959 = vpop.permute.xlu0 %958
        %960 = vrot.lane.b32.xlu0 %v951, 126
        %v961 = vpop.permute.xlu0 %960
        %962 = vrot.lane.b32.xlu0 %v952, 126
        %v963 = vpop.permute.xlu0 %962
        %964 = vrot.lane.b32.xlu0 %v953, 126
        %v965 = vpop.permute.xlu0 %964
        %v970 = vadd.f32 %v892, %v959
        %v971 = vadd.f32 %v893, %v961
        %v972 = vadd.f32 %v894, %v963
        %v973 = vadd.f32 %v895, %v965
        %s974 = sld [smem:[#allocation3 + $0x29]]
        %v975 = vstv %s974
        %v976 = vmul.f32 %v836, %v975
        %v977 = vmul.f32 %v837, %v975
        %v978 = vmul.f32 %v838, %v975
        %v979 = vmul.f32 %v839, %v975
        %984 = vrot.lane.b32.xlu0 %v976, 126
        %v985 = vpop.permute.xlu0 %984
        %986 = vrot.lane.b32.xlu0 %v977, 126
        %v987 = vpop.permute.xlu0 %986
        %988 = vrot.lane.b32.xlu0 %v978, 126
        %v989 = vpop.permute.xlu0 %988
        %990 = vrot.lane.b32.xlu0 %v979, 126
        %v991 = vpop.permute.xlu0 %990
        %v996 = vadd.f32 %v918, %v985
        %v997 = vadd.f32 %v919, %v987
        %v998 = vadd.f32 %v920, %v989
        %v999 = vadd.f32 %v921, %v991
        %s1000 = sld [smem:[#allocation3 + $0x4d]]
        %v1001 = vstv %s1000
        %v1002 = vmul.f32 %v836, %v1001
        %v1003 = vmul.f32 %v837, %v1001
        %v1004 = vmul.f32 %v838, %v1001
        %v1005 = vmul.f32 %v839, %v1001
        %1010 = vrot.lane.b32.xlu0 %v1002, 126
        %v1011 = vpop.permute.xlu0 %1010
        %1012 = vrot.lane.b32.xlu0 %v1003, 126
        %v1013 = vpop.permute.xlu0 %1012
        %1014 = vrot.lane.b32.xlu0 %v1004, 126
        %v1015 = vpop.permute.xlu0 %1014
        %1016 = vrot.lane.b32.xlu0 %v1005, 126
        %v1017 = vpop.permute.xlu0 %1016
        %v1022 = vadd.f32 %v944, %v1011
        %v1023 = vadd.f32 %v945, %v1013
        %v1024 = vadd.f32 %v946, %v1015
        %v1025 = vadd.f32 %v947, %v1017
        %v1026 = vld [vmem:[#allocation2 + $0x2] sm:$0xff]
        %v1027 = vld [vmem:[#allocation2 + $0xa] sm:$0xff]
        %v1028 = vld [vmem:[#allocation2 + $0x12] sm:$0xff]
        %v1029 = vld [vmem:[#allocation2 + $0x1a] sm:$0xff]
        %s1030 = sld [smem:[#allocation3 + $0x6]]
        %v1031 = vstv %s1030
        %v1032 = vmul.f32 %v1026, %v1031
        %v1033 = vmul.f32 %v1027, %v1031
        %v1034 = vmul.f32 %v1028, %v1031
        %v1035 = vmul.f32 %v1029, %v1031
        %v1036 = vadd.f32 %v970, %v1032
        %v1037 = vadd.f32 %v971, %v1033
        %v1038 = vadd.f32 %v972, %v1034
        %v1039 = vadd.f32 %v973, %v1035
        %s1040 = sld [smem:[#allocation3 + $0x2a]]
        %v1041 = vstv %s1040
        %v1042 = vmul.f32 %v1026, %v1041
        %v1043 = vmul.f32 %v1027, %v1041
        %v1044 = vmul.f32 %v1028, %v1041
        %v1045 = vmul.f32 %v1029, %v1041
        %v1046 = vadd.f32 %v996, %v1042
        %v1047 = vadd.f32 %v997, %v1043
        %v1048 = vadd.f32 %v998, %v1044
        %v1049 = vadd.f32 %v999, %v1045
        %s1050 = sld [smem:[#allocation3 + $0x4e]]
        %v1051 = vstv %s1050
        %v1052 = vmul.f32 %v1026, %v1051
        %v1053 = vmul.f32 %v1027, %v1051
        %v1054 = vmul.f32 %v1028, %v1051
        %v1055 = vmul.f32 %v1029, %v1051
        %v1056 = vadd.f32 %v1022, %v1052
        %v1057 = vadd.f32 %v1023, %v1053
        %v1058 = vadd.f32 %v1024, %v1054
        %v1059 = vadd.f32 %v1025, %v1055
        %s1060 = sld [smem:[#allocation3 + $0x7]]
        %v1061 = vstv %s1060
        %v1062 = vmul.f32 %v1026, %v1061
        %v1063 = vmul.f32 %v1027, %v1061
        %v1064 = vmul.f32 %v1028, %v1061
        %v1065 = vmul.f32 %v1029, %v1061
        %1070 = vrot.lane.b32.xlu0 %v1062, 127
        %v1071 = vpop.permute.xlu0 %1070
        %1072 = vrot.lane.b32.xlu0 %v1063, 127
        %v1073 = vpop.permute.xlu0 %1072
        %1074 = vrot.lane.b32.xlu0 %v1064, 127
        %v1075 = vpop.permute.xlu0 %1074
        %1076 = vrot.lane.b32.xlu0 %v1065, 127
        %v1077 = vpop.permute.xlu0 %1076
        %v1082 = vadd.f32 %v1036, %v1071
        %v1083 = vadd.f32 %v1037, %v1073
        %v1084 = vadd.f32 %v1038, %v1075
        %v1085 = vadd.f32 %v1039, %v1077
        %s1086 = sld [smem:[#allocation3 + $0x2b]]
        %v1087 = vstv %s1086
        %v1088 = vmul.f32 %v1026, %v1087
        %v1089 = vmul.f32 %v1027, %v1087
        %v1090 = vmul.f32 %v1028, %v1087
        %v1091 = vmul.f32 %v1029, %v1087
        %1096 = vrot.lane.b32.xlu0 %v1088, 127
        %v1097 = vpop.permute.xlu0 %1096
        %1098 = vrot.lane.b32.xlu0 %v1089, 127
        %v1099 = vpop.permute.xlu0 %1098
        %1100 = vrot.lane.b32.xlu0 %v1090, 127
        %v1101 = vpop.permute.xlu0 %1100
        %1102 = vrot.lane.b32.xlu0 %v1091, 127
        %v1103 = vpop.permute.xlu0 %1102
        %v1108 = vadd.f32 %v1046, %v1097
        %v1109 = vadd.f32 %v1047, %v1099
        %v1110 = vadd.f32 %v1048, %v1101
        %v1111 = vadd.f32 %v1049, %v1103
        %s1112 = sld [smem:[#allocation3 + $0x4f]]
        %v1113 = vstv %s1112
        %v1114 = vmul.f32 %v1026, %v1113
        %v1115 = vmul.f32 %v1027, %v1113
        %v1116 = vmul.f32 %v1028, %v1113
        %v1117 = vmul.f32 %v1029, %v1113
        %1122 = vrot.lane.b32.xlu0 %v1114, 127
        %v1123 = vpop.permute.xlu0 %1122
        %1124 = vrot.lane.b32.xlu0 %v1115, 127
        %v1125 = vpop.permute.xlu0 %1124
        %1126 = vrot.lane.b32.xlu0 %v1116, 127
        %v1127 = vpop.permute.xlu0 %1126
        %1128 = vrot.lane.b32.xlu0 %v1117, 127
        %v1129 = vpop.permute.xlu0 %1128
        %v1134 = vadd.f32 %v1056, %v1123
        %v1135 = vadd.f32 %v1057, %v1125
        %v1136 = vadd.f32 %v1058, %v1127
        %v1137 = vadd.f32 %v1059, %v1129
        %s1138 = sld [smem:[#allocation3 + $0x8]]
        %v1139 = vstv %s1138
        %v1140 = vmul.f32 %v1026, %v1139
        %v1141 = vmul.f32 %v1027, %v1139
        %v1142 = vmul.f32 %v1028, %v1139
        %v1143 = vmul.f32 %v1029, %v1139
        %1148 = vrot.lane.b32.xlu0 %v1140, 126
        %v1149 = vpop.permute.xlu0 %1148
        %1150 = vrot.lane.b32.xlu0 %v1141, 126
        %v1151 = vpop.permute.xlu0 %1150
        %1152 = vrot.lane.b32.xlu0 %v1142, 126
        %v1153 = vpop.permute.xlu0 %1152
        %1154 = vrot.lane.b32.xlu0 %v1143, 126
        %v1155 = vpop.permute.xlu0 %1154
        %v1160 = vadd.f32 %v1082, %v1149
        %v1161 = vadd.f32 %v1083, %v1151
        %v1162 = vadd.f32 %v1084, %v1153
        %v1163 = vadd.f32 %v1085, %v1155
        %s1164 = sld [smem:[#allocation3 + $0x2c]]
        %v1165 = vstv %s1164
        %v1166 = vmul.f32 %v1026, %v1165
        %v1167 = vmul.f32 %v1027, %v1165
        %v1168 = vmul.f32 %v1028, %v1165
        %v1169 = vmul.f32 %v1029, %v1165
        %1174 = vrot.lane.b32.xlu0 %v1166, 126
        %v1175 = vpop.permute.xlu0 %1174
        %1176 = vrot.lane.b32.xlu0 %v1167, 126
        %v1177 = vpop.permute.xlu0 %1176
        %1178 = vrot.lane.b32.xlu0 %v1168, 126
        %v1179 = vpop.permute.xlu0 %1178
        %1180 = vrot.lane.b32.xlu0 %v1169, 126
        %v1181 = vpop.permute.xlu0 %1180
        %v1186 = vadd.f32 %v1108, %v1175
        %v1187 = vadd.f32 %v1109, %v1177
        %v1188 = vadd.f32 %v1110, %v1179
        %v1189 = vadd.f32 %v1111, %v1181
        %s1190 = sld [smem:[#allocation3 + $0x50]]
        %v1191 = vstv %s1190
        %v1192 = vmul.f32 %v1026, %v1191
        %v1193 = vmul.f32 %v1027, %v1191
        %v1194 = vmul.f32 %v1028, %v1191
        %v1195 = vmul.f32 %v1029, %v1191
        %1200 = vrot.lane.b32.xlu0 %v1192, 126
        %v1201 = vpop.permute.xlu0 %1200
        %1202 = vrot.lane.b32.xlu0 %v1193, 126
        %v1203 = vpop.permute.xlu0 %1202
        %1204 = vrot.lane.b32.xlu0 %v1194, 126
        %v1205 = vpop.permute.xlu0 %1204
        %1206 = vrot.lane.b32.xlu0 %v1195, 126
        %v1207 = vpop.permute.xlu0 %1206
        %v1212 = vadd.f32 %v1134, %v1201
        %v1213 = vadd.f32 %v1135, %v1203
        %v1214 = vadd.f32 %v1136, %v1205
        %v1215 = vadd.f32 %v1137, %v1207
        %v1216 = vld [vmem:[#allocation2 + $0x22] sm:$0xff]
        %v1217 = vld [vmem:[#allocation2 + $0x2a] sm:$0xff]
        %v1218 = vld [vmem:[#allocation2 + $0x32] sm:$0xff]
        %v1219 = vld [vmem:[#allocation2 + $0x3a] sm:$0xff]
        %s1220 = sld [smem:[#allocation3 + $0x9]]
        %v1221 = vstv %s1220
        %v1222 = vmul.f32 %v1216, %v1221
        %v1223 = vmul.f32 %v1217, %v1221
        %v1224 = vmul.f32 %v1218, %v1221
        %v1225 = vmul.f32 %v1219, %v1221
        %v1226 = vadd.f32 %v1160, %v1222
        %v1227 = vadd.f32 %v1161, %v1223
        %v1228 = vadd.f32 %v1162, %v1224
        %v1229 = vadd.f32 %v1163, %v1225
        %s1230 = sld [smem:[#allocation3 + $0x2d]]
        %v1231 = vstv %s1230
        %v1232 = vmul.f32 %v1216, %v1231
        %v1233 = vmul.f32 %v1217, %v1231
        %v1234 = vmul.f32 %v1218, %v1231
        %v1235 = vmul.f32 %v1219, %v1231
        %v1236 = vadd.f32 %v1186, %v1232
        %v1237 = vadd.f32 %v1187, %v1233
        %v1238 = vadd.f32 %v1188, %v1234
        %v1239 = vadd.f32 %v1189, %v1235
        %s1240 = sld [smem:[#allocation3 + $0x51]]
        %v1241 = vstv %s1240
        %v1242 = vmul.f32 %v1216, %v1241
        %v1243 = vmul.f32 %v1217, %v1241
        %v1244 = vmul.f32 %v1218, %v1241
        %v1245 = vmul.f32 %v1219, %v1241
        %v1246 = vadd.f32 %v1212, %v1242
        %v1247 = vadd.f32 %v1213, %v1243
        %v1248 = vadd.f32 %v1214, %v1244
        %v1249 = vadd.f32 %v1215, %v1245
        %s1250 = sld [smem:[#allocation3 + $0xa]]
        %v1251 = vstv %s1250
        %v1252 = vmul.f32 %v1216, %v1251
        %v1253 = vmul.f32 %v1217, %v1251
        %v1254 = vmul.f32 %v1218, %v1251
        %v1255 = vmul.f32 %v1219, %v1251
        %1260 = vrot.lane.b32.xlu0 %v1252, 127
        %v1261 = vpop.permute.xlu0 %1260
        %1262 = vrot.lane.b32.xlu0 %v1253, 127
        %v1263 = vpop.permute.xlu0 %1262
        %1264 = vrot.lane.b32.xlu0 %v1254, 127
        %v1265 = vpop.permute.xlu0 %1264
        %1266 = vrot.lane.b32.xlu0 %v1255, 127
        %v1267 = vpop.permute.xlu0 %1266
        %v1272 = vadd.f32 %v1226, %v1261
        %v1273 = vadd.f32 %v1227, %v1263
        %v1274 = vadd.f32 %v1228, %v1265
        %v1275 = vadd.f32 %v1229, %v1267
        %s1276 = sld [smem:[#allocation3 + $0x2e]]
        %v1277 = vstv %s1276
        %v1278 = vmul.f32 %v1216, %v1277
        %v1279 = vmul.f32 %v1217, %v1277
        %v1280 = vmul.f32 %v1218, %v1277
        %v1281 = vmul.f32 %v1219, %v1277
        %1286 = vrot.lane.b32.xlu0 %v1278, 127
        %v1287 = vpop.permute.xlu0 %1286
        %1288 = vrot.lane.b32.xlu0 %v1279, 127
        %v1289 = vpop.permute.xlu0 %1288
        %1290 = vrot.lane.b32.xlu0 %v1280, 127
        %v1291 = vpop.permute.xlu0 %1290
        %1292 = vrot.lane.b32.xlu0 %v1281, 127
        %v1293 = vpop.permute.xlu0 %1292
        %v1298 = vadd.f32 %v1236, %v1287
        %v1299 = vadd.f32 %v1237, %v1289
        %v1300 = vadd.f32 %v1238, %v1291
        %v1301 = vadd.f32 %v1239, %v1293
        %s1302 = sld [smem:[#allocation3 + $0x52]]
        %v1303 = vstv %s1302
        %v1304 = vmul.f32 %v1216, %v1303
        %v1305 = vmul.f32 %v1217, %v1303
        %v1306 = vmul.f32 %v1218, %v1303
        %v1307 = vmul.f32 %v1219, %v1303
        %1312 = vrot.lane.b32.xlu0 %v1304, 127
        %v1313 = vpop.permute.xlu0 %1312
        %1314 = vrot.lane.b32.xlu0 %v1305, 127
        %v1315 = vpop.permute.xlu0 %1314
        %1316 = vrot.lane.b32.xlu0 %v1306, 127
        %v1317 = vpop.permute.xlu0 %1316
        %1318 = vrot.lane.b32.xlu0 %v1307, 127
        %v1319 = vpop.permute.xlu0 %1318
        %v1324 = vadd.f32 %v1246, %v1313
        %v1325 = vadd.f32 %v1247, %v1315
        %v1326 = vadd.f32 %v1248, %v1317
        %v1327 = vadd.f32 %v1249, %v1319
        %s1328 = sld [smem:[#allocation3 + $0xb]]
        %v1329 = vstv %s1328
        %v1330 = vmul.f32 %v1216, %v1329
        %v1331 = vmul.f32 %v1217, %v1329
        %v1332 = vmul.f32 %v1218, %v1329
        %v1333 = vmul.f32 %v1219, %v1329
        %1338 = vrot.lane.b32.xlu0 %v1330, 126
        %v1339 = vpop.permute.xlu0 %1338
        %1340 = vrot.lane.b32.xlu0 %v1331, 126
        %v1341 = vpop.permute.xlu0 %1340
        %1342 = vrot.lane.b32.xlu0 %v1332, 126
        %v1343 = vpop.permute.xlu0 %1342
        %1344 = vrot.lane.b32.xlu0 %v1333, 126
        %v1345 = vpop.permute.xlu0 %1344
        %v1350 = vadd.f32 %v1272, %v1339
        %v1351 = vadd.f32 %v1273, %v1341
        %v1352 = vadd.f32 %v1274, %v1343
        %v1353 = vadd.f32 %v1275, %v1345
        %s1354 = sld [smem:[#allocation3 + $0x2f]]
        %v1355 = vstv %s1354
        %v1356 = vmul.f32 %v1216, %v1355
        %v1357 = vmul.f32 %v1217, %v1355
        %v1358 = vmul.f32 %v1218, %v1355
        %v1359 = vmul.f32 %v1219, %v1355
        %1364 = vrot.lane.b32.xlu0 %v1356, 126
        %v1365 = vpop.permute.xlu0 %1364
        %1366 = vrot.lane.b32.xlu0 %v1357, 126
        %v1367 = vpop.permute.xlu0 %1366
        %1368 = vrot.lane.b32.xlu0 %v1358, 126
        %v1369 = vpop.permute.xlu0 %1368
        %1370 = vrot.lane.b32.xlu0 %v1359, 126
        %v1371 = vpop.permute.xlu0 %1370
        %v1376 = vadd.f32 %v1298, %v1365
        %v1377 = vadd.f32 %v1299, %v1367
        %v1378 = vadd.f32 %v1300, %v1369
        %v1379 = vadd.f32 %v1301, %v1371
        %s1380 = sld [smem:[#allocation3 + $0x53]]
        %v1381 = vstv %s1380
        %v1382 = vmul.f32 %v1216, %v1381
        %v1383 = vmul.f32 %v1217, %v1381
        %v1384 = vmul.f32 %v1218, %v1381
        %v1385 = vmul.f32 %v1219, %v1381
        %1390 = vrot.lane.b32.xlu0 %v1382, 126
        %v1391 = vpop.permute.xlu0 %1390
        %1392 = vrot.lane.b32.xlu0 %v1383, 126
        %v1393 = vpop.permute.xlu0 %1392
        %1394 = vrot.lane.b32.xlu0 %v1384, 126
        %v1395 = vpop.permute.xlu0 %1394
        %1396 = vrot.lane.b32.xlu0 %v1385, 126
        %v1397 = vpop.permute.xlu0 %1396
        %v1402 = vadd.f32 %v1324, %v1391
        %v1403 = vadd.f32 %v1325, %v1393
        %v1404 = vadd.f32 %v1326, %v1395
        %v1405 = vadd.f32 %v1327, %v1397
        %v1406 = vld [vmem:[#allocation2 + $0x23] sm:$0xff]
        %v1407 = vld [vmem:[#allocation2 + $0x2b] sm:$0xff]
        %v1408 = vld [vmem:[#allocation2 + $0x33] sm:$0xff]
        %v1409 = vld [vmem:[#allocation2 + $0x3b] sm:$0xff]
        %s1410 = sld [smem:[#allocation3 + $0xc]]
        %v1411 = vstv %s1410
        %v1412 = vmul.f32 %v1406, %v1411
        %v1413 = vmul.f32 %v1407, %v1411
        %v1414 = vmul.f32 %v1408, %v1411
        %v1415 = vmul.f32 %v1409, %v1411
        %v1416 = vadd.f32 %v1350, %v1412
        %v1417 = vadd.f32 %v1351, %v1413
        %v1418 = vadd.f32 %v1352, %v1414
        %v1419 = vadd.f32 %v1353, %v1415
        %s1420 = sld [smem:[#allocation3 + $0x30]]
        %v1421 = vstv %s1420
        %v1422 = vmul.f32 %v1406, %v1421
        %v1423 = vmul.f32 %v1407, %v1421
        %v1424 = vmul.f32 %v1408, %v1421
        %v1425 = vmul.f32 %v1409, %v1421
        %v1426 = vadd.f32 %v1376, %v1422
        %v1427 = vadd.f32 %v1377, %v1423
        %v1428 = vadd.f32 %v1378, %v1424
        %v1429 = vadd.f32 %v1379, %v1425
        %s1430 = sld [smem:[#allocation3 + $0x54]]
        %v1431 = vstv %s1430
        %v1432 = vmul.f32 %v1406, %v1431
        %v1433 = vmul.f32 %v1407, %v1431
        %v1434 = vmul.f32 %v1408, %v1431
        %v1435 = vmul.f32 %v1409, %v1431
        %v1436 = vadd.f32 %v1402, %v1432
        %v1437 = vadd.f32 %v1403, %v1433
        %v1438 = vadd.f32 %v1404, %v1434
        %v1439 = vadd.f32 %v1405, %v1435
        %s1440 = sld [smem:[#allocation3 + $0xd]]
        %v1441 = vstv %s1440
        %v1442 = vmul.f32 %v1406, %v1441
        %v1443 = vmul.f32 %v1407, %v1441
        %v1444 = vmul.f32 %v1408, %v1441
        %v1445 = vmul.f32 %v1409, %v1441
        %1450 = vrot.lane.b32.xlu0 %v1442, 127
        %v1451 = vpop.permute.xlu0 %1450
        %1452 = vrot.lane.b32.xlu0 %v1443, 127
        %v1453 = vpop.permute.xlu0 %1452
        %1454 = vrot.lane.b32.xlu0 %v1444, 127
        %v1455 = vpop.permute.xlu0 %1454
        %1456 = vrot.lane.b32.xlu0 %v1445, 127
        %v1457 = vpop.permute.xlu0 %1456
        %v1462 = vadd.f32 %v1416, %v1451
        %v1463 = vadd.f32 %v1417, %v1453
        %v1464 = vadd.f32 %v1418, %v1455
        %v1465 = vadd.f32 %v1419, %v1457
        %s1466 = sld [smem:[#allocation3 + $0x31]]
        %v1467 = vstv %s1466
        %v1468 = vmul.f32 %v1406, %v1467
        %v1469 = vmul.f32 %v1407, %v1467
        %v1470 = vmul.f32 %v1408, %v1467
        %v1471 = vmul.f32 %v1409, %v1467
        %1476 = vrot.lane.b32.xlu0 %v1468, 127
        %v1477 = vpop.permute.xlu0 %1476
        %1478 = vrot.lane.b32.xlu0 %v1469, 127
        %v1479 = vpop.permute.xlu0 %1478
        %1480 = vrot.lane.b32.xlu0 %v1470, 127
        %v1481 = vpop.permute.xlu0 %1480
        %1482 = vrot.lane.b32.xlu0 %v1471, 127
        %v1483 = vpop.permute.xlu0 %1482
        %v1488 = vadd.f32 %v1426, %v1477
        %v1489 = vadd.f32 %v1427, %v1479
        %v1490 = vadd.f32 %v1428, %v1481
        %v1491 = vadd.f32 %v1429, %v1483
        %s1492 = sld [smem:[#allocation3 + $0x55]]
        %v1493 = vstv %s1492
        %v1494 = vmul.f32 %v1406, %v1493
        %v1495 = vmul.f32 %v1407, %v1493
        %v1496 = vmul.f32 %v1408, %v1493
        %v1497 = vmul.f32 %v1409, %v1493
        %1502 = vrot.lane.b32.xlu0 %v1494, 127
        %v1503 = vpop.permute.xlu0 %1502
        %1504 = vrot.lane.b32.xlu0 %v1495, 127
        %v1505 = vpop.permute.xlu0 %1504
        %1506 = vrot.lane.b32.xlu0 %v1496, 127
        %v1507 = vpop.permute.xlu0 %1506
        %1508 = vrot.lane.b32.xlu0 %v1497, 127
        %v1509 = vpop.permute.xlu0 %1508
        %v1514 = vadd.f32 %v1436, %v1503
        %v1515 = vadd.f32 %v1437, %v1505
        %v1516 = vadd.f32 %v1438, %v1507
        %v1517 = vadd.f32 %v1439, %v1509
        %s1518 = sld [smem:[#allocation3 + $0xe]]
        %v1519 = vstv %s1518
        %v1520 = vmul.f32 %v1406, %v1519
        %v1521 = vmul.f32 %v1407, %v1519
        %v1522 = vmul.f32 %v1408, %v1519
        %v1523 = vmul.f32 %v1409, %v1519
        %1528 = vrot.lane.b32.xlu0 %v1520, 126
        %v1529 = vpop.permute.xlu0 %1528
        %1530 = vrot.lane.b32.xlu0 %v1521, 126
        %v1531 = vpop.permute.xlu0 %1530
        %1532 = vrot.lane.b32.xlu0 %v1522, 126
        %v1533 = vpop.permute.xlu0 %1532
        %1534 = vrot.lane.b32.xlu0 %v1523, 126
        %v1535 = vpop.permute.xlu0 %1534
        %v1540 = vadd.f32 %v1462, %v1529
        %v1541 = vadd.f32 %v1463, %v1531
        %v1542 = vadd.f32 %v1464, %v1533
        %v1543 = vadd.f32 %v1465, %v1535
        %s1544 = sld [smem:[#allocation3 + $0x32]]
        %v1545 = vstv %s1544
        %v1546 = vmul.f32 %v1406, %v1545
        %v1547 = vmul.f32 %v1407, %v1545
        %v1548 = vmul.f32 %v1408, %v1545
        %v1549 = vmul.f32 %v1409, %v1545
        %1554 = vrot.lane.b32.xlu0 %v1546, 126
        %v1555 = vpop.permute.xlu0 %1554
        %1556 = vrot.lane.b32.xlu0 %v1547, 126
        %v1557 = vpop.permute.xlu0 %1556
        %1558 = vrot.lane.b32.xlu0 %v1548, 126
        %v1559 = vpop.permute.xlu0 %1558
        %1560 = vrot.lane.b32.xlu0 %v1549, 126
        %v1561 = vpop.permute.xlu0 %1560
        %v1566 = vadd.f32 %v1488, %v1555
        %v1567 = vadd.f32 %v1489, %v1557
        %v1568 = vadd.f32 %v1490, %v1559
        %v1569 = vadd.f32 %v1491, %v1561
        %s1570 = sld [smem:[#allocation3 + $0x56]]
        %v1571 = vstv %s1570
        %v1572 = vmul.f32 %v1406, %v1571
        %v1573 = vmul.f32 %v1407, %v1571
        %v1574 = vmul.f32 %v1408, %v1571
        %v1575 = vmul.f32 %v1409, %v1571
        %1580 = vrot.lane.b32.xlu0 %v1572, 126
        %v1581 = vpop.permute.xlu0 %1580
        %1582 = vrot.lane.b32.xlu0 %v1573, 126
        %v1583 = vpop.permute.xlu0 %1582
        %1584 = vrot.lane.b32.xlu0 %v1574, 126
        %v1585 = vpop.permute.xlu0 %1584
        %1586 = vrot.lane.b32.xlu0 %v1575, 126
        %v1587 = vpop.permute.xlu0 %1586
        %v1592 = vadd.f32 %v1514, %v1581
        %v1593 = vadd.f32 %v1515, %v1583
        %v1594 = vadd.f32 %v1516, %v1585
        %v1595 = vadd.f32 %v1517, %v1587
        %v1596 = vld [vmem:[#allocation2 + $0x24] sm:$0xff]
        %v1597 = vld [vmem:[#allocation2 + $0x2c] sm:$0xff]
        %v1598 = vld [vmem:[#allocation2 + $0x34] sm:$0xff]
        %v1599 = vld [vmem:[#allocation2 + $0x3c] sm:$0xff]
        %s1600 = sld [smem:[#allocation3 + $0xf]]
        %v1601 = vstv %s1600
        %v1602 = vmul.f32 %v1596, %v1601
        %v1603 = vmul.f32 %v1597, %v1601
        %v1604 = vmul.f32 %v1598, %v1601
        %v1605 = vmul.f32 %v1599, %v1601
        %v1606 = vadd.f32 %v1540, %v1602
        %v1607 = vadd.f32 %v1541, %v1603
        %v1608 = vadd.f32 %v1542, %v1604
        %v1609 = vadd.f32 %v1543, %v1605
        %s1610 = sld [smem:[#allocation3 + $0x33]]
        %v1611 = vstv %s1610
        %v1612 = vmul.f32 %v1596, %v1611
        %v1613 = vmul.f32 %v1597, %v1611
        %v1614 = vmul.f32 %v1598, %v1611
        %v1615 = vmul.f32 %v1599, %v1611
        %v1616 = vadd.f32 %v1566, %v1612
        %v1617 = vadd.f32 %v1567, %v1613
        %v1618 = vadd.f32 %v1568, %v1614
        %v1619 = vadd.f32 %v1569, %v1615
        %s1620 = sld [smem:[#allocation3 + $0x57]]
        %v1621 = vstv %s1620
        %v1622 = vmul.f32 %v1596, %v1621
        %v1623 = vmul.f32 %v1597, %v1621
        %v1624 = vmul.f32 %v1598, %v1621
        %v1625 = vmul.f32 %v1599, %v1621
        %v1626 = vadd.f32 %v1592, %v1622
        %v1627 = vadd.f32 %v1593, %v1623
        %v1628 = vadd.f32 %v1594, %v1624
        %v1629 = vadd.f32 %v1595, %v1625
        %s1630 = sld [smem:[#allocation3 + $0x10]]
        %v1631 = vstv %s1630
        %v1632 = vmul.f32 %v1596, %v1631
        %v1633 = vmul.f32 %v1597, %v1631
        %v1634 = vmul.f32 %v1598, %v1631
        %v1635 = vmul.f32 %v1599, %v1631
        %1640 = vrot.lane.b32.xlu0 %v1632, 127
        %v1641 = vpop.permute.xlu0 %1640
        %1642 = vrot.lane.b32.xlu0 %v1633, 127
        %v1643 = vpop.permute.xlu0 %1642
        %1644 = vrot.lane.b32.xlu0 %v1634, 127
        %v1645 = vpop.permute.xlu0 %1644
        %1646 = vrot.lane.b32.xlu0 %v1635, 127
        %v1647 = vpop.permute.xlu0 %1646
        %v1652 = vadd.f32 %v1606, %v1641
        %v1653 = vadd.f32 %v1607, %v1643
        %v1654 = vadd.f32 %v1608, %v1645
        %v1655 = vadd.f32 %v1609, %v1647
        %s1656 = sld [smem:[#allocation3 + $0x34]]
        %v1657 = vstv %s1656
        %v1658 = vmul.f32 %v1596, %v1657
        %v1659 = vmul.f32 %v1597, %v1657
        %v1660 = vmul.f32 %v1598, %v1657
        %v1661 = vmul.f32 %v1599, %v1657
        %1666 = vrot.lane.b32.xlu0 %v1658, 127
        %v1667 = vpop.permute.xlu0 %1666
        %1668 = vrot.lane.b32.xlu0 %v1659, 127
        %v1669 = vpop.permute.xlu0 %1668
        %1670 = vrot.lane.b32.xlu0 %v1660, 127
        %v1671 = vpop.permute.xlu0 %1670
        %1672 = vrot.lane.b32.xlu0 %v1661, 127
        %v1673 = vpop.permute.xlu0 %1672
        %v1678 = vadd.f32 %v1616, %v1667
        %v1679 = vadd.f32 %v1617, %v1669
        %v1680 = vadd.f32 %v1618, %v1671
        %v1681 = vadd.f32 %v1619, %v1673
        %s1682 = sld [smem:[#allocation3 + $0x58]]
        %v1683 = vstv %s1682
        %v1684 = vmul.f32 %v1596, %v1683
        %v1685 = vmul.f32 %v1597, %v1683
        %v1686 = vmul.f32 %v1598, %v1683
        %v1687 = vmul.f32 %v1599, %v1683
        %1692 = vrot.lane.b32.xlu0 %v1684, 127
        %v1693 = vpop.permute.xlu0 %1692
        %1694 = vrot.lane.b32.xlu0 %v1685, 127
        %v1695 = vpop.permute.xlu0 %1694
        %1696 = vrot.lane.b32.xlu0 %v1686, 127
        %v1697 = vpop.permute.xlu0 %1696
        %1698 = vrot.lane.b32.xlu0 %v1687, 127
        %v1699 = vpop.permute.xlu0 %1698
        %v1704 = vadd.f32 %v1626, %v1693
        %v1705 = vadd.f32 %v1627, %v1695
        %v1706 = vadd.f32 %v1628, %v1697
        %v1707 = vadd.f32 %v1629, %v1699
        %s1708 = sld [smem:[#allocation3 + $0x11]]
        %v1709 = vstv %s1708
        %v1710 = vmul.f32 %v1596, %v1709
        %v1711 = vmul.f32 %v1597, %v1709
        %v1712 = vmul.f32 %v1598, %v1709
        %v1713 = vmul.f32 %v1599, %v1709
        %1718 = vrot.lane.b32.xlu0 %v1710, 126
        %v1719 = vpop.permute.xlu0 %1718
        %1720 = vrot.lane.b32.xlu0 %v1711, 126
        %v1721 = vpop.permute.xlu0 %1720
        %1722 = vrot.lane.b32.xlu0 %v1712, 126
        %v1723 = vpop.permute.xlu0 %1722
        %1724 = vrot.lane.b32.xlu0 %v1713, 126
        %v1725 = vpop.permute.xlu0 %1724
        %v1730 = vadd.f32 %v1652, %v1719
        %v1731 = vadd.f32 %v1653, %v1721
        %v1732 = vadd.f32 %v1654, %v1723
        %v1733 = vadd.f32 %v1655, %v1725
        %s1734 = sld [smem:[#allocation3 + $0x35]]
        %v1735 = vstv %s1734
        %v1736 = vmul.f32 %v1596, %v1735
        %v1737 = vmul.f32 %v1597, %v1735
        %v1738 = vmul.f32 %v1598, %v1735
        %v1739 = vmul.f32 %v1599, %v1735
        %1744 = vrot.lane.b32.xlu0 %v1736, 126
        %v1745 = vpop.permute.xlu0 %1744
        %1746 = vrot.lane.b32.xlu0 %v1737, 126
        %v1747 = vpop.permute.xlu0 %1746
        %1748 = vrot.lane.b32.xlu0 %v1738, 126
        %v1749 = vpop.permute.xlu0 %1748
        %1750 = vrot.lane.b32.xlu0 %v1739, 126
        %v1751 = vpop.permute.xlu0 %1750
        %v1756 = vadd.f32 %v1678, %v1745
        %v1757 = vadd.f32 %v1679, %v1747
        %v1758 = vadd.f32 %v1680, %v1749
        %v1759 = vadd.f32 %v1681, %v1751
        %s1760 = sld [smem:[#allocation3 + $0x59]]
        %v1761 = vstv %s1760
        %v1762 = vmul.f32 %v1596, %v1761
        %v1763 = vmul.f32 %v1597, %v1761
        %v1764 = vmul.f32 %v1598, %v1761
        %v1765 = vmul.f32 %v1599, %v1761
        %1770 = vrot.lane.b32.xlu0 %v1762, 126
        %v1771 = vpop.permute.xlu0 %1770
        %1772 = vrot.lane.b32.xlu0 %v1763, 126
        %v1773 = vpop.permute.xlu0 %1772
        %1774 = vrot.lane.b32.xlu0 %v1764, 126
        %v1775 = vpop.permute.xlu0 %1774
        %1776 = vrot.lane.b32.xlu0 %v1765, 126
        %v1777 = vpop.permute.xlu0 %1776
        %v1782 = vadd.f32 %v1704, %v1771
        %v1783 = vadd.f32 %v1705, %v1773
        %v1784 = vadd.f32 %v1706, %v1775
        %v1785 = vadd.f32 %v1707, %v1777
        %v1786 = vld [vmem:[#allocation2 + $0x44] sm:$0xff]
        %v1787 = vld [vmem:[#allocation2 + $0x4c] sm:$0xff]
        %v1788 = vld [vmem:[#allocation2 + $0x54] sm:$0xff]
        %v1789 = vld [vmem:[#allocation2 + $0x5c] sm:$0xff]
        %s1790 = sld [smem:[#allocation3 + $0x12]]
        %v1791 = vstv %s1790
        %v1792 = vmul.f32 %v1786, %v1791
        %v1793 = vmul.f32 %v1787, %v1791
        %v1794 = vmul.f32 %v1788, %v1791
        %v1795 = vmul.f32 %v1789, %v1791
        %v1796 = vadd.f32 %v1730, %v1792
        %v1797 = vadd.f32 %v1731, %v1793
        %v1798 = vadd.f32 %v1732, %v1794
        %v1799 = vadd.f32 %v1733, %v1795
        %s1800 = sld [smem:[#allocation3 + $0x36]]
        %v1801 = vstv %s1800
        %v1802 = vmul.f32 %v1786, %v1801
        %v1803 = vmul.f32 %v1787, %v1801
        %v1804 = vmul.f32 %v1788, %v1801
        %v1805 = vmul.f32 %v1789, %v1801
        %v1806 = vadd.f32 %v1756, %v1802
        %v1807 = vadd.f32 %v1757, %v1803
        %v1808 = vadd.f32 %v1758, %v1804
        %v1809 = vadd.f32 %v1759, %v1805
        %s1810 = sld [smem:[#allocation3 + $0x5a]]
        %v1811 = vstv %s1810
        %v1812 = vmul.f32 %v1786, %v1811
        %v1813 = vmul.f32 %v1787, %v1811
        %v1814 = vmul.f32 %v1788, %v1811
        %v1815 = vmul.f32 %v1789, %v1811
        %v1816 = vadd.f32 %v1782, %v1812
        %v1817 = vadd.f32 %v1783, %v1813
        %v1818 = vadd.f32 %v1784, %v1814
        %v1819 = vadd.f32 %v1785, %v1815
        %s1820 = sld [smem:[#allocation3 + $0x13]]
        %v1821 = vstv %s1820
        %v1822 = vmul.f32 %v1786, %v1821
        %v1823 = vmul.f32 %v1787, %v1821
        %v1824 = vmul.f32 %v1788, %v1821
        %v1825 = vmul.f32 %v1789, %v1821
        %1830 = vrot.lane.b32.xlu0 %v1822, 127
        %v1831 = vpop.permute.xlu0 %1830
        %1832 = vrot.lane.b32.xlu0 %v1823, 127
        %v1833 = vpop.permute.xlu0 %1832
        %1834 = vrot.lane.b32.xlu0 %v1824, 127
        %v1835 = vpop.permute.xlu0 %1834
        %1836 = vrot.lane.b32.xlu0 %v1825, 127
        %v1837 = vpop.permute.xlu0 %1836
        %v1842 = vadd.f32 %v1796, %v1831
        %v1843 = vadd.f32 %v1797, %v1833
        %v1844 = vadd.f32 %v1798, %v1835
        %v1845 = vadd.f32 %v1799, %v1837
        %s1846 = sld [smem:[#allocation3 + $0x37]]
        %v1847 = vstv %s1846
        %v1848 = vmul.f32 %v1786, %v1847
        %v1849 = vmul.f32 %v1787, %v1847
        %v1850 = vmul.f32 %v1788, %v1847
        %v1851 = vmul.f32 %v1789, %v1847
        %1856 = vrot.lane.b32.xlu0 %v1848, 127
        %v1857 = vpop.permute.xlu0 %1856
        %1858 = vrot.lane.b32.xlu0 %v1849, 127
        %v1859 = vpop.permute.xlu0 %1858
        %1860 = vrot.lane.b32.xlu0 %v1850, 127
        %v1861 = vpop.permute.xlu0 %1860
        %1862 = vrot.lane.b32.xlu0 %v1851, 127
        %v1863 = vpop.permute.xlu0 %1862
        %v1868 = vadd.f32 %v1806, %v1857
        %v1869 = vadd.f32 %v1807, %v1859
        %v1870 = vadd.f32 %v1808, %v1861
        %v1871 = vadd.f32 %v1809, %v1863
        %s1872 = sld [smem:[#allocation3 + $0x5b]]
        %v1873 = vstv %s1872
        %v1874 = vmul.f32 %v1786, %v1873
        %v1875 = vmul.f32 %v1787, %v1873
        %v1876 = vmul.f32 %v1788, %v1873
        %v1877 = vmul.f32 %v1789, %v1873
        %1882 = vrot.lane.b32.xlu0 %v1874, 127
        %v1883 = vpop.permute.xlu0 %1882
        %1884 = vrot.lane.b32.xlu0 %v1875, 127
        %v1885 = vpop.permute.xlu0 %1884
        %1886 = vrot.lane.b32.xlu0 %v1876, 127
        %v1887 = vpop.permute.xlu0 %1886
        %1888 = vrot.lane.b32.xlu0 %v1877, 127
        %v1889 = vpop.permute.xlu0 %1888
        %v1894 = vadd.f32 %v1816, %v1883
        %v1895 = vadd.f32 %v1817, %v1885
        %v1896 = vadd.f32 %v1818, %v1887
        %v1897 = vadd.f32 %v1819, %v1889
        %s1898 = sld [smem:[#allocation3 + $0x14]]
        %v1899 = vstv %s1898
        %v1900 = vmul.f32 %v1786, %v1899
        %v1901 = vmul.f32 %v1787, %v1899
        %v1902 = vmul.f32 %v1788, %v1899
        %v1903 = vmul.f32 %v1789, %v1899
        %1908 = vrot.lane.b32.xlu0 %v1900, 126
        %v1909 = vpop.permute.xlu0 %1908
        %1910 = vrot.lane.b32.xlu0 %v1901, 126
        %v1911 = vpop.permute.xlu0 %1910
        %1912 = vrot.lane.b32.xlu0 %v1902, 126
        %v1913 = vpop.permute.xlu0 %1912
        %1914 = vrot.lane.b32.xlu0 %v1903, 126
        %v1915 = vpop.permute.xlu0 %1914
        %v1920 = vadd.f32 %v1842, %v1909
        %v1921 = vadd.f32 %v1843, %v1911
        %v1922 = vadd.f32 %v1844, %v1913
        %v1923 = vadd.f32 %v1845, %v1915
        %s1924 = sld [smem:[#allocation3 + $0x38]]
        %v1925 = vstv %s1924
        %v1926 = vmul.f32 %v1786, %v1925
        %v1927 = vmul.f32 %v1787, %v1925
        %v1928 = vmul.f32 %v1788, %v1925
        %v1929 = vmul.f32 %v1789, %v1925
        %1934 = vrot.lane.b32.xlu0 %v1926, 126
        %v1935 = vpop.permute.xlu0 %1934
        %1936 = vrot.lane.b32.xlu0 %v1927, 126
        %v1937 = vpop.permute.xlu0 %1936
        %1938 = vrot.lane.b32.xlu0 %v1928, 126
        %v1939 = vpop.permute.xlu0 %1938
        %1940 = vrot.lane.b32.xlu0 %v1929, 126
        %v1941 = vpop.permute.xlu0 %1940
        %v1946 = vadd.f32 %v1868, %v1935
        %v1947 = vadd.f32 %v1869, %v1937
        %v1948 = vadd.f32 %v1870, %v1939
        %v1949 = vadd.f32 %v1871, %v1941
        %s1950 = sld [smem:[#allocation3 + $0x5c]]
        %v1951 = vstv %s1950
        %v1952 = vmul.f32 %v1786, %v1951
        %v1953 = vmul.f32 %v1787, %v1951
        %v1954 = vmul.f32 %v1788, %v1951
        %v1955 = vmul.f32 %v1789, %v1951
        %1960 = vrot.lane.b32.xlu0 %v1952, 126
        %v1961 = vpop.permute.xlu0 %1960
        %1962 = vrot.lane.b32.xlu0 %v1953, 126
        %v1963 = vpop.permute.xlu0 %1962
        %1964 = vrot.lane.b32.xlu0 %v1954, 126
        %v1965 = vpop.permute.xlu0 %1964
        %1966 = vrot.lane.b32.xlu0 %v1955, 126
        %v1967 = vpop.permute.xlu0 %1966
        %v1972 = vadd.f32 %v1894, %v1961
        %v1973 = vadd.f32 %v1895, %v1963
        %v1974 = vadd.f32 %v1896, %v1965
        %v1975 = vadd.f32 %v1897, %v1967
        %v1976 = vld [vmem:[#allocation2 + $0x45] sm:$0xff]
        %v1977 = vld [vmem:[#allocation2 + $0x4d] sm:$0xff]
        %v1978 = vld [vmem:[#allocation2 + $0x55] sm:$0xff]
        %v1979 = vld [vmem:[#allocation2 + $0x5d] sm:$0xff]
        %s1980 = sld [smem:[#allocation3 + $0x15]]
        %v1981 = vstv %s1980
        %v1982 = vmul.f32 %v1976, %v1981
        %v1983 = vmul.f32 %v1977, %v1981
        %v1984 = vmul.f32 %v1978, %v1981
        %v1985 = vmul.f32 %v1979, %v1981
        %v1986 = vadd.f32 %v1920, %v1982
        %v1987 = vadd.f32 %v1921, %v1983
        %v1988 = vadd.f32 %v1922, %v1984
        %v1989 = vadd.f32 %v1923, %v1985
        %s1990 = sld [smem:[#allocation3 + $0x39]]
        %v1991 = vstv %s1990
        %v1992 = vmul.f32 %v1976, %v1991
        %v1993 = vmul.f32 %v1977, %v1991
        %v1994 = vmul.f32 %v1978, %v1991
        %v1995 = vmul.f32 %v1979, %v1991
        %v1996 = vadd.f32 %v1946, %v1992
        %v1997 = vadd.f32 %v1947, %v1993
        %v1998 = vadd.f32 %v1948, %v1994
        %v1999 = vadd.f32 %v1949, %v1995
        %s2000 = sld [smem:[#allocation3 + $0x5d]]
        %v2001 = vstv %s2000
        %v2002 = vmul.f32 %v1976, %v2001
        %v2003 = vmul.f32 %v1977, %v2001
        %v2004 = vmul.f32 %v1978, %v2001
        %v2005 = vmul.f32 %v1979, %v2001
        %v2006 = vadd.f32 %v1972, %v2002
        %v2007 = vadd.f32 %v1973, %v2003
        %v2008 = vadd.f32 %v1974, %v2004
        %v2009 = vadd.f32 %v1975, %v2005
        %s2010 = sld [smem:[#allocation3 + $0x16]]
        %v2011 = vstv %s2010
        %v2012 = vmul.f32 %v1976, %v2011
        %v2013 = vmul.f32 %v1977, %v2011
        %v2014 = vmul.f32 %v1978, %v2011
        %v2015 = vmul.f32 %v1979, %v2011
        %2020 = vrot.lane.b32.xlu0 %v2012, 127
        %v2021 = vpop.permute.xlu0 %2020
        %2022 = vrot.lane.b32.xlu0 %v2013, 127
        %v2023 = vpop.permute.xlu0 %2022
        %2024 = vrot.lane.b32.xlu0 %v2014, 127
        %v2025 = vpop.permute.xlu0 %2024
        %2026 = vrot.lane.b32.xlu0 %v2015, 127
        %v2027 = vpop.permute.xlu0 %2026
        %v2032 = vadd.f32 %v1986, %v2021
        %v2033 = vadd.f32 %v1987, %v2023
        %v2034 = vadd.f32 %v1988, %v2025
        %v2035 = vadd.f32 %v1989, %v2027
        %s2036 = sld [smem:[#allocation3 + $0x3a]]
        %v2037 = vstv %s2036
        %v2038 = vmul.f32 %v1976, %v2037
        %v2039 = vmul.f32 %v1977, %v2037
        %v2040 = vmul.f32 %v1978, %v2037
        %v2041 = vmul.f32 %v1979, %v2037
        %2046 = vrot.lane.b32.xlu0 %v2038, 127
        %v2047 = vpop.permute.xlu0 %2046
        %2048 = vrot.lane.b32.xlu0 %v2039, 127
        %v2049 = vpop.permute.xlu0 %2048
        %2050 = vrot.lane.b32.xlu0 %v2040, 127
        %v2051 = vpop.permute.xlu0 %2050
        %2052 = vrot.lane.b32.xlu0 %v2041, 127
        %v2053 = vpop.permute.xlu0 %2052
        %v2058 = vadd.f32 %v1996, %v2047
        %v2059 = vadd.f32 %v1997, %v2049
        %v2060 = vadd.f32 %v1998, %v2051
        %v2061 = vadd.f32 %v1999, %v2053
        %s2062 = sld [smem:[#allocation3 + $0x5e]]
        %v2063 = vstv %s2062
        %v2064 = vmul.f32 %v1976, %v2063
        %v2065 = vmul.f32 %v1977, %v2063
        %v2066 = vmul.f32 %v1978, %v2063
        %v2067 = vmul.f32 %v1979, %v2063
        %2072 = vrot.lane.b32.xlu0 %v2064, 127
        %v2073 = vpop.permute.xlu0 %2072
        %2074 = vrot.lane.b32.xlu0 %v2065, 127
        %v2075 = vpop.permute.xlu0 %2074
        %2076 = vrot.lane.b32.xlu0 %v2066, 127
        %v2077 = vpop.permute.xlu0 %2076
        %2078 = vrot.lane.b32.xlu0 %v2067, 127
        %v2079 = vpop.permute.xlu0 %2078
        %v2084 = vadd.f32 %v2006, %v2073
        %v2085 = vadd.f32 %v2007, %v2075
        %v2086 = vadd.f32 %v2008, %v2077
        %v2087 = vadd.f32 %v2009, %v2079
        %s2088 = sld [smem:[#allocation3 + $0x17]]
        %v2089 = vstv %s2088
        %v2090 = vmul.f32 %v1976, %v2089
        %v2091 = vmul.f32 %v1977, %v2089
        %v2092 = vmul.f32 %v1978, %v2089
        %v2093 = vmul.f32 %v1979, %v2089
        %2098 = vrot.lane.b32.xlu0 %v2090, 126
        %v2099 = vpop.permute.xlu0 %2098
        %2100 = vrot.lane.b32.xlu0 %v2091, 126
        %v2101 = vpop.permute.xlu0 %2100
        %2102 = vrot.lane.b32.xlu0 %v2092, 126
        %v2103 = vpop.permute.xlu0 %2102
        %2104 = vrot.lane.b32.xlu0 %v2093, 126
        %v2105 = vpop.permute.xlu0 %2104
        %v2110 = vadd.f32 %v2032, %v2099
        %v2111 = vadd.f32 %v2033, %v2101
        %v2112 = vadd.f32 %v2034, %v2103
        %v2113 = vadd.f32 %v2035, %v2105
        %s2114 = sld [smem:[#allocation3 + $0x3b]]
        %v2115 = vstv %s2114
        %v2116 = vmul.f32 %v1976, %v2115
        %v2117 = vmul.f32 %v1977, %v2115
        %v2118 = vmul.f32 %v1978, %v2115
        %v2119 = vmul.f32 %v1979, %v2115
        %2124 = vrot.lane.b32.xlu0 %v2116, 126
        %v2125 = vpop.permute.xlu0 %2124
        %2126 = vrot.lane.b32.xlu0 %v2117, 126
        %v2127 = vpop.permute.xlu0 %2126
        %2128 = vrot.lane.b32.xlu0 %v2118, 126
        %v2129 = vpop.permute.xlu0 %2128
        %2130 = vrot.lane.b32.xlu0 %v2119, 126
        %v2131 = vpop.permute.xlu0 %2130
        %v2136 = vadd.f32 %v2058, %v2125
        %v2137 = vadd.f32 %v2059, %v2127
        %v2138 = vadd.f32 %v2060, %v2129
        %v2139 = vadd.f32 %v2061, %v2131
        %s2140 = sld [smem:[#allocation3 + $0x5f]]
        %v2141 = vstv %s2140
        %v2142 = vmul.f32 %v1976, %v2141
        %v2143 = vmul.f32 %v1977, %v2141
        %v2144 = vmul.f32 %v1978, %v2141
        %v2145 = vmul.f32 %v1979, %v2141
        %2150 = vrot.lane.b32.xlu0 %v2142, 126
        %v2151 = vpop.permute.xlu0 %2150
        %2152 = vrot.lane.b32.xlu0 %v2143, 126
        %v2153 = vpop.permute.xlu0 %2152
        %2154 = vrot.lane.b32.xlu0 %v2144, 126
        %v2155 = vpop.permute.xlu0 %2154
        %2156 = vrot.lane.b32.xlu0 %v2145, 126
        %v2157 = vpop.permute.xlu0 %2156
        %v2162 = vadd.f32 %v2084, %v2151
        %v2163 = vadd.f32 %v2085, %v2153
        %v2164 = vadd.f32 %v2086, %v2155
        %v2165 = vadd.f32 %v2087, %v2157
        %v2166 = vld [vmem:[#allocation2 + $0x46] sm:$0xff]
        %v2167 = vld [vmem:[#allocation2 + $0x4e] sm:$0xff]
        %v2168 = vld [vmem:[#allocation2 + $0x56] sm:$0xff]
        %v2169 = vld [vmem:[#allocation2 + $0x5e] sm:$0xff]
        %s2170 = sld [smem:[#allocation3 + $0x18]]
        %v2171 = vstv %s2170
        %v2172 = vmul.f32 %v2166, %v2171
        %v2173 = vmul.f32 %v2167, %v2171
        %v2174 = vmul.f32 %v2168, %v2171
        %v2175 = vmul.f32 %v2169, %v2171
        %v2176 = vadd.f32 %v2110, %v2172
        %v2177 = vadd.f32 %v2111, %v2173
        %v2178 = vadd.f32 %v2112, %v2174
        %v2179 = vadd.f32 %v2113, %v2175
        %s2180 = sld [smem:[#allocation3 + $0x3c]]
        %v2181 = vstv %s2180
        %v2182 = vmul.f32 %v2166, %v2181
        %v2183 = vmul.f32 %v2167, %v2181
        %v2184 = vmul.f32 %v2168, %v2181
        %v2185 = vmul.f32 %v2169, %v2181
        %v2186 = vadd.f32 %v2136, %v2182
        %v2187 = vadd.f32 %v2137, %v2183
        %v2188 = vadd.f32 %v2138, %v2184
        %v2189 = vadd.f32 %v2139, %v2185
        %s2190 = sld [smem:[#allocation3 + $0x60]]
        %v2191 = vstv %s2190
        %v2192 = vmul.f32 %v2166, %v2191
        %v2193 = vmul.f32 %v2167, %v2191
        %v2194 = vmul.f32 %v2168, %v2191
        %v2195 = vmul.f32 %v2169, %v2191
        %v2196 = vadd.f32 %v2162, %v2192
        %v2197 = vadd.f32 %v2163, %v2193
        %v2198 = vadd.f32 %v2164, %v2194
        %v2199 = vadd.f32 %v2165, %v2195
        %s2200 = sld [smem:[#allocation3 + $0x19]]
        %v2201 = vstv %s2200
        %v2202 = vmul.f32 %v2166, %v2201
        %v2203 = vmul.f32 %v2167, %v2201
        %v2204 = vmul.f32 %v2168, %v2201
        %v2205 = vmul.f32 %v2169, %v2201
        %2210 = vrot.lane.b32.xlu0 %v2202, 127
        %v2211 = vpop.permute.xlu0 %2210
        %2212 = vrot.lane.b32.xlu0 %v2203, 127
        %v2213 = vpop.permute.xlu0 %2212
        %2214 = vrot.lane.b32.xlu0 %v2204, 127
        %v2215 = vpop.permute.xlu0 %2214
        %2216 = vrot.lane.b32.xlu0 %v2205, 127
        %v2217 = vpop.permute.xlu0 %2216
        %v2222 = vadd.f32 %v2176, %v2211
        %v2223 = vadd.f32 %v2177, %v2213
        %v2224 = vadd.f32 %v2178, %v2215
        %v2225 = vadd.f32 %v2179, %v2217
        %s2226 = sld [smem:[#allocation3 + $0x3d]]
        %v2227 = vstv %s2226
        %v2228 = vmul.f32 %v2166, %v2227
        %v2229 = vmul.f32 %v2167, %v2227
        %v2230 = vmul.f32 %v2168, %v2227
        %v2231 = vmul.f32 %v2169, %v2227
        %2236 = vrot.lane.b32.xlu0 %v2228, 127
        %v2237 = vpop.permute.xlu0 %2236
        %2238 = vrot.lane.b32.xlu0 %v2229, 127
        %v2239 = vpop.permute.xlu0 %2238
        %2240 = vrot.lane.b32.xlu0 %v2230, 127
        %v2241 = vpop.permute.xlu0 %2240
        %2242 = vrot.lane.b32.xlu0 %v2231, 127
        %v2243 = vpop.permute.xlu0 %2242
        %v2248 = vadd.f32 %v2186, %v2237
        %v2249 = vadd.f32 %v2187, %v2239
        %v2250 = vadd.f32 %v2188, %v2241
        %v2251 = vadd.f32 %v2189, %v2243
        %s2252 = sld [smem:[#allocation3 + $0x61]]
        %v2253 = vstv %s2252
        %v2254 = vmul.f32 %v2166, %v2253
        %v2255 = vmul.f32 %v2167, %v2253
        %v2256 = vmul.f32 %v2168, %v2253
        %v2257 = vmul.f32 %v2169, %v2253
        %2262 = vrot.lane.b32.xlu0 %v2254, 127
        %v2263 = vpop.permute.xlu0 %2262
        %2264 = vrot.lane.b32.xlu0 %v2255, 127
        %v2265 = vpop.permute.xlu0 %2264
        %2266 = vrot.lane.b32.xlu0 %v2256, 127
        %v2267 = vpop.permute.xlu0 %2266
        %2268 = vrot.lane.b32.xlu0 %v2257, 127
        %v2269 = vpop.permute.xlu0 %2268
        %v2274 = vadd.f32 %v2196, %v2263
        %v2275 = vadd.f32 %v2197, %v2265
        %v2276 = vadd.f32 %v2198, %v2267
        %v2277 = vadd.f32 %v2199, %v2269
        %s2278 = sld [smem:[#allocation3 + $0x1a]]
        %v2279 = vstv %s2278
        %v2280 = vmul.f32 %v2166, %v2279
        %v2281 = vmul.f32 %v2167, %v2279
        %v2282 = vmul.f32 %v2168, %v2279
        %v2283 = vmul.f32 %v2169, %v2279
        %2288 = vrot.lane.b32.xlu0 %v2280, 126
        %v2289 = vpop.permute.xlu0 %2288
        %2290 = vrot.lane.b32.xlu0 %v2281, 126
        %v2291 = vpop.permute.xlu0 %2290
        %2292 = vrot.lane.b32.xlu0 %v2282, 126
        %v2293 = vpop.permute.xlu0 %2292
        %2294 = vrot.lane.b32.xlu0 %v2283, 126
        %v2295 = vpop.permute.xlu0 %2294
        %v2300 = vadd.f32 %v2222, %v2289
        %v2301 = vadd.f32 %v2223, %v2291
        %v2302 = vadd.f32 %v2224, %v2293
        %v2303 = vadd.f32 %v2225, %v2295
        %s2304 = sld [smem:[#allocation3 + $0x3e]]
        %v2305 = vstv %s2304
        %v2306 = vmul.f32 %v2166, %v2305
        %v2307 = vmul.f32 %v2167, %v2305
        %v2308 = vmul.f32 %v2168, %v2305
        %v2309 = vmul.f32 %v2169, %v2305
        %2314 = vrot.lane.b32.xlu0 %v2306, 126
        %v2315 = vpop.permute.xlu0 %2314
        %2316 = vrot.lane.b32.xlu0 %v2307, 126
        %v2317 = vpop.permute.xlu0 %2316
        %2318 = vrot.lane.b32.xlu0 %v2308, 126
        %v2319 = vpop.permute.xlu0 %2318
        %2320 = vrot.lane.b32.xlu0 %v2309, 126
        %v2321 = vpop.permute.xlu0 %2320
        %v2326 = vadd.f32 %v2248, %v2315
        %v2327 = vadd.f32 %v2249, %v2317
        %v2328 = vadd.f32 %v2250, %v2319
        %v2329 = vadd.f32 %v2251, %v2321
        %s2330 = sld [smem:[#allocation3 + $0x62]]
        %v2331 = vstv %s2330
        %v2332 = vmul.f32 %v2166, %v2331
        %v2333 = vmul.f32 %v2167, %v2331
        %v2334 = vmul.f32 %v2168, %v2331
        %v2335 = vmul.f32 %v2169, %v2331
        %2340 = vrot.lane.b32.xlu0 %v2332, 126
        %v2341 = vpop.permute.xlu0 %2340
        %2342 = vrot.lane.b32.xlu0 %v2333, 126
        %v2343 = vpop.permute.xlu0 %2342
        %2344 = vrot.lane.b32.xlu0 %v2334, 126
        %v2345 = vpop.permute.xlu0 %2344
        %2346 = vrot.lane.b32.xlu0 %v2335, 126
        %v2347 = vpop.permute.xlu0 %2346
        %v2352 = vadd.f32 %v2274, %v2341
        %v2353 = vadd.f32 %v2275, %v2343
        %v2354 = vadd.f32 %v2276, %v2345
        %v2355 = vadd.f32 %v2277, %v2347
        %v2356 = vld [vmem:[#allocation2 + $0x66] sm:$0xff]
        %v2357 = vld [vmem:[#allocation2 + $0x6e] sm:$0xff]
        %v2358 = vld [vmem:[#allocation2 + $0x76] sm:$0xff]
        %v2359 = vld [vmem:[#allocation2 + $0x7e] sm:$0xff]
        %s2360 = sld [smem:[#allocation3 + $0x1b]]
        %v2361 = vstv %s2360
        %v2362 = vmul.f32 %v2356, %v2361
        %v2363 = vmul.f32 %v2357, %v2361
        %v2364 = vmul.f32 %v2358, %v2361
        %v2365 = vmul.f32 %v2359, %v2361
        %v2366 = vadd.f32 %v2300, %v2362
        %v2367 = vadd.f32 %v2301, %v2363
        %v2368 = vadd.f32 %v2302, %v2364
        %v2369 = vadd.f32 %v2303, %v2365
        %s2370 = sld [smem:[#allocation3 + $0x3f]]
        %v2371 = vstv %s2370
        %v2372 = vmul.f32 %v2356, %v2371
        %v2373 = vmul.f32 %v2357, %v2371
        %v2374 = vmul.f32 %v2358, %v2371
        %v2375 = vmul.f32 %v2359, %v2371
        %v2376 = vadd.f32 %v2326, %v2372
        %v2377 = vadd.f32 %v2327, %v2373
        %v2378 = vadd.f32 %v2328, %v2374
        %v2379 = vadd.f32 %v2329, %v2375
        %s2380 = sld [smem:[#allocation3 + $0x63]]
        %v2381 = vstv %s2380
        %v2382 = vmul.f32 %v2356, %v2381
        %v2383 = vmul.f32 %v2357, %v2381
        %v2384 = vmul.f32 %v2358, %v2381
        %v2385 = vmul.f32 %v2359, %v2381
        %v2386 = vadd.f32 %v2352, %v2382
        %v2387 = vadd.f32 %v2353, %v2383
        %v2388 = vadd.f32 %v2354, %v2384
        %v2389 = vadd.f32 %v2355, %v2385
        %s2390 = sld [smem:[#allocation3 + $0x1c]]
        %v2391 = vstv %s2390
        %v2392 = vmul.f32 %v2356, %v2391
        %v2393 = vmul.f32 %v2357, %v2391
        %v2394 = vmul.f32 %v2358, %v2391
        %v2395 = vmul.f32 %v2359, %v2391
        %2400 = vrot.lane.b32.xlu0 %v2392, 127
        %v2401 = vpop.permute.xlu0 %2400
        %2402 = vrot.lane.b32.xlu0 %v2393, 127
        %v2403 = vpop.permute.xlu0 %2402
        %2404 = vrot.lane.b32.xlu0 %v2394, 127
        %v2405 = vpop.permute.xlu0 %2404
        %2406 = vrot.lane.b32.xlu0 %v2395, 127
        %v2407 = vpop.permute.xlu0 %2406
        %v2412 = vadd.f32 %v2366, %v2401
        %v2413 = vadd.f32 %v2367, %v2403
        %v2414 = vadd.f32 %v2368, %v2405
        %v2415 = vadd.f32 %v2369, %v2407
        %s2416 = sld [smem:[#allocation3 + $0x40]]
        %v2417 = vstv %s2416
        %v2418 = vmul.f32 %v2356, %v2417
        %v2419 = vmul.f32 %v2357, %v2417
        %v2420 = vmul.f32 %v2358, %v2417
        %v2421 = vmul.f32 %v2359, %v2417
        %2426 = vrot.lane.b32.xlu0 %v2418, 127
        %v2427 = vpop.permute.xlu0 %2426
        %2428 = vrot.lane.b32.xlu0 %v2419, 127
        %v2429 = vpop.permute.xlu0 %2428
        %2430 = vrot.lane.b32.xlu0 %v2420, 127
        %v2431 = vpop.permute.xlu0 %2430
        %2432 = vrot.lane.b32.xlu0 %v2421, 127
        %v2433 = vpop.permute.xlu0 %2432
        %v2438 = vadd.f32 %v2376, %v2427
        %v2439 = vadd.f32 %v2377, %v2429
        %v2440 = vadd.f32 %v2378, %v2431
        %v2441 = vadd.f32 %v2379, %v2433
        %s2442 = sld [smem:[#allocation3 + $0x64]]
        %v2443 = vstv %s2442
        %v2444 = vmul.f32 %v2356, %v2443
        %v2445 = vmul.f32 %v2357, %v2443
        %v2446 = vmul.f32 %v2358, %v2443
        %v2447 = vmul.f32 %v2359, %v2443
        %2452 = vrot.lane.b32.xlu0 %v2444, 127
        %v2453 = vpop.permute.xlu0 %2452
        %2454 = vrot.lane.b32.xlu0 %v2445, 127
        %v2455 = vpop.permute.xlu0 %2454
        %2456 = vrot.lane.b32.xlu0 %v2446, 127
        %v2457 = vpop.permute.xlu0 %2456
        %2458 = vrot.lane.b32.xlu0 %v2447, 127
        %v2459 = vpop.permute.xlu0 %2458
        %v2464 = vadd.f32 %v2386, %v2453
        %v2465 = vadd.f32 %v2387, %v2455
        %v2466 = vadd.f32 %v2388, %v2457
        %v2467 = vadd.f32 %v2389, %v2459
        %s2468 = sld [smem:[#allocation3 + $0x1d]]
        %v2469 = vstv %s2468
        %v2470 = vmul.f32 %v2356, %v2469
        %v2471 = vmul.f32 %v2357, %v2469
        %v2472 = vmul.f32 %v2358, %v2469
        %v2473 = vmul.f32 %v2359, %v2469
        %2478 = vrot.lane.b32.xlu0 %v2470, 126
        %v2479 = vpop.permute.xlu0 %2478
        %2480 = vrot.lane.b32.xlu0 %v2471, 126
        %v2481 = vpop.permute.xlu0 %2480
        %2482 = vrot.lane.b32.xlu0 %v2472, 126
        %v2483 = vpop.permute.xlu0 %2482
        %2484 = vrot.lane.b32.xlu0 %v2473, 126
        %v2485 = vpop.permute.xlu0 %2484
        %v2490 = vadd.f32 %v2412, %v2479
        %v2491 = vadd.f32 %v2413, %v2481
        %v2492 = vadd.f32 %v2414, %v2483
        %v2493 = vadd.f32 %v2415, %v2485
        %s2494 = sld [smem:[#allocation3 + $0x41]]
        %v2495 = vstv %s2494
        %v2496 = vmul.f32 %v2356, %v2495
        %v2497 = vmul.f32 %v2357, %v2495
        %v2498 = vmul.f32 %v2358, %v2495
        %v2499 = vmul.f32 %v2359, %v2495
        %2504 = vrot.lane.b32.xlu0 %v2496, 126
        %v2505 = vpop.permute.xlu0 %2504
        %2506 = vrot.lane.b32.xlu0 %v2497, 126
        %v2507 = vpop.permute.xlu0 %2506
        %2508 = vrot.lane.b32.xlu0 %v2498, 126
        %v2509 = vpop.permute.xlu0 %2508
        %2510 = vrot.lane.b32.xlu0 %v2499, 126
        %v2511 = vpop.permute.xlu0 %2510
        %v2516 = vadd.f32 %v2438, %v2505
        %v2517 = vadd.f32 %v2439, %v2507
        %v2518 = vadd.f32 %v2440, %v2509
        %v2519 = vadd.f32 %v2441, %v2511
        %s2520 = sld [smem:[#allocation3 + $0x65]]
        %v2521 = vstv %s2520
        %v2522 = vmul.f32 %v2356, %v2521
        %v2523 = vmul.f32 %v2357, %v2521
        %v2524 = vmul.f32 %v2358, %v2521
        %v2525 = vmul.f32 %v2359, %v2521
        %2530 = vrot.lane.b32.xlu0 %v2522, 126
        %v2531 = vpop.permute.xlu0 %2530
        %2532 = vrot.lane.b32.xlu0 %v2523, 126
        %v2533 = vpop.permute.xlu0 %2532
        %2534 = vrot.lane.b32.xlu0 %v2524, 126
        %v2535 = vpop.permute.xlu0 %2534
        %2536 = vrot.lane.b32.xlu0 %v2525, 126
        %v2537 = vpop.permute.xlu0 %2536
        %v2542 = vadd.f32 %v2464, %v2531
        %v2543 = vadd.f32 %v2465, %v2533
        %v2544 = vadd.f32 %v2466, %v2535
        %v2545 = vadd.f32 %v2467, %v2537
        %v2546 = vld [vmem:[#allocation2 + $0x67] sm:$0xff]
        %v2547 = vld [vmem:[#allocation2 + $0x6f] sm:$0xff]
        %v2548 = vld [vmem:[#allocation2 + $0x77] sm:$0xff]
        %v2549 = vld [vmem:[#allocation2 + $0x7f] sm:$0xff]
        %s2550 = sld [smem:[#allocation3 + $0x1e]]
        %v2551 = vstv %s2550
        %v2552 = vmul.f32 %v2546, %v2551
        %v2553 = vmul.f32 %v2547, %v2551
        %v2554 = vmul.f32 %v2548, %v2551
        %v2555 = vmul.f32 %v2549, %v2551
        %v2556 = vadd.f32 %v2490, %v2552
        %v2557 = vadd.f32 %v2491, %v2553
        %v2558 = vadd.f32 %v2492, %v2554
        %v2559 = vadd.f32 %v2493, %v2555
        %s2560 = sld [smem:[#allocation3 + $0x42]]
        %v2561 = vstv %s2560
        %v2562 = vmul.f32 %v2546, %v2561
        %v2563 = vmul.f32 %v2547, %v2561
        %v2564 = vmul.f32 %v2548, %v2561
        %v2565 = vmul.f32 %v2549, %v2561
        %v2566 = vadd.f32 %v2516, %v2562
        %v2567 = vadd.f32 %v2517, %v2563
        %v2568 = vadd.f32 %v2518, %v2564
        %v2569 = vadd.f32 %v2519, %v2565
        %s2570 = sld [smem:[#allocation3 + $0x66]]
        %v2571 = vstv %s2570
        %v2572 = vmul.f32 %v2546, %v2571
        %v2573 = vmul.f32 %v2547, %v2571
        %v2574 = vmul.f32 %v2548, %v2571
        %v2575 = vmul.f32 %v2549, %v2571
        %v2576 = vadd.f32 %v2542, %v2572
        %v2577 = vadd.f32 %v2543, %v2573
        %v2578 = vadd.f32 %v2544, %v2574
        %v2579 = vadd.f32 %v2545, %v2575
        %s2580 = sld [smem:[#allocation3 + $0x1f]]
        %v2581 = vstv %s2580
        %v2582 = vmul.f32 %v2546, %v2581
        %v2583 = vmul.f32 %v2547, %v2581
        %v2584 = vmul.f32 %v2548, %v2581
        %v2585 = vmul.f32 %v2549, %v2581
        %2590 = vrot.lane.b32.xlu0 %v2582, 127
        %v2591 = vpop.permute.xlu0 %2590
        %2592 = vrot.lane.b32.xlu0 %v2583, 127
        %v2593 = vpop.permute.xlu0 %2592
        %2594 = vrot.lane.b32.xlu0 %v2584, 127
        %v2595 = vpop.permute.xlu0 %2594
        %2596 = vrot.lane.b32.xlu0 %v2585, 127
        %v2597 = vpop.permute.xlu0 %2596
        %v2602 = vadd.f32 %v2556, %v2591
        %v2603 = vadd.f32 %v2557, %v2593
        %v2604 = vadd.f32 %v2558, %v2595
        %v2605 = vadd.f32 %v2559, %v2597
        %s2606 = sld [smem:[#allocation3 + $0x43]]
        %v2607 = vstv %s2606
        %v2608 = vmul.f32 %v2546, %v2607
        %v2609 = vmul.f32 %v2547, %v2607
        %v2610 = vmul.f32 %v2548, %v2607
        %v2611 = vmul.f32 %v2549, %v2607
        %2616 = vrot.lane.b32.xlu0 %v2608, 127
        %v2617 = vpop.permute.xlu0 %2616
        %2618 = vrot.lane.b32.xlu0 %v2609, 127
        %v2619 = vpop.permute.xlu0 %2618
        %2620 = vrot.lane.b32.xlu0 %v2610, 127
        %v2621 = vpop.permute.xlu0 %2620
        %2622 = vrot.lane.b32.xlu0 %v2611, 127
        %v2623 = vpop.permute.xlu0 %2622
        %v2628 = vadd.f32 %v2566, %v2617
        %v2629 = vadd.f32 %v2567, %v2619
        %v2630 = vadd.f32 %v2568, %v2621
        %v2631 = vadd.f32 %v2569, %v2623
        %s2632 = sld [smem:[#allocation3 + $0x67]]
        %v2633 = vstv %s2632
        %v2634 = vmul.f32 %v2546, %v2633
        %v2635 = vmul.f32 %v2547, %v2633
        %v2636 = vmul.f32 %v2548, %v2633
        %v2637 = vmul.f32 %v2549, %v2633
        %2642 = vrot.lane.b32.xlu0 %v2634, 127
        %v2643 = vpop.permute.xlu0 %2642
        %2644 = vrot.lane.b32.xlu0 %v2635, 127
        %v2645 = vpop.permute.xlu0 %2644
        %2646 = vrot.lane.b32.xlu0 %v2636, 127
        %v2647 = vpop.permute.xlu0 %2646
        %2648 = vrot.lane.b32.xlu0 %v2637, 127
        %v2649 = vpop.permute.xlu0 %2648
        %v2654 = vadd.f32 %v2576, %v2643
        %v2655 = vadd.f32 %v2577, %v2645
        %v2656 = vadd.f32 %v2578, %v2647
        %v2657 = vadd.f32 %v2579, %v2649
        %s2658 = sld [smem:[#allocation3 + $0x20]]
        %v2659 = vstv %s2658
        %v2660 = vmul.f32 %v2546, %v2659
        %v2661 = vmul.f32 %v2547, %v2659
        %v2662 = vmul.f32 %v2548, %v2659
        %v2663 = vmul.f32 %v2549, %v2659
        %2668 = vrot.lane.b32.xlu0 %v2660, 126
        %v2669 = vpop.permute.xlu0 %2668
        %2670 = vrot.lane.b32.xlu0 %v2661, 126
        %v2671 = vpop.permute.xlu0 %2670
        %2672 = vrot.lane.b32.xlu0 %v2662, 126
        %v2673 = vpop.permute.xlu0 %2672
        %2674 = vrot.lane.b32.xlu0 %v2663, 126
        %v2675 = vpop.permute.xlu0 %2674
        %v2680 = vadd.f32 %v2602, %v2669
        %v2681 = vadd.f32 %v2603, %v2671
        %v2682 = vadd.f32 %v2604, %v2673
        %v2683 = vadd.f32 %v2605, %v2675
        %s2684 = sld [smem:[#allocation3 + $0x44]]
        %v2685 = vstv %s2684
        %v2686 = vmul.f32 %v2546, %v2685
        %v2687 = vmul.f32 %v2547, %v2685
        %v2688 = vmul.f32 %v2548, %v2685
        %v2689 = vmul.f32 %v2549, %v2685
        %2694 = vrot.lane.b32.xlu0 %v2686, 126
        %v2695 = vpop.permute.xlu0 %2694
        %2696 = vrot.lane.b32.xlu0 %v2687, 126
        %v2697 = vpop.permute.xlu0 %2696
        %2698 = vrot.lane.b32.xlu0 %v2688, 126
        %v2699 = vpop.permute.xlu0 %2698
        %2700 = vrot.lane.b32.xlu0 %v2689, 126
        %v2701 = vpop.permute.xlu0 %2700
        %v2706 = vadd.f32 %v2628, %v2695
        %v2707 = vadd.f32 %v2629, %v2697
        %v2708 = vadd.f32 %v2630, %v2699
        %v2709 = vadd.f32 %v2631, %v2701
        %s2710 = sld [smem:[#allocation3 + $0x68]]
        %v2711 = vstv %s2710
        %v2712 = vmul.f32 %v2546, %v2711
        %v2713 = vmul.f32 %v2547, %v2711
        %v2714 = vmul.f32 %v2548, %v2711
        %v2715 = vmul.f32 %v2549, %v2711
        %2720 = vrot.lane.b32.xlu0 %v2712, 126
        %v2721 = vpop.permute.xlu0 %2720
        %2722 = vrot.lane.b32.xlu0 %v2713, 126
        %v2723 = vpop.permute.xlu0 %2722
        %2724 = vrot.lane.b32.xlu0 %v2714, 126
        %v2725 = vpop.permute.xlu0 %2724
        %2726 = vrot.lane.b32.xlu0 %v2715, 126
        %v2727 = vpop.permute.xlu0 %2726
        %v2732 = vadd.f32 %v2654, %v2721
        %v2733 = vadd.f32 %v2655, %v2723
        %v2734 = vadd.f32 %v2656, %v2725
        %v2735 = vadd.f32 %v2657, %v2727
        %v2736 = vld [vmem:[#allocation2 + $0x68] sm:$0xff]
        %v2737 = vld [vmem:[#allocation2 + $0x70] sm:$0xff]
        %v2738 = vld [vmem:[#allocation2 + $0x78] sm:$0xff]
        %v2739 = vld [vmem:[#allocation2 + $0x80] sm:$0xff]
        %s2740 = sld [smem:[#allocation3 + $0x21]]
        %v2741 = vstv %s2740
        %v2742 = vmul.f32 %v2736, %v2741
        %v2743 = vmul.f32 %v2737, %v2741
        %v2744 = vmul.f32 %v2738, %v2741
        %v2745 = vmul.f32 %v2739, %v2741
        %v2746 = vadd.f32 %v2680, %v2742
        %v2747 = vadd.f32 %v2681, %v2743
        %v2748 = vadd.f32 %v2682, %v2744
        %v2749 = vadd.f32 %v2683, %v2745
        %s2750 = sld [smem:[#allocation3 + $0x45]]
        %v2751 = vstv %s2750
        %v2752 = vmul.f32 %v2736, %v2751
        %v2753 = vmul.f32 %v2737, %v2751
        %v2754 = vmul.f32 %v2738, %v2751
        %v2755 = vmul.f32 %v2739, %v2751
        %v2756 = vadd.f32 %v2706, %v2752
        %v2757 = vadd.f32 %v2707, %v2753
        %v2758 = vadd.f32 %v2708, %v2754
        %v2759 = vadd.f32 %v2709, %v2755
        %s2760 = sld [smem:[#allocation3 + $0x69]]
        %v2761 = vstv %s2760
        %v2762 = vmul.f32 %v2736, %v2761
        %v2763 = vmul.f32 %v2737, %v2761
        %v2764 = vmul.f32 %v2738, %v2761
        %v2765 = vmul.f32 %v2739, %v2761
        %v2766 = vadd.f32 %v2732, %v2762
        %v2767 = vadd.f32 %v2733, %v2763
        %v2768 = vadd.f32 %v2734, %v2764
        %v2769 = vadd.f32 %v2735, %v2765
        %s2770 = sld [smem:[#allocation3 + $0x22]]
        %v2771 = vstv %s2770
        %v2772 = vmul.f32 %v2736, %v2771
        %v2773 = vmul.f32 %v2737, %v2771
        %v2774 = vmul.f32 %v2738, %v2771
        %v2775 = vmul.f32 %v2739, %v2771
        %2780 = vrot.lane.b32.xlu0 %v2772, 127
        %v2781 = vpop.permute.xlu0 %2780
        %2782 = vrot.lane.b32.xlu0 %v2773, 127
        %v2783 = vpop.permute.xlu0 %2782
        %2784 = vrot.lane.b32.xlu0 %v2774, 127
        %v2785 = vpop.permute.xlu0 %2784
        %2786 = vrot.lane.b32.xlu0 %v2775, 127
        %v2787 = vpop.permute.xlu0 %2786
        %v2792 = vadd.f32 %v2746, %v2781
        %v2793 = vadd.f32 %v2747, %v2783
        %v2794 = vadd.f32 %v2748, %v2785
        %v2795 = vadd.f32 %v2749, %v2787
        %s2796 = sld [smem:[#allocation3 + $0x46]]
        %v2797 = vstv %s2796
        %v2798 = vmul.f32 %v2736, %v2797
        %v2799 = vmul.f32 %v2737, %v2797
        %v2800 = vmul.f32 %v2738, %v2797
        %v2801 = vmul.f32 %v2739, %v2797
        %2806 = vrot.lane.b32.xlu0 %v2798, 127
        %v2807 = vpop.permute.xlu0 %2806
        %2808 = vrot.lane.b32.xlu0 %v2799, 127
        %v2809 = vpop.permute.xlu0 %2808
        %2810 = vrot.lane.b32.xlu0 %v2800, 127
        %v2811 = vpop.permute.xlu0 %2810
        %2812 = vrot.lane.b32.xlu0 %v2801, 127
        %v2813 = vpop.permute.xlu0 %2812
        %v2818 = vadd.f32 %v2756, %v2807
        %v2819 = vadd.f32 %v2757, %v2809
        %v2820 = vadd.f32 %v2758, %v2811
        %v2821 = vadd.f32 %v2759, %v2813
        %s2822 = sld [smem:[#allocation3 + $0x6a]]
        %v2823 = vstv %s2822
        %v2824 = vmul.f32 %v2736, %v2823
        %v2825 = vmul.f32 %v2737, %v2823
        %v2826 = vmul.f32 %v2738, %v2823
        %v2827 = vmul.f32 %v2739, %v2823
        %2832 = vrot.lane.b32.xlu0 %v2824, 127
        %v2833 = vpop.permute.xlu0 %2832
        %2834 = vrot.lane.b32.xlu0 %v2825, 127
        %v2835 = vpop.permute.xlu0 %2834
        %2836 = vrot.lane.b32.xlu0 %v2826, 127
        %v2837 = vpop.permute.xlu0 %2836
        %2838 = vrot.lane.b32.xlu0 %v2827, 127
        %v2839 = vpop.permute.xlu0 %2838
        %v2844 = vadd.f32 %v2766, %v2833
        %v2845 = vadd.f32 %v2767, %v2835
        %v2846 = vadd.f32 %v2768, %v2837
        %v2847 = vadd.f32 %v2769, %v2839
        %s2848 = sld [smem:[#allocation3 + $0x23]]
        %v2849 = vstv %s2848
        %v2850 = vmul.f32 %v2736, %v2849
        %v2851 = vmul.f32 %v2737, %v2849
        %v2852 = vmul.f32 %v2738, %v2849
        %v2853 = vmul.f32 %v2739, %v2849
        %2858 = vrot.lane.b32.xlu0 %v2850, 126
        %v2859 = vpop.permute.xlu0 %2858
        %2860 = vrot.lane.b32.xlu0 %v2851, 126
        %v2861 = vpop.permute.xlu0 %2860
        %2862 = vrot.lane.b32.xlu0 %v2852, 126
        %v2863 = vpop.permute.xlu0 %2862
        %2864 = vrot.lane.b32.xlu0 %v2853, 126
        %v2865 = vpop.permute.xlu0 %2864
        %v2870 = vadd.f32 %v2792, %v2859
        %v2871 = vadd.f32 %v2793, %v2861
        %v2872 = vadd.f32 %v2794, %v2863
        %v2873 = vadd.f32 %v2795, %v2865
        %s2874 = sld [smem:[#allocation3 + $0x47]]
        %v2875 = vstv %s2874
        %v2876 = vmul.f32 %v2736, %v2875
        %v2877 = vmul.f32 %v2737, %v2875
        %v2878 = vmul.f32 %v2738, %v2875
        %v2879 = vmul.f32 %v2739, %v2875
        %2884 = vrot.lane.b32.xlu0 %v2876, 126
        %v2885 = vpop.permute.xlu0 %2884
        %2886 = vrot.lane.b32.xlu0 %v2877, 126
        %v2887 = vpop.permute.xlu0 %2886
        %2888 = vrot.lane.b32.xlu0 %v2878, 126
        %v2889 = vpop.permute.xlu0 %2888
        %2890 = vrot.lane.b32.xlu0 %v2879, 126
        %v2891 = vpop.permute.xlu0 %2890
        %v2896 = vadd.f32 %v2818, %v2885
        %v2897 = vadd.f32 %v2819, %v2887
        %v2898 = vadd.f32 %v2820, %v2889
        %v2899 = vadd.f32 %v2821, %v2891
        %s2900 = sld [smem:[#allocation3 + $0x6b]]
        %v2901 = vstv %s2900
        %v2902 = vmul.f32 %v2736, %v2901
        %v2903 = vmul.f32 %v2737, %v2901
        %v2904 = vmul.f32 %v2738, %v2901
        %v2905 = vmul.f32 %v2739, %v2901
        %2910 = vrot.lane.b32.xlu0 %v2902, 126
        %v2911 = vpop.permute.xlu0 %2910
        %2912 = vrot.lane.b32.xlu0 %v2903, 126
        %v2913 = vpop.permute.xlu0 %2912
        %2914 = vrot.lane.b32.xlu0 %v2904, 126
        %v2915 = vpop.permute.xlu0 %2914
        %2916 = vrot.lane.b32.xlu0 %v2905, 126
        %v2917 = vpop.permute.xlu0 %2916
        %v2922 = vadd.f32 %v2844, %v2911
        %v2923 = vadd.f32 %v2845, %v2913
        %v2924 = vadd.f32 %v2846, %v2915
        %v2925 = vadd.f32 %v2847, %v2917
        %s2926 = sld [smem:[#allocation5]]
        %v2927 = vstv %s2926
        %v2928 = vadd.f32 %v2870, %v2927
        %v2929 = vadd.f32 %v2871, %v2927
        %v2930 = vadd.f32 %v2872, %v2927
        %v2931 = vadd.f32 %v2873, %v2927
        %vm2932 = vcmp.ge.f32.partialorder %v2928, 0.0
        %vm2933 = vcmp.ge.f32.partialorder %v2929, 0.0
        %vm2934 = vcmp.ge.f32.partialorder %v2930, 0.0
        %vm2935 = vcmp.ge.f32.partialorder %v2931, 0.0
        %v2936 = vmul.f32 %v2928, 0.01
        %v2937 = vmul.f32 %v2929, 0.01
        %v2938 = vmul.f32 %v2930, 0.01
        %v2939 = vmul.f32 %v2931, 0.01
        %v2940 = vsel %vm2932, %v2928, %v2936
        %v2941 = vsel %vm2933, %v2929, %v2937
        %v2942 = vsel %vm2934, %v2930, %v2938
        %v2943 = vsel %vm2935, %v2931, %v2939
        %2948 = vrot.lane.b32.xlu0 %v2940, 1
        %v2949 = vpop.permute.xlu0 %2948
        %2950 = vrot.lane.b32.xlu0 %v2941, 1
        %v2951 = vpop.permute.xlu0 %2950
        %2952 = vrot.lane.b32.xlu0 %v2942, 1
        %v2953 = vpop.permute.xlu0 %2952
        %2954 = vrot.lane.b32.xlu0 %v2943, 1
        %v2955 = vpop.permute.xlu0 %2954
        %vm2960 = vcmask 269320
        %2961 = vst.msk [vmem:[%s251 + $0x2] sm:$0xff] %vm2960, %v2949
        %2962 = vst.msk [vmem:[%s251 + $0xa] sm:$0xff] %vm2960, %v2951
        %2963 = vst.msk [vmem:[%s251 + $0x12] sm:$0xff] %vm2960, %v2953
        %2964 = vst.msk [vmem:[%s251 + $0x1a] sm:$0xff] %vm2960, %v2955
        %s2965 = sld [smem:[#allocation5 + $0x1]]
        %v2966 = vstv %s2965
        %v2967 = vadd.f32 %v2896, %v2966
        %v2968 = vadd.f32 %v2897, %v2966
        %v2969 = vadd.f32 %v2898, %v2966
        %v2970 = vadd.f32 %v2899, %v2966
        %vm2971 = vcmp.ge.f32.partialorder %v2967, 0.0
        %vm2972 = vcmp.ge.f32.partialorder %v2968, 0.0
        %vm2973 = vcmp.ge.f32.partialorder %v2969, 0.0
        %vm2974 = vcmp.ge.f32.partialorder %v2970, 0.0
        %v2975 = vmul.f32 %v2967, 0.01
        %v2976 = vmul.f32 %v2968, 0.01
        %v2977 = vmul.f32 %v2969, 0.01
        %v2978 = vmul.f32 %v2970, 0.01
        %v2979 = vsel %vm2971, %v2967, %v2975
        %v2980 = vsel %vm2972, %v2968, %v2976
        %v2981 = vsel %vm2973, %v2969, %v2977
        %v2982 = vsel %vm2974, %v2970, %v2978
        %2987 = vrot.lane.b32.xlu0 %v2979, 1
        %v2988 = vpop.permute.xlu0 %2987
        %2989 = vrot.lane.b32.xlu0 %v2980, 1
        %v2990 = vpop.permute.xlu0 %2989
        %2991 = vrot.lane.b32.xlu0 %v2981, 1
        %v2992 = vpop.permute.xlu0 %2991
        %2993 = vrot.lane.b32.xlu0 %v2982, 1
        %v2994 = vpop.permute.xlu0 %2993
        %s2999 = scalar_lea.vmem %s251, 40
        %3000 = vst.msk [vmem:[%s2999 + $0x2] sm:$0xff] %vm2960, %v2988
        %3001 = vst.msk [vmem:[%s2999 + $0xa] sm:$0xff] %vm2960, %v2990
        %3002 = vst.msk [vmem:[%s2999 + $0x12] sm:$0xff] %vm2960, %v2992
        %3003 = vst.msk [vmem:[%s2999 + $0x1a] sm:$0xff] %vm2960, %v2994
        %s3004 = sld [smem:[#allocation5 + $0x2]]
        %v3005 = vstv %s3004
        %v3006 = vadd.f32 %v2922, %v3005
        %v3007 = vadd.f32 %v2923, %v3005
        %v3008 = vadd.f32 %v2924, %v3005
        %v3009 = vadd.f32 %v2925, %v3005
        %vm3010 = vcmp.ge.f32.partialorder %v3006, 0.0
        %vm3011 = vcmp.ge.f32.partialorder %v3007, 0.0
        %vm3012 = vcmp.ge.f32.partialorder %v3008, 0.0
        %vm3013 = vcmp.ge.f32.partialorder %v3009, 0.0
        %v3014 = vmul.f32 %v3006, 0.01
        %v3015 = vmul.f32 %v3007, 0.01
        %v3016 = vmul.f32 %v3008, 0.01
        %v3017 = vmul.f32 %v3009, 0.01
        %v3018 = vsel %vm3010, %v3006, %v3014
        %v3019 = vsel %vm3011, %v3007, %v3015
        %v3020 = vsel %vm3012, %v3008, %v3016
        %v3021 = vsel %vm3013, %v3009, %v3017
        %3026 = vrot.lane.b32.xlu0 %v3018, 1
        %v3027 = vpop.permute.xlu0 %3026
        %3028 = vrot.lane.b32.xlu0 %v3019, 1
        %v3029 = vpop.permute.xlu0 %3028
        %3030 = vrot.lane.b32.xlu0 %v3020, 1
        %v3031 = vpop.permute.xlu0 %3030
        %3032 = vrot.lane.b32.xlu0 %v3021, 1
        %v3033 = vpop.permute.xlu0 %3032
        %s3038 = scalar_lea.vmem %s251, 80
        %3039 = vst.msk [vmem:[%s3038 + $0x2] sm:$0xff] %vm2960, %v3027
        %3040 = vst.msk [vmem:[%s3038 + $0xa] sm:$0xff] %vm2960, %v3029
        %3041 = vst.msk [vmem:[%s3038 + $0x12] sm:$0xff] %vm2960, %v3031
        %3042 = vst.msk [vmem:[%s3038 + $0x1a] sm:$0xff] %vm2960, %v3033
        %p3043 = scmp.lt.s32.totalorder %s18, 1
        %s3044 = scalar_select %p3043, %s18, 1
        %s3045 = smul.addr %s3044, 15
        %s3046 = smul.addr %s3045, 8
        %s3047 = scalar_lea.vmem %s5, %s3046
        // Predicated region
        $region49: #{tpu_custom_call.1} parent=39 // pred_check
          %p3048 = pneg %p146
        $region50: #{tpu_custom_call.1} parent=39 // pred_check_branch
          %3050 = sbr.rel (%p3048) target = $region52
        $region51: #{tpu_custom_call.1} parent=39 // pred_region
          _
        $region52: #{tpu_custom_call.1} parent=39 // pred_fallthru
          _
      $region40: #{tpu_custom_call.1} parent=5 // pred_fallthru
        _
      %p3051 = scmp.le.s32.totalorder 2, %s13
      // Predicated region
      $region53: #{tpu_custom_call.1} parent=5 // pred_check
        %p3052 = pneg %p3051
      $region54: #{tpu_custom_call.1} parent=5 // pred_check_branch
        %3054 = sbr.rel (%p3052) target = $region56
      $region55: #{tpu_custom_call.1} parent=5 // pred_region
        %s3055 = ssub.s32 %s13, 2
        // Predicated region
        $region57: #{tpu_custom_call.1} parent=55 // pred_check
          %p3056 = pneg %p152
        $region58: #{tpu_custom_call.1} parent=55 // pred_check_branch
          %3058 = sbr.rel (%p3056) target = $region60
        $region59: #{tpu_custom_call.1} parent=55 // pred_region
          %p3059 = scmp.lt.s32.totalorder %s19, 1
          %s3060 = scalar_select %p3059, %s19, 1
          %s3061 = smul.addr %s3060, 15
          %s3062 = smul.addr %s3061, 8
          %s3063 = scalar_lea.vmem %s5, %s3062
        $region60: #{tpu_custom_call.1} parent=55 // pred_fallthru
          _
      $region56: #{tpu_custom_call.1} parent=5 // pred_fallthru
        _
    $region6: #{tpu_custom_call.1} parent=1 // loop_footer
      %s17 = sadd.s32 1, %s13
    $region7: #{tpu_custom_call.1} parent=1 // loop_footer_branch
      %12 = sbr.rel target = $region3
    $region8: #{tpu_custom_call.1} parent=1 // loop_exit
      _
    %3064 = vsyncpa [#allocation4], 1
    %s3065 = scalar_lea.sflag [#allocation4], 1
    %3066 = vsyncpa %s3065, 1
    %3067 = vsyncpa [#allocation6], 1

</llo_original>
